<compile_context>
chip_gen: v5e
topology: v5e:2x2
jax: 0.10.0
libtpu: 0.0.40
codegen_flags: <defaults>
</compile_context>

<pallas_src>
import functools

import jax
import jax.numpy as jnp
from jax import lax
from jax.experimental import pallas as pl
from jax.experimental.pallas import tpu as pltpu

_VMEM_LIMIT = 48 * 1024 * 1024  # headroom-safe on v5e/v6e/v7x


def _tile(n, cap, align):
    """Largest divisor of n that is <= cap and a multiple of `align`; else n."""
    if n <= cap:
        return n
    for t in range(cap, 0, -1):
        if n % t == 0 and t % align == 0:
            return t
    return n


# ----------------------------- Pallas kernels ------------------------------

def _patch_embed_kernel(p_ref, w_ref, b_ref, pos_ref, o_ref):
    # p: (1, S, CPP), w: (CPP, D) resident, b: (1, D), pos: (S, D) resident.
    o_ref[0] = (
        jnp.dot(p_ref[0], w_ref[...], preferred_element_type=jnp.float32)
        + b_ref[...]
        + pos_ref[...]
    )


def _encoder_attn_kernel(x_ref, g_ref, bt_ref, wq_ref, bq_ref, wk_ref, bk_ref,
                         wv_ref, bv_ref, wo_ref, bo_ref, o_ref, *, eps, scale):
    # Fused pre-LN + per-head QKV proj + attention + per-head out-proj.
    # Grid is (batch, head); head axis is a reduction accumulated into o_ref.
    h = pl.program_id(1)
    x = x_ref[0]                                            # (S, D) residual
    mean = jnp.mean(x, axis=-1, keepdims=True)
    xc = x - mean
    var = jnp.mean(xc * xc, axis=-1, keepdims=True)
    xn = xc * lax.rsqrt(var + eps) * g_ref[...] + bt_ref[...]

    q = jnp.dot(xn, wq_ref[0], preferred_element_type=jnp.float32) + bq_ref[0]
    k = jnp.dot(xn, wk_ref[0], preferred_element_type=jnp.float32) + bk_ref[0]
    v = jnp.dot(xn, wv_ref[0], preferred_element_type=jnp.float32) + bv_ref[0]

    s = lax.dot_general(q * scale, k, (((1,), (1,)), ((), ())),
                        preferred_element_type=jnp.float32)  # (S, S)
    m = jnp.max(s, axis=-1, keepdims=True)
    p = jnp.exp(s - m)
    p = p * pl.reciprocal(jnp.sum(p, axis=-1, keepdims=True), approx=True)
    attn = jnp.dot(p, v, preferred_element_type=jnp.float32)          # (S, hd)
    contrib = jnp.dot(attn, wo_ref[0], preferred_element_type=jnp.float32)

    @pl.when(h == 0)
    def _():
        o_ref[0] = x + bo_ref[...]          # residual + out-proj bias (once)

    o_ref[0] += contrib


def _mlp_block_kernel(x_ref, g_ref, bt_ref, w1_ref, b1_ref, w2_ref, b2_ref,
                      o_ref, xn_ref, *, eps):
    # Fused LN + fc1 + GELU(tanh) + fc2 + residual.
    # Grid is (M-tiles, I-tiles); I axis is a reduction accumulated into o_ref.
    i = pl.program_id(1)

    @pl.when(i == 0)
    def _():
        x = x_ref[...]                                      # (TM, D)
        mean = jnp.mean(x, axis=-1, keepdims=True)
        xc = x - mean
        var = jnp.mean(xc * xc, axis=-1, keepdims=True)
        xn_ref[...] = xc * lax.rsqrt(var + eps) * g_ref[...] + bt_ref[...]
        o_ref[...] = x + b2_ref[...]        # residual + fc2 bias (once)

    h = (jnp.dot(xn_ref[...], w1_ref[...], preferred_element_type=jnp.float32)
         + b1_ref[...])
    h = jax.nn.gelu(h, approximate=True)    # == PytorchGELUTanh
    o_ref[...] += jnp.dot(h, w2_ref[...], preferred_element_type=jnp.float32)


def _pool_attn_kernel(probe_ref, x_ref, g_ref, bt_ref, wq_ref, bq_ref,
                      wk_ref, bk_ref, wv_ref, bv_ref, wo_ref, bo_ref, o_ref,
                      *, eps, scale):
    # Probe cross-attention with the vision-tower post-LN fused into the K/V path.
    h = pl.program_id(1)
    x = x_ref[0]                                            # (S, D)
    mean = jnp.mean(x, axis=-1, keepdims=True)
    xc = x - mean
    var = jnp.mean(xc * xc, axis=-1, keepdims=True)
    kv = xc * lax.rsqrt(var + eps) * g_ref[...] + bt_ref[...]   # post-LN(last_hidden)

    q = (jnp.dot(probe_ref[...], wq_ref[0], preferred_element_type=jnp.float32)
         + bq_ref[0])                                       # (1, hd)
    k = jnp.dot(kv, wk_ref[0], preferred_element_type=jnp.float32) + bk_ref[0]
    v = jnp.dot(kv, wv_ref[0], preferred_element_type=jnp.float32) + bv_ref[0]

    s = lax.dot_general(q * scale, k, (((1,), (1,)), ((), ())),
                        preferred_element_type=jnp.float32)  # (1, S)
    m = jnp.max(s, axis=-1, keepdims=True)
    p = jnp.exp(s - m)
    p = p * pl.reciprocal(jnp.sum(p, axis=-1, keepdims=True), approx=True)
    attn = jnp.dot(p, v, preferred_element_type=jnp.float32)          # (1, hd)
    contrib = jnp.dot(attn, wo_ref[0], preferred_element_type=jnp.float32)

    @pl.when(h == 0)
    def _():
        o_ref[0] = bo_ref[...]

    o_ref[0] += contrib


def _linear_kernel(x_ref, w_ref, b_ref, o_ref):
    o_ref[...] = (
        jnp.dot(x_ref[...], w_ref[...], preferred_element_type=jnp.float32)
        + b_ref[...]
    )


# ------------------------------ Pallas wrappers -----------------------------

def patch_embed(patches, w, b, pos):
    B, S, CPP = patches.shape
    D = w.shape[1]
    return pl.pallas_call(
        _patch_embed_kernel,
        grid=(B,),
        in_specs=[
            pl.BlockSpec((1, S, CPP), lambda i: (i, 0, 0)),
            pl.BlockSpec((CPP, D), lambda i: (0, 0)),
            pl.BlockSpec((1, D), lambda i: (0, 0)),
            pl.BlockSpec((S, D), lambda i: (0, 0)),
        ],
        out_specs=pl.BlockSpec((1, S, D), lambda i: (i, 0, 0)),
        out_shape=jax.ShapeDtypeStruct((B, S, D), jnp.float32),
        compiler_params=pltpu.CompilerParams(
            dimension_semantics=("parallel",)),
    )(patches, w, b, pos)


def encoder_attn_block(x, g, bt, wq, bq, wk, bk, wv, bv, wo, bo, *, eps):
    B, S, D = x.shape
    H, _, hd = wq.shape
    scale = float(hd) ** -0.5
    head_w = pl.BlockSpec((1, D, hd), lambda b, h: (h, 0, 0))
    head_b = pl.BlockSpec((1, 1, hd), lambda b, h: (h, 0, 0))
    return pl.pallas_call(
        functools.partial(_encoder_attn_kernel, eps=eps, scale=scale),
        grid=(B, H),
        in_specs=[
            pl.BlockSpec((1, S, D), lambda b, h: (b, 0, 0)),
            pl.BlockSpec((1, D), lambda b, h: (0, 0)),
            pl.BlockSpec((1, D), lambda b, h: (0, 0)),
            head_w, head_b,                 # q
            head_w, head_b,                 # k
            head_w, head_b,                 # v
            pl.BlockSpec((1, hd, D), lambda b, h: (h, 0, 0)),
            pl.BlockSpec((1, D), lambda b, h: (0, 0)),
        ],
        out_specs=pl.BlockSpec((1, S, D), lambda b, h: (b, 0, 0)),
        out_shape=jax.ShapeDtypeStruct((B, S, D), jnp.float32),
        compiler_params=pltpu.CompilerParams(
            dimension_semantics=("parallel", "arbitrary"),
            vmem_limit_bytes=_VMEM_LIMIT),
    )(x, g, bt, wq, bq, wk, bk, wv, bv, wo, bo)


def mlp_block(x2d, g, bt, w1, b1, w2, b2, *, eps, tm=256, ti=512):
    M, D = x2d.shape
    I = w1.shape[1]
    TM = _tile(M, tm, 8)
    TI = _tile(I, ti, 128)
    return pl.pallas_call(
        functools.partial(_mlp_block_kernel, eps=eps),
        grid=(M // TM, I // TI),
        in_specs=[
            pl.BlockSpec((TM, D), lambda m, i: (m, 0)),
            pl.BlockSpec((1, D), lambda m, i: (0, 0)),
            pl.BlockSpec((1, D), lambda m, i: (0, 0)),
            pl.BlockSpec((D, TI), lambda m, i: (0, i)),
            pl.BlockSpec((1, TI), lambda m, i: (0, i)),
            pl.BlockSpec((TI, D), lambda m, i: (i, 0)),
            pl.BlockSpec((1, D), lambda m, i: (0, 0)),
        ],
        out_specs=pl.BlockSpec((TM, D), lambda m, i: (m, 0)),
        out_shape=jax.ShapeDtypeStruct((M, D), jnp.float32),
        scratch_shapes=[pltpu.VMEM((TM, D), jnp.float32)],
        compiler_params=pltpu.CompilerParams(
            dimension_semantics=("parallel", "arbitrary"),
            vmem_limit_bytes=_VMEM_LIMIT),
    )(x2d, g, bt, w1, b1, w2, b2)


def pool_attn(probe, x, g, bt, wq, bq, wk, bk, wv, bv, wo, bo, *, eps):
    B, S, D = x.shape
    H, _, hd = wq.shape
    scale = float(hd) ** -0.5
    head_w = pl.BlockSpec((1, D, hd), lambda b, h: (h, 0, 0))
    head_b = pl.BlockSpec((1, 1, hd), lambda b, h: (h, 0, 0))
    return pl.pallas_call(
        functools.partial(_pool_attn_kernel, eps=eps, scale=scale),
        grid=(B, H),
        in_specs=[
            pl.BlockSpec((1, D), lambda b, h: (0, 0)),       # probe (shared)
            pl.BlockSpec((1, S, D), lambda b, h: (b, 0, 0)),
            pl.BlockSpec((1, D), lambda b, h: (0, 0)),       # post-LN gamma
            pl.BlockSpec((1, D), lambda b, h: (0, 0)),       # post-LN beta
            head_w, head_b,                 # q
            head_w, head_b,                 # k
            head_w, head_b,                 # v
            pl.BlockSpec((1, hd, D), lambda b, h: (h, 0, 0)),
            pl.BlockSpec((1, D), lambda b, h: (0, 0)),
        ],
        out_specs=pl.BlockSpec((1, 1, D), lambda b, h: (b, 0, 0)),
        out_shape=jax.ShapeDtypeStruct((B, 1, D), jnp.float32),
        compiler_params=pltpu.CompilerParams(
            dimension_semantics=("parallel", "arbitrary"),
            vmem_limit_bytes=_VMEM_LIMIT),
    )(probe, x, g, bt, wq, bq, wk, bk, wv, bv, wo, bo)


def linear(x2d, w, b, *, tm=512):
    """x2d: (M, K); w pre-transposed (K, N); b: (1, N)."""
    M, K = x2d.shape
    N = w.shape[1]
    TM = _tile(M, tm, 8)
    return pl.pallas_call(
        _linear_kernel,
        grid=(M // TM,),
        in_specs=[
            pl.BlockSpec((TM, K), lambda m: (m, 0)),
            pl.BlockSpec((K, N), lambda m: (0, 0)),
            pl.BlockSpec((1, N), lambda m: (0, 0)),
        ],
        out_specs=pl.BlockSpec((TM, N), lambda m: (m, 0)),
        out_shape=jax.ShapeDtypeStruct((M, N), jnp.float32),
        compiler_params=pltpu.CompilerParams(
            dimension_semantics=("parallel",)),
    )(x2d, w, b)


# ------------------------------ model forward -------------------------------

def siglip_vision_forward(pixel_values, params, cfg):
    """Synthetic SiglipVisionModel; returns pre-post-LN hidden states (B,S,D).
    The final post-LN is fused into the pooling-head attention kernel."""
    B, C, Himg, Wimg = pixel_values.shape
    P = cfg["patch_size"]
    D = cfg["hidden_size"]
    eps = cfg["eps"]
    nH, nW = Himg // P, Wimg // P
    S = nH * nW

    # Patch conv (kernel=stride=P, valid) == patch extraction (im2col) + matmul.
    patches = (pixel_values.reshape(B, C, nH, P, nW, P)
               .transpose(0, 2, 4, 1, 3, 5)          # (B, nH, nW, C, P, P)
               .reshape(B, S, C * P * P))
    x = patch_embed(patches, params["patch_w"], params["patch_b"],
                    params["pos_emb"])               # + pos-emb fused

    for layer in params["layers"]:
        # LN1 + MHA + out-proj + residual, fused.
        x = encoder_attn_block(
            x, layer["ln1_g"], layer["ln1_b"],
            layer["wq"], layer["bq"], layer["wk"], layer["bk"],
            layer["wv"], layer["bv"], layer["wo"], layer["bo"], eps=eps)
        # LN2 + fc1 + GELU + fc2 + residual, fused.
        x = mlp_block(
            x.reshape(B * S, D), layer["ln2_g"], layer["ln2_b"],
            layer["fc1_w"], layer["fc1_b"], layer["fc2_w"], layer["fc2_b"],
            eps=eps).reshape(B, S, D)
    return x


def pooling_head_forward(pre_ln_hidden, post_ln_g, post_ln_b, params, cfg):
    """SiglipMultiheadAttentionPoolingHead + classification Linear."""
    B, S, D = pre_ln_hidden.shape
    eps = cfg["eps"]

    # probe.repeat(B,1,1) cross-attention; vision post-LN folded into K/V path.
    attn_out = pool_attn(
        params["probe"], pre_ln_hidden, post_ln_g, post_ln_b,
        params["mha_wq"], params["mha_bq"], params["mha_wk"], params["mha_bk"],
        params["mha_wv"], params["mha_bv"], params["mha_wo"], params["mha_bo"],
        eps=eps)                                        # (B, 1, D)

    # residual + MLP(LN(residual)); with Sq == 1 this is exactly hidden[:, 0].
    pooled = mlp_block(
        attn_out.reshape(B, D), params["ln_g"], params["ln_b"],
        params["fc1_w"], params["fc1_b"], params["fc2_w"], params["fc2_b"],
        eps=eps)                                        # (B, D)

    return linear(pooled, params["cls_w"], params["cls_b"])


def siglip_with_pooling_head(pixel_values, params, cfg):
    hidden = siglip_vision_forward(pixel_values, params["vision"], cfg)
    return pooling_head_forward(
        hidden, params["vision"]["post_ln_g"], params["vision"]["post_ln_b"],
        params["pool"], cfg)


# ------------------------------ parameter init ------------------------------
# All weights are stored in the "x @ W" orientation (no per-forward transpose);
# attention weights are stored per head: (H, D, hd) / (H, hd, D).

def _lin_init(key, in_f, out_f, scale=0.02):
    w = scale * jax.random.normal(key, (in_f, out_f), jnp.float32)
    b = jnp.zeros((1, out_f), jnp.float32)
    return w, b


def _head_init(key, D, H, hd, scale=0.02):
    w = scale * jax.random.normal(key, (H, D, hd), jnp.float32)
    b = jnp.zeros((H, 1, hd), jnp.float32)
    return w, b


def init_params(key, cfg):
    D = cfg["hidden_size"]
    I = cfg["intermediate_size"]
    C = cfg["num_channels"]
    P = cfg["patch_size"]
    H = cfg["num_heads"]
    hd = D // H
    S = (cfg["image_size"] // P) ** 2
    keys = iter(jax.random.split(key, 256))

    vision = {}
    vision["patch_w"], vision["patch_b"] = _lin_init(next(keys), C * P * P, D)
    vision["pos_emb"] = 0.02 * jax.random.normal(next(keys), (S, D), jnp.float32)
    vision["layers"] = []
    for _ in range(cfg["num_layers"]):
        layer = {}
        layer["ln1_g"] = jnp.ones((1, D), jnp.float32)
        layer["ln1_b"] = jnp.zeros((1, D), jnp.float32)
        layer["ln2_g"] = jnp.ones((1, D), jnp.float32)
        layer["ln2_b"] = jnp.zeros((1, D), jnp.float32)
        layer["wq"], layer["bq"] = _head_init(next(keys), D, H, hd)
        layer["wk"], layer["bk"] = _head_init(next(keys), D, H, hd)
        layer["wv"], layer["bv"] = _head_init(next(keys), D, H, hd)
        layer["wo"] = 0.02 * jax.random.normal(next(keys), (H, hd, D), jnp.float32)
        layer["bo"] = jnp.zeros((1, D), jnp.float32)
        layer["fc1_w"], layer["fc1_b"] = _lin_init(next(keys), D, I)
        layer["fc2_w"], layer["fc2_b"] = _lin_init(next(keys), I, D)
        vision["layers"].append(layer)
    vision["post_ln_g"] = jnp.ones((1, D), jnp.float32)
    vision["post_ln_b"] = jnp.zeros((1, D), jnp.float32)

    pool = {}
    pool["probe"] = jax.random.normal(next(keys), (1, D), jnp.float32)
    pool["mha_wq"], pool["mha_bq"] = _head_init(next(keys), D, H, hd)
    pool["mha_wk"], pool["mha_bk"] = _head_init(next(keys), D, H, hd)
    pool["mha_wv"], pool["mha_bv"] = _head_init(next(keys), D, H, hd)
    pool["mha_wo"] = 0.02 * jax.random.normal(next(keys), (H, hd, D), jnp.float32)
    pool["mha_bo"] = jnp.zeros((1, D), jnp.float32)
    pool["ln_g"] = jnp.ones((1, D), jnp.float32)
    pool["ln_b"] = jnp.zeros((1, D), jnp.float32)
    pool["fc1_w"], pool["fc1_b"] = _lin_init(next(keys), D, I)
    pool["fc2_w"], pool["fc2_b"] = _lin_init(next(keys), I, D)
    pool["cls_w"], pool["cls_b"] = _lin_init(next(keys), D, cfg["num_classes"])

    return {"vision": vision, "pool": pool}


# ----------------------------------- main ------------------------------------

if __name__ == "__main__":
    cfg = dict(
        image_size=16,
        patch_size=8,
        num_channels=3,
        hidden_size=32,
        intermediate_size=64,
        num_heads=4,
        num_layers=2,
        num_classes=16,
        eps=1e-6,
    )

    key = jax.random.PRNGKey(0)
    k_params, k_x = jax.random.split(key)
    params = init_params(k_params, cfg)

    # Layout: NCHW pixel values, like the PyTorch module.
    pixel_values = jax.random.normal(
        k_x, (2, cfg["num_channels"], cfg["image_size"], cfg["image_size"]),
        jnp.float32)

    fwd = jax.jit(functools.partial(siglip_with_pooling_head, cfg=cfg))
    logits = fwd(pixel_values, params)
    jax.block_until_ready(logits)

    assert logits.shape == (2, cfg["num_classes"])
    assert jnp.all(jnp.isfinite(logits))
    print("KERNEL_OK")
</pallas_src>

<mosaic_0001>
module attributes {stable_mosaic.version = 11 : i64} {
  func.func @_patch_embed_kernel(%arg0: i32, %arg1: memref<1x4x192xf32, #tpu.memory_space<vmem>>, %arg2: memref<192x32xf32, #tpu.memory_space<vmem>>, %arg3: memref<1x32xf32, #tpu.memory_space<vmem>>, %arg4: memref<4x32xf32, #tpu.memory_space<vmem>>, %arg5: memref<1x4x32xf32, #tpu.memory_space<vmem>>) attributes {dimension_semantics = [#tpu.dimension_semantics<parallel>], iteration_bounds = array<i64: 2>, scalar_prefetch = 0 : i64, scratch_operands = 0 : i64, tpu.core_type = #tpu.core_type<tc>, window_params = [{transform_indices = @transform_0, window_bounds = array<i64: 1, 4, 192>}, {pipeline_mode = #tpu.pipeline_mode<synchronous>, transform_indices = @transform_1, window_bounds = array<i64: 192, 32>}, {pipeline_mode = #tpu.pipeline_mode<synchronous>, transform_indices = @transform_2, window_bounds = array<i64: 1, 32>}, {pipeline_mode = #tpu.pipeline_mode<synchronous>, transform_indices = @transform_3, window_bounds = array<i64: 4, 32>}, {transform_indices = @transform_4, window_bounds = array<i64: 1, 4, 32>}]} {
    %c0 = arith.constant 0 : index
    %c0_0 = arith.constant 0 : index
    %c0_1 = arith.constant 0 : index
    %0 = vector.load %arg1[%c0, %c0_0, %c0_1] : memref<1x4x192xf32, #tpu.memory_space<vmem>>, vector<1x4x192xf32>
    %1 = vector.shape_cast %0 : vector<1x4x192xf32> to vector<4x192xf32>
    %c0_2 = arith.constant 0 : index
    %c0_3 = arith.constant 0 : index
    %2 = vector.load %arg2[%c0_2, %c0_3] : memref<192x32xf32, #tpu.memory_space<vmem>>, vector<192x32xf32>
    %cst = arith.constant dense<0.000000e+00> : vector<4x32xf32>
    %3 = tpu.matmul %1, %2, %cst {dimension_numbers = #tpu.dot_dimension_numbers<[1], [0], [0], [1], [0, 0, 1, 1], [], []>} : vector<4x192xf32>, vector<192x32xf32>, vector<4x32xf32> -> vector<4x32xf32>
    %c0_4 = arith.constant 0 : index
    %c0_5 = arith.constant 0 : index
    %4 = vector.load %arg3[%c0_4, %c0_5] : memref<1x32xf32, #tpu.memory_space<vmem>>, vector<1x32xf32>
    %5 = vector.broadcast %4 : vector<1x32xf32> to vector<4x32xf32>
    %6 = arith.addf %3, %5 : vector<4x32xf32>
    %c0_6 = arith.constant 0 : index
    %c0_7 = arith.constant 0 : index
    %7 = vector.load %arg4[%c0_6, %c0_7] : memref<4x32xf32, #tpu.memory_space<vmem>>, vector<4x32xf32>
    %8 = arith.addf %6, %7 : vector<4x32xf32>
    %c0_8 = arith.constant 0 : index
    %c0_9 = arith.constant 0 : index
    %c0_10 = arith.constant 0 : index
    %9 = vector.load %arg5[%c0_8, %c0_9, %c0_10] : memref<1x4x32xf32, #tpu.memory_space<vmem>>, vector<1x4x32xf32>
    %10 = vector.shape_cast %9 : vector<1x4x32xf32> to vector<4x32xf32>
    %11 = vector.shape_cast %8 : vector<4x32xf32> to vector<1x4x32xf32>
    tpu.vector_store %arg5[%c0_8, %c0_9, %c0_10], %11 {strides = array<i32>} : memref<1x4x32xf32, #tpu.memory_space<vmem>>, vector<1x4x32xf32>,
    return
  }
  func.func @transform_0(%arg0: i32) -> (i32, i32, i32) {
    %c0_i32 = arith.constant 0 : i32
    %c0_i32_0 = arith.constant 0 : i32
    %c0_i32_1 = arith.constant 0 : i32
    return %arg0, %c0_i32, %c0_i32_0 : i32, i32, i32
  }
  func.func @transform_1(%arg0: i32) -> (i32, i32) {
    %c0_i32 = arith.constant 0 : i32
    %c0_i32_0 = arith.constant 0 : i32
    %c0_i32_1 = arith.constant 0 : i32
    return %c0_i32, %c0_i32_0 : i32, i32
  }
  func.func @transform_2(%arg0: i32) -> (i32, i32) {
    %c0_i32 = arith.constant 0 : i32
    %c0_i32_0 = arith.constant 0 : i32
    %c0_i32_1 = arith.constant 0 : i32
    return %c0_i32, %c0_i32_0 : i32, i32
  }
  func.func @transform_3(%arg0: i32) -> (i32, i32) {
    %c0_i32 = arith.constant 0 : i32
    %c0_i32_0 = arith.constant 0 : i32
    %c0_i32_1 = arith.constant 0 : i32
    return %c0_i32, %c0_i32_0 : i32, i32
  }
  func.func @transform_4(%arg0: i32) -> (i32, i32, i32) {
    %c0_i32 = arith.constant 0 : i32
    %c0_i32_0 = arith.constant 0 : i32
    %c0_i32_1 = arith.constant 0 : i32
    return %arg0, %c0_i32, %c0_i32_0 : i32, i32, i32
  }
}

module attributes {stable_mosaic.version = 11 : i64} {
  func.func @_encoder_attn_kernel(%arg0: i32, %arg1: i32, %arg2: memref<1x4x32xf32, #tpu.memory_space<vmem>>, %arg3: memref<1x32xf32, #tpu.memory_space<vmem>>, %arg4: memref<1x32xf32, #tpu.memory_space<vmem>>, %arg5: memref<1x32x8xf32, #tpu.memory_space<vmem>>, %arg6: memref<1x1x8xf32, #tpu.memory_space<vmem>>, %arg7: memref<1x32x8xf32, #tpu.memory_space<vmem>>, %arg8: memref<1x1x8xf32, #tpu.memory_space<vmem>>, %arg9: memref<1x32x8xf32, #tpu.memory_space<vmem>>, %arg10: memref<1x1x8xf32, #tpu.memory_space<vmem>>, %arg11: memref<1x8x32xf32, #tpu.memory_space<vmem>>, %arg12: memref<1x32xf32, #tpu.memory_space<vmem>>, %arg13: memref<1x4x32xf32, #tpu.memory_space<vmem>>) attributes {dimension_semantics = [#tpu.dimension_semantics<parallel>, #tpu.dimension_semantics<arbitrary>], iteration_bounds = array<i64: 2, 4>, scalar_prefetch = 0 : i64, scratch_operands = 0 : i64, tpu.core_type = #tpu.core_type<tc>, window_params = [{transform_indices = @transform_0, window_bounds = array<i64: 1, 4, 32>}, {pipeline_mode = #tpu.pipeline_mode<synchronous>, transform_indices = @transform_1, window_bounds = array<i64: 1, 32>}, {pipeline_mode = #tpu.pipeline_mode<synchronous>, transform_indices = @transform_2, window_bounds = array<i64: 1, 32>}, {transform_indices = @transform_3, window_bounds = array<i64: 1, 32, 8>}, {transform_indices = @transform_4, window_bounds = array<i64: 1, 1, 8>}, {transform_indices = @transform_5, window_bounds = array<i64: 1, 32, 8>}, {transform_indices = @transform_6, window_bounds = array<i64: 1, 1, 8>}, {transform_indices = @transform_7, window_bounds = array<i64: 1, 32, 8>}, {transform_indices = @transform_8, window_bounds = array<i64: 1, 1, 8>}, {transform_indices = @transform_9, window_bounds = array<i64: 1, 8, 32>}, {pipeline_mode = #tpu.pipeline_mode<synchronous>, transform_indices = @transform_10, window_bounds = array<i64: 1, 32>}, {transform_indices = @transform_11, window_bounds = array<i64: 1, 4, 32>}]} {
    %c0 = arith.constant 0 : index
    %c0_0 = arith.constant 0 : index
    %c0_1 = arith.constant 0 : index
    %0 = vector.load %arg2[%c0, %c0_0, %c0_1] : memref<1x4x32xf32, #tpu.memory_space<vmem>>, vector<1x4x32xf32>
    %1 = vector.shape_cast %0 : vector<1x4x32xf32> to vector<4x32xf32>
    %cst = arith.constant dense<0.000000e+00> : vector<4xf32>
    %2 = vector.multi_reduction <add>, %1, %cst [1] : vector<4x32xf32> to vector<4xf32>
    %3 = vector.shape_cast %2 : vector<4xf32> to vector<4x1xf32>
    %cst_2 = arith.constant 3.200000e+01 : f32
    %4 = vector.broadcast %cst_2 : f32 to vector<4x1xf32>
    %5 = arith.divf %3, %4 : vector<4x1xf32>
    %6 = vector.broadcast %5 : vector<4x1xf32> to vector<4x32xf32>
    %7 = arith.subf %1, %6 : vector<4x32xf32>
    %8 = arith.mulf %7, %7 : vector<4x32xf32>
    %cst_3 = arith.constant dense<0.000000e+00> : vector<4xf32>
    %9 = vector.multi_reduction <add>, %8, %cst_3 [1] : vector<4x32xf32> to vector<4xf32>
    %10 = vector.shape_cast %9 : vector<4xf32> to vector<4x1xf32>
    %cst_4 = arith.constant 3.200000e+01 : f32
    %11 = vector.broadcast %cst_4 : f32 to vector<4x1xf32>
    %12 = arith.divf %10, %11 : vector<4x1xf32>
    %cst_5 = arith.constant 9.99999997E-7 : f32
    %13 = vector.broadcast %cst_5 : f32 to vector<4x1xf32>
    %14 = arith.addf %12, %13 : vector<4x1xf32>
    %15 = math.rsqrt %14 : vector<4x1xf32>
    %16 = vector.broadcast %15 : vector<4x1xf32> to vector<4x32xf32>
    %17 = arith.mulf %7, %16 : vector<4x32xf32>
    %c0_6 = arith.constant 0 : index
    %c0_7 = arith.constant 0 : index
    %18 = vector.load %arg3[%c0_6, %c0_7] : memref<1x32xf32, #tpu.memory_space<vmem>>, vector<1x32xf32>
    %19 = vector.broadcast %18 : vector<1x32xf32> to vector<4x32xf32>
    %20 = arith.mulf %17, %19 : vector<4x32xf32>
    %c0_8 = arith.constant 0 : index
    %c0_9 = arith.constant 0 : index
    %21 = vector.load %arg4[%c0_8, %c0_9] : memref<1x32xf32, #tpu.memory_space<vmem>>, vector<1x32xf32>
    %22 = vector.broadcast %21 : vector<1x32xf32> to vector<4x32xf32>
    %23 = arith.addf %20, %22 : vector<4x32xf32>
    %c0_10 = arith.constant 0 : index
    %c0_11 = arith.constant 0 : index
    %c0_12 = arith.constant 0 : index
    %24 = vector.load %arg5[%c0_10, %c0_11, %c0_12] : memref<1x32x8xf32, #tpu.memory_space<vmem>>, vector<1x32x8xf32>
    %25 = vector.shape_cast %24 : vector<1x32x8xf32> to vector<32x8xf32>
    %cst_13 = arith.constant dense<0.000000e+00> : vector<4x8xf32>
    %26 = tpu.matmul %23, %25, %cst_13 {dimension_numbers = #tpu.dot_dimension_numbers<[1], [0], [0], [1], [0, 0, 1, 1], [], []>} : vector<4x32xf32>, vector<32x8xf32>, vector<4x8xf32> -> vector<4x8xf32>
    %c0_14 = arith.constant 0 : index
    %c0_15 = arith.constant 0 : index
    %c0_16 = arith.constant 0 : index
    %27 = vector.load %arg6[%c0_14, %c0_15, %c0_16] : memref<1x1x8xf32, #tpu.memory_space<vmem>>, vector<1x1x8xf32>
    %28 = vector.shape_cast %27 : vector<1x1x8xf32> to vector<1x8xf32>
    %29 = vector.broadcast %28 : vector<1x8xf32> to vector<4x8xf32>
    %30 = arith.addf %26, %29 : vector<4x8xf32>
    %c0_17 = arith.constant 0 : index
    %c0_18 = arith.constant 0 : index
    %c0_19 = arith.constant 0 : index
    %31 = vector.load %arg7[%c0_17, %c0_18, %c0_19] : memref<1x32x8xf32, #tpu.memory_space<vmem>>, vector<1x32x8xf32>
    %32 = vector.shape_cast %31 : vector<1x32x8xf32> to vector<32x8xf32>
    %cst_20 = arith.constant dense<0.000000e+00> : vector<4x8xf32>
    %33 = tpu.matmul %23, %32, %cst_20 {dimension_numbers = #tpu.dot_dimension_numbers<[1], [0], [0], [1], [0, 0, 1, 1], [], []>} : vector<4x32xf32>, vector<32x8xf32>, vector<4x8xf32> -> vector<4x8xf32>
    %c0_21 = arith.constant 0 : index
    %c0_22 = arith.constant 0 : index
    %c0_23 = arith.constant 0 : index
    %34 = vector.load %arg8[%c0_21, %c0_22, %c0_23] : memref<1x1x8xf32, #tpu.memory_space<vmem>>, vector<1x1x8xf32>
    %35 = vector.shape_cast %34 : vector<1x1x8xf32> to vector<1x8xf32>
    %36 = vector.broadcast %35 : vector<1x8xf32> to vector<4x8xf32>
    %37 = arith.addf %33, %36 : vector<4x8xf32>
    %c0_24 = arith.constant 0 : index
    %c0_25 = arith.constant 0 : index
    %c0_26 = arith.constant 0 : index
    %38 = vector.load %arg9[%c0_24, %c0_25, %c0_26] : memref<1x32x8xf32, #tpu.memory_space<vmem>>, vector<1x32x8xf32>
    %39 = vector.shape_cast %38 : vector<1x32x8xf32> to vector<32x8xf32>
    %cst_27 = arith.constant dense<0.000000e+00> : vector<4x8xf32>
    %40 = tpu.matmul %23, %39, %cst_27 {dimension_numbers = #tpu.dot_dimension_numbers<[1], [0], [0], [1], [0, 0, 1, 1], [], []>} : vector<4x32xf32>, vector<32x8xf32>, vector<4x8xf32> -> vector<4x8xf32>
    %c0_28 = arith.constant 0 : index
    %c0_29 = arith.constant 0 : index
    %c0_30 = arith.constant 0 : index
    %41 = vector.load %arg10[%c0_28, %c0_29, %c0_30] : memref<1x1x8xf32, #tpu.memory_space<vmem>>, vector<1x1x8xf32>
    %42 = vector.shape_cast %41 : vector<1x1x8xf32> to vector<1x8xf32>
    %43 = vector.broadcast %42 : vector<1x8xf32> to vector<4x8xf32>
    %44 = arith.addf %40, %43 : vector<4x8xf32>
    %cst_31 = arith.constant 0.353553385 : f32
    %45 = vector.broadcast %cst_31 : f32 to vector<4x8xf32>
    %46 = arith.mulf %30, %45 : vector<4x8xf32>
    %cst_32 = arith.constant dense<0.000000e+00> : vector<4x4xf32>
    %47 = tpu.matmul %46, %37, %cst_32 {dimension_numbers = #tpu.dot_dimension_numbers<[1], [1], [0], [0], [0, 0, 1, 0], [], []>} : vector<4x8xf32>, vector<4x8xf32>, vector<4x4xf32> -> vector<4x4xf32>
    %cst_33 = arith.constant dense<0xFF800000> : vector<4xf32>
    %48 = vector.multi_reduction <maximumf>, %47, %cst_33 [1] : vector<4x4xf32> to vector<4xf32>
    %49 = vector.shape_cast %48 : vector<4xf32> to vector<4x1xf32>
    %50 = vector.broadcast %49 : vector<4x1xf32> to vector<4x4xf32>
    %51 = arith.subf %47, %50 : vector<4x4xf32>
    %52 = math.exp %51 : vector<4x4xf32>
    %cst_34 = arith.constant dense<0.000000e+00> : vector<4xf32>
    %53 = vector.multi_reduction <add>, %52, %cst_34 [1] : vector<4x4xf32> to vector<4xf32>
    %54 = vector.shape_cast %53 : vector<4xf32> to vector<4x1xf32>
    %55 = tpu.reciprocal %54 {approx = true} : vector<4x1xf32> -> vector<4x1xf32>
    %56 = vector.broadcast %55 : vector<4x1xf32> to vector<4x4xf32>
    %57 = arith.mulf %52, %56 : vector<4x4xf32>
    %cst_35 = arith.constant dense<0.000000e+00> : vector<4x8xf32>
    %58 = tpu.matmul %57, %44, %cst_35 {dimension_numbers = #tpu.dot_dimension_numbers<[1], [0], [0], [1], [0, 0, 1, 1], [], []>} : vector<4x4xf32>, vector<4x8xf32>, vector<4x8xf32> -> vector<4x8xf32>
    %c0_36 = arith.constant 0 : index
    %c0_37 = arith.constant 0 : index
    %c0_38 = arith.constant 0 : index
    %59 = vector.load %arg11[%c0_36, %c0_37, %c0_38] : memref<1x8x32xf32, #tpu.memory_space<vmem>>, vector<1x8x32xf32>
    %60 = vector.shape_cast %59 : vector<1x8x32xf32> to vector<8x32xf32>
    %cst_39 = arith.constant dense<0.000000e+00> : vector<4x32xf32>
    %61 = tpu.matmul %58, %60, %cst_39 {dimension_numbers = #tpu.dot_dimension_numbers<[1], [0], [0], [1], [0, 0, 1, 1], [], []>} : vector<4x8xf32>, vector<8x32xf32>, vector<4x32xf32> -> vector<4x32xf32>
    %c0_i32 = arith.constant 0 : i32
    %62 = arith.cmpi eq, %arg1, %c0_i32 : i32
    %63 = arith.extui %62 : i1 to i32
    %c0_i32_40 = arith.constant 0 : i32
    %64 = arith.cmpi ne, %63, %c0_i32_40 : i32
    scf.if %64 {
      %c0_47 = arith.constant 0 : index
      %c0_48 = arith.constant 0 : index
      %71 = vector.load %arg12[%c0_47, %c0_48] : memref<1x32xf32, #tpu.memory_space<vmem>>, vector<1x32xf32>
      %72 = vector.broadcast %71 : vector<1x32xf32> to vector<4x32xf32>
      %73 = arith.addf %1, %72 : vector<4x32xf32>
      %c0_49 = arith.constant 0 : index
      %c0_50 = arith.constant 0 : index
      %c0_51 = arith.constant 0 : index
      %74 = vector.load %arg13[%c0_49, %c0_50, %c0_51] : memref<1x4x32xf32, #tpu.memory_space<vmem>>, vector<1x4x32xf32>
      %75 = vector.shape_cast %74 : vector<1x4x32xf32> to vector<4x32xf32>
      %76 = vector.shape_cast %73 : vector<4x32xf32> to vector<1x4x32xf32>
      tpu.vector_store %arg13[%c0_49, %c0_50, %c0_51], %76 {strides = array<i32>} : memref<1x4x32xf32, #tpu.memory_space<vmem>>, vector<1x4x32xf32>,
    } else {
    }
    %c0_41 = arith.constant 0 : index
    %c0_42 = arith.constant 0 : index
    %c0_43 = arith.constant 0 : index
    %65 = vector.load %arg13[%c0_41, %c0_42, %c0_43] : memref<1x4x32xf32, #tpu.memory_space<vmem>>, vector<1x4x32xf32>
    %66 = vector.shape_cast %65 : vector<1x4x32xf32> to vector<4x32xf32>
    %67 = arith.addf %66, %61 : vector<4x32xf32>
    %c0_44 = arith.constant 0 : index
    %c0_45 = arith.constant 0 : index
    %c0_46 = arith.constant 0 : index
    %68 = vector.load %arg13[%c0_44, %c0_45, %c0_46] : memref<1x4x32xf32, #tpu.memory_space<vmem>>, vector<1x4x32xf32>
    %69 = vector.shape_cast %68 : vector<1x4x32xf32> to vector<4x32xf32>
    %70 = vector.shape_cast %67 : vector<4x32xf32> to vector<1x4x32xf32>
    tpu.vector_store %arg13[%c0_44, %c0_45, %c0_46], %70 {strides = array<i32>} : memref<1x4x32xf32, #tpu.memory_space<vmem>>, vector<1x4x32xf32>,
    return
  }
  func.func @transform_0(%arg0: i32, %arg1: i32) -> (i32, i32, i32) {
    %c0_i32 = arith.constant 0 : i32
    %c0_i32_0 = arith.constant 0 : i32
    %c0_i32_1 = arith.constant 0 : i32
    return %arg0, %c0_i32, %c0_i32_0 : i32, i32, i32
  }
  func.func @transform_1(%arg0: i32, %arg1: i32) -> (i32, i32) {
    %c0_i32 = arith.constant 0 : i32
    %c0_i32_0 = arith.constant 0 : i32
    %c0_i32_1 = arith.constant 0 : i32
    return %c0_i32, %c0_i32_0 : i32, i32
  }
  func.func @transform_2(%arg0: i32, %arg1: i32) -> (i32, i32) {
    %c0_i32 = arith.constant 0 : i32
    %c0_i32_0 = arith.constant 0 : i32
    %c0_i32_1 = arith.constant 0 : i32
    return %c0_i32, %c0_i32_0 : i32, i32
  }
  func.func @transform_3(%arg0: i32, %arg1: i32) -> (i32, i32, i32) {
    %c0_i32 = arith.constant 0 : i32
    %c0_i32_0 = arith.constant 0 : i32
    %c0_i32_1 = arith.constant 0 : i32
    return %arg1, %c0_i32, %c0_i32_0 : i32, i32, i32
  }
  func.func @transform_4(%arg0: i32, %arg1: i32) -> (i32, i32, i32) {
    %c0_i32 = arith.constant 0 : i32
    %c0_i32_0 = arith.constant 0 : i32
    %c0_i32_1 = arith.constant 0 : i32
    return %arg1, %c0_i32, %c0_i32_0 : i32, i32, i32
  }
  func.func @transform_5(%arg0: i32, %arg1: i32) -> (i32, i32, i32) {
    %c0_i32 = arith.constant 0 : i32
    %c0_i32_0 = arith.constant 0 : i32
    %c0_i32_1 = arith.constant 0 : i32
    return %arg1, %c0_i32, %c0_i32_0 : i32, i32, i32
  }
  func.func @transform_6(%arg0: i32, %arg1: i32) -> (i32, i32, i32) {
    %c0_i32 = arith.constant 0 : i32
    %c0_i32_0 = arith.constant 0 : i32
    %c0_i32_1 = arith.constant 0 : i32
    return %arg1, %c0_i32, %c0_i32_0 : i32, i32, i32
  }
  func.func @transform_7(%arg0: i32, %arg1: i32) -> (i32, i32, i32) {
    %c0_i32 = arith.constant 0 : i32
    %c0_i32_0 = arith.constant 0 : i32
    %c0_i32_1 = arith.constant 0 : i32
    return %arg1, %c0_i32, %c0_i32_0 : i32, i32, i32
  }
  func.func @transform_8(%arg0: i32, %arg1: i32) -> (i32, i32, i32) {
    %c0_i32 = arith.constant 0 : i32
    %c0_i32_0 = arith.constant 0 : i32
    %c0_i32_1 = arith.constant 0 : i32
    return %arg1, %c0_i32, %c0_i32_0 : i32, i32, i32
  }
  func.func @transform_9(%arg0: i32, %arg1: i32) -> (i32, i32, i32) {
    %c0_i32 = arith.constant 0 : i32
    %c0_i32_0 = arith.constant 0 : i32
    %c0_i32_1 = arith.constant 0 : i32
    return %arg1, %c0_i32, %c0_i32_0 : i32, i32, i32
  }
  func.func @transform_10(%arg0: i32, %arg1: i32) -> (i32, i32) {
    %c0_i32 = arith.constant 0 : i32
    %c0_i32_0 = arith.constant 0 : i32
    %c0_i32_1 = arith.constant 0 : i32
    return %c0_i32, %c0_i32_0 : i32, i32
  }
  func.func @transform_11(%arg0: i32, %arg1: i32) -> (i32, i32, i32) {
    %c0_i32 = arith.constant 0 : i32
    %c0_i32_0 = arith.constant 0 : i32
    %c0_i32_1 = arith.constant 0 : i32
    return %arg0, %c0_i32, %c0_i32_0 : i32, i32, i32
  }
}

module attributes {stable_mosaic.version = 11 : i64} {
  func.func @_mlp_block_kernel(%arg0: i32, %arg1: i32, %arg2: memref<8x32xf32, #tpu.memory_space<vmem>>, %arg3: memref<1x32xf32, #tpu.memory_space<vmem>>, %arg4: memref<1x32xf32, #tpu.memory_space<vmem>>, %arg5: memref<32x64xf32, #tpu.memory_space<vmem>>, %arg6: memref<1x64xf32, #tpu.memory_space<vmem>>, %arg7: memref<64x32xf32, #tpu.memory_space<vmem>>, %arg8: memref<1x32xf32, #tpu.memory_space<vmem>>, %arg9: memref<8x32xf32, #tpu.memory_space<vmem>>, %arg10: memref<8x32xf32, #tpu.memory_space<vmem>>) attributes {dimension_semantics = [#tpu.dimension_semantics<parallel>, #tpu.dimension_semantics<arbitrary>], iteration_bounds = array<i64: 1, 1>, scalar_prefetch = 0 : i64, scratch_operands = 1 : i64, tpu.core_type = #tpu.core_type<tc>, window_params = [{transform_indices = @transform_0, window_bounds = array<i64: 8, 32>}, {pipeline_mode = #tpu.pipeline_mode<synchronous>, transform_indices = @transform_1, window_bounds = array<i64: 1, 32>}, {pipeline_mode = #tpu.pipeline_mode<synchronous>, transform_indices = @transform_2, window_bounds = array<i64: 1, 32>}, {transform_indices = @transform_3, window_bounds = array<i64: 32, 64>}, {transform_indices = @transform_4, window_bounds = array<i64: 1, 64>}, {transform_indices = @transform_5, window_bounds = array<i64: 64, 32>}, {pipeline_mode = #tpu.pipeline_mode<synchronous>, transform_indices = @transform_6, window_bounds = array<i64: 1, 32>}, {transform_indices = @transform_7, window_bounds = array<i64: 8, 32>}]} {
    %c0_i32 = arith.constant 0 : i32
    %0 = arith.cmpi eq, %arg1, %c0_i32 : i32
    %1 = arith.extui %0 : i1 to i32
    %c0_i32_0 = arith.constant 0 : i32
    %2 = arith.cmpi ne, %1, %c0_i32_0 : i32
    scf.if %2 {
      %c0_17 = arith.constant 0 : index
      %c0_18 = arith.constant 0 : index
      %27 = vector.load %arg2[%c0_17, %c0_18] : memref<8x32xf32, #tpu.memory_space<vmem>>, vector<8x32xf32>
      %cst_19 = arith.constant dense<0.000000e+00> : vector<8xf32>
      %28 = vector.multi_reduction <add>, %27, %cst_19 [1] : vector<8x32xf32> to vector<8xf32>
      %29 = vector.shape_cast %28 : vector<8xf32> to vector<8x1xf32>
      %cst_20 = arith.constant 3.200000e+01 : f32
      %30 = vector.broadcast %cst_20 : f32 to vector<8x1xf32>
      %31 = arith.divf %29, %30 : vector<8x1xf32>
      %32 = vector.broadcast %31 : vector<8x1xf32> to vector<8x32xf32>
      %33 = arith.subf %27, %32 : vector<8x32xf32>
      %34 = arith.mulf %33, %33 : vector<8x32xf32>
      %cst_21 = arith.constant dense<0.000000e+00> : vector<8xf32>
      %35 = vector.multi_reduction <add>, %34, %cst_21 [1] : vector<8x32xf32> to vector<8xf32>
      %36 = vector.shape_cast %35 : vector<8xf32> to vector<8x1xf32>
      %cst_22 = arith.constant 3.200000e+01 : f32
      %37 = vector.broadcast %cst_22 : f32 to vector<8x1xf32>
      %38 = arith.divf %36, %37 : vector<8x1xf32>
      %cst_23 = arith.constant 9.99999997E-7 : f32
      %39 = vector.broadcast %cst_23 : f32 to vector<8x1xf32>
      %40 = arith.addf %38, %39 : vector<8x1xf32>
      %41 = math.rsqrt %40 : vector<8x1xf32>
      %42 = vector.broadcast %41 : vector<8x1xf32> to vector<8x32xf32>
      %43 = arith.mulf %33, %42 : vector<8x32xf32>
      %c0_24 = arith.constant 0 : index
      %c0_25 = arith.constant 0 : index
      %44 = vector.load %arg3[%c0_24, %c0_25] : memref<1x32xf32, #tpu.memory_space<vmem>>, vector<1x32xf32>
      %45 = vector.broadcast %44 : vector<1x32xf32> to vector<8x32xf32>
      %46 = arith.mulf %43, %45 : vector<8x32xf32>
      %c0_26 = arith.constant 0 : index
      %c0_27 = arith.constant 0 : index
      %47 = vector.load %arg4[%c0_26, %c0_27] : memref<1x32xf32, #tpu.memory_space<vmem>>, vector<1x32xf32>
      %48 = vector.broadcast %47 : vector<1x32xf32> to vector<8x32xf32>
      %49 = arith.addf %46, %48 : vector<8x32xf32>
      %c0_28 = arith.constant 0 : index
      %c0_29 = arith.constant 0 : index
      %50 = vector.load %arg10[%c0_28, %c0_29] : memref<8x32xf32, #tpu.memory_space<vmem>>, vector<8x32xf32>
      tpu.vector_store %arg10[%c0_28, %c0_29], %49 {strides = array<i32>} : memref<8x32xf32, #tpu.memory_space<vmem>>, vector<8x32xf32>,
      %c0_30 = arith.constant 0 : index
      %c0_31 = arith.constant 0 : index
      %51 = vector.load %arg8[%c0_30, %c0_31] : memref<1x32xf32, #tpu.memory_space<vmem>>, vector<1x32xf32>
      %52 = vector.broadcast %51 : vector<1x32xf32> to vector<8x32xf32>
      %53 = arith.addf %27, %52 : vector<8x32xf32>
      %c0_32 = arith.constant 0 : index
      %c0_33 = arith.constant 0 : index
      %54 = vector.load %arg9[%c0_32, %c0_33] : memref<8x32xf32, #tpu.memory_space<vmem>>, vector<8x32xf32>
      tpu.vector_store %arg9[%c0_32, %c0_33], %53 {strides = array<i32>} : memref<8x32xf32, #tpu.memory_space<vmem>>, vector<8x32xf32>,
    } else {
    }
    %c0 = arith.constant 0 : index
    %c0_1 = arith.constant 0 : index
    %3 = vector.load %arg10[%c0, %c0_1] : memref<8x32xf32, #tpu.memory_space<vmem>>, vector<8x32xf32>
    %c0_2 = arith.constant 0 : index
    %c0_3 = arith.constant 0 : index
    %4 = vector.load %arg5[%c0_2, %c0_3] : memref<32x64xf32, #tpu.memory_space<vmem>>, vector<32x64xf32>
    %cst = arith.constant dense<0.000000e+00> : vector<8x64xf32>
    %5 = tpu.matmul %3, %4, %cst {dimension_numbers = #tpu.dot_dimension_numbers<[1], [0], [0], [1], [0, 0, 1, 1], [], []>} : vector<8x32xf32>, vector<32x64xf32>, vector<8x64xf32> -> vector<8x64xf32>
    %c0_4 = arith.constant 0 : index
    %c0_5 = arith.constant 0 : index
    %6 = vector.load %arg6[%c0_4, %c0_5] : memref<1x64xf32, #tpu.memory_space<vmem>>, vector<1x64xf32>
    %7 = vector.broadcast %6 : vector<1x64xf32> to vector<8x64xf32>
    %8 = arith.addf %5, %7 : vector<8x64xf32>
    %9 = arith.mulf %8, %8 : vector<8x64xf32>
    %10 = arith.mulf %8, %9 : vector<8x64xf32>
    %cst_6 = arith.constant 4.471500e-02 : f32
    %11 = vector.broadcast %cst_6 : f32 to vector<8x64xf32>
    %12 = arith.mulf %11, %10 : vector<8x64xf32>
    %13 = arith.addf %8, %12 : vector<8x64xf32>
    %cst_7 = arith.constant 0.797884583 : f32
    %14 = vector.broadcast %cst_7 : f32 to vector<8x64xf32>
    %15 = arith.mulf %14, %13 : vector<8x64xf32>
    %16 = math.tanh %15 : vector<8x64xf32>
    %cst_8 = arith.constant 1.000000e+00 : f32
    %17 = vector.broadcast %cst_8 : f32 to vector<8x64xf32>
    %18 = arith.addf %17, %16 : vector<8x64xf32>
    %cst_9 = arith.constant 5.000000e-01 : f32
    %19 = vector.broadcast %cst_9 : f32 to vector<8x64xf32>
    %20 = arith.mulf %19, %18 : vector<8x64xf32>
    %21 = arith.mulf %8, %20 : vector<8x64xf32>
    %c0_10 = arith.constant 0 : index
    %c0_11 = arith.constant 0 : index
    %22 = vector.load %arg9[%c0_10, %c0_11] : memref<8x32xf32, #tpu.memory_space<vmem>>, vector<8x32xf32>
    %c0_12 = arith.constant 0 : index
    %c0_13 = arith.constant 0 : index
    %23 = vector.load %arg7[%c0_12, %c0_13] : memref<64x32xf32, #tpu.memory_space<vmem>>, vector<64x32xf32>
    %cst_14 = arith.constant dense<0.000000e+00> : vector<8x32xf32>
    %24 = tpu.matmul %21, %23, %cst_14 {dimension_numbers = #tpu.dot_dimension_numbers<[1], [0], [0], [1], [0, 0, 1, 1], [], []>} : vector<8x64xf32>, vector<64x32xf32>, vector<8x32xf32> -> vector<8x32xf32>
    %25 = arith.addf %22, %24 : vector<8x32xf32>
    %c0_15 = arith.constant 0 : index
    %c0_16 = arith.constant 0 : index
    %26 = vector.load %arg9[%c0_15, %c0_16] : memref<8x32xf32, #tpu.memory_space<vmem>>, vector<8x32xf32>
    tpu.vector_store %arg9[%c0_15, %c0_16], %25 {strides = array<i32>} : memref<8x32xf32, #tpu.memory_space<vmem>>, vector<8x32xf32>,
    return
  }
  func.func @transform_0(%arg0: i32, %arg1: i32) -> (i32, i32) {
    %c0_i32 = arith.constant 0 : i32
    %c0_i32_0 = arith.constant 0 : i32
    return %arg0, %c0_i32 : i32, i32
  }
  func.func @transform_1(%arg0: i32, %arg1: i32) -> (i32, i32) {
    %c0_i32 = arith.constant 0 : i32
    %c0_i32_0 = arith.constant 0 : i32
    %c0_i32_1 = arith.constant 0 : i32
    return %c0_i32, %c0_i32_0 : i32, i32
  }
  func.func @transform_2(%arg0: i32, %arg1: i32) -> (i32, i32) {
    %c0_i32 = arith.constant 0 : i32
    %c0_i32_0 = arith.constant 0 : i32
    %c0_i32_1 = arith.constant 0 : i32
    return %c0_i32, %c0_i32_0 : i32, i32
  }
  func.func @transform_3(%arg0: i32, %arg1: i32) -> (i32, i32) {
    %c0_i32 = arith.constant 0 : i32
    %c0_i32_0 = arith.constant 0 : i32
    return %c0_i32, %arg1 : i32, i32
  }
  func.func @transform_4(%arg0: i32, %arg1: i32) -> (i32, i32) {
    %c0_i32 = arith.constant 0 : i32
    %c0_i32_0 = arith.constant 0 : i32
    return %c0_i32, %arg1 : i32, i32
  }
  func.func @transform_5(%arg0: i32, %arg1: i32) -> (i32, i32) {
    %c0_i32 = arith.constant 0 : i32
    %c0_i32_0 = arith.constant 0 : i32
    return %arg1, %c0_i32 : i32, i32
  }
  func.func @transform_6(%arg0: i32, %arg1: i32) -> (i32, i32) {
    %c0_i32 = arith.constant 0 : i32
    %c0_i32_0 = arith.constant 0 : i32
    %c0_i32_1 = arith.constant 0 : i32
    return %c0_i32, %c0_i32_0 : i32, i32
  }
  func.func @transform_7(%arg0: i32, %arg1: i32) -> (i32, i32) {
    %c0_i32 = arith.constant 0 : i32
    %c0_i32_0 = arith.constant 0 : i32
    return %arg0, %c0_i32 : i32, i32
  }
}

module attributes {stable_mosaic.version = 11 : i64} {
  func.func @_pool_attn_kernel(%arg0: i32, %arg1: i32, %arg2: memref<1x32xf32, #tpu.memory_space<vmem>>, %arg3: memref<1x4x32xf32, #tpu.memory_space<vmem>>, %arg4: memref<1x32xf32, #tpu.memory_space<vmem>>, %arg5: memref<1x32xf32, #tpu.memory_space<vmem>>, %arg6: memref<1x32x8xf32, #tpu.memory_space<vmem>>, %arg7: memref<1x1x8xf32, #tpu.memory_space<vmem>>, %arg8: memref<1x32x8xf32, #tpu.memory_space<vmem>>, %arg9: memref<1x1x8xf32, #tpu.memory_space<vmem>>, %arg10: memref<1x32x8xf32, #tpu.memory_space<vmem>>, %arg11: memref<1x1x8xf32, #tpu.memory_space<vmem>>, %arg12: memref<1x8x32xf32, #tpu.memory_space<vmem>>, %arg13: memref<1x32xf32, #tpu.memory_space<vmem>>, %arg14: memref<1x1x32xf32, #tpu.memory_space<vmem>>) attributes {dimension_semantics = [#tpu.dimension_semantics<parallel>, #tpu.dimension_semantics<arbitrary>], iteration_bounds = array<i64: 2, 4>, scalar_prefetch = 0 : i64, scratch_operands = 0 : i64, tpu.core_type = #tpu.core_type<tc>, window_params = [{pipeline_mode = #tpu.pipeline_mode<synchronous>, transform_indices = @transform_0, window_bounds = array<i64: 1, 32>}, {transform_indices = @transform_1, window_bounds = array<i64: 1, 4, 32>}, {pipeline_mode = #tpu.pipeline_mode<synchronous>, transform_indices = @transform_2, window_bounds = array<i64: 1, 32>}, {pipeline_mode = #tpu.pipeline_mode<synchronous>, transform_indices = @transform_3, window_bounds = array<i64: 1, 32>}, {transform_indices = @transform_4, window_bounds = array<i64: 1, 32, 8>}, {transform_indices = @transform_5, window_bounds = array<i64: 1, 1, 8>}, {transform_indices = @transform_6, window_bounds = array<i64: 1, 32, 8>}, {transform_indices = @transform_7, window_bounds = array<i64: 1, 1, 8>}, {transform_indices = @transform_8, window_bounds = array<i64: 1, 32, 8>}, {transform_indices = @transform_9, window_bounds = array<i64: 1, 1, 8>}, {transform_indices = @transform_10, window_bounds = array<i64: 1, 8, 32>}, {pipeline_mode = #tpu.pipeline_mode<synchronous>, transform_indices = @transform_11, window_bounds = array<i64: 1, 32>}, {transform_indices = @transform_12, window_bounds = array<i64: 1, 1, 32>}]} {
    %c0 = arith.constant 0 : index
    %c0_0 = arith.constant 0 : index
    %c0_1 = arith.constant 0 : index
    %0 = vector.load %arg3[%c0, %c0_0, %c0_1] : memref<1x4x32xf32, #tpu.memory_space<vmem>>, vector<1x4x32xf32>
    %1 = vector.shape_cast %0 : vector<1x4x32xf32> to vector<4x32xf32>
    %cst = arith.constant dense<0.000000e+00> : vector<4xf32>
    %2 = vector.multi_reduction <add>, %1, %cst [1] : vector<4x32xf32> to vector<4xf32>
    %3 = vector.shape_cast %2 : vector<4xf32> to vector<4x1xf32>
    %cst_2 = arith.constant 3.200000e+01 : f32
    %4 = vector.broadcast %cst_2 : f32 to vector<4x1xf32>
    %5 = arith.divf %3, %4 : vector<4x1xf32>
    %6 = vector.broadcast %5 : vector<4x1xf32> to vector<4x32xf32>
    %7 = arith.subf %1, %6 : vector<4x32xf32>
    %8 = arith.mulf %7, %7 : vector<4x32xf32>
    %cst_3 = arith.constant dense<0.000000e+00> : vector<4xf32>
    %9 = vector.multi_reduction <add>, %8, %cst_3 [1] : vector<4x32xf32> to vector<4xf32>
    %10 = vector.shape_cast %9 : vector<4xf32> to vector<4x1xf32>
    %cst_4 = arith.constant 3.200000e+01 : f32
    %11 = vector.broadcast %cst_4 : f32 to vector<4x1xf32>
    %12 = arith.divf %10, %11 : vector<4x1xf32>
    %cst_5 = arith.constant 9.99999997E-7 : f32
    %13 = vector.broadcast %cst_5 : f32 to vector<4x1xf32>
    %14 = arith.addf %12, %13 : vector<4x1xf32>
    %15 = math.rsqrt %14 : vector<4x1xf32>
    %16 = vector.broadcast %15 : vector<4x1xf32> to vector<4x32xf32>
    %17 = arith.mulf %7, %16 : vector<4x32xf32>
    %c0_6 = arith.constant 0 : index
    %c0_7 = arith.constant 0 : index
    %18 = vector.load %arg4[%c0_6, %c0_7] : memref<1x32xf32, #tpu.memory_space<vmem>>, vector<1x32xf32>
    %19 = vector.broadcast %18 : vector<1x32xf32> to vector<4x32xf32>
    %20 = arith.mulf %17, %19 : vector<4x32xf32>
    %c0_8 = arith.constant 0 : index
    %c0_9 = arith.constant 0 : index
    %21 = vector.load %arg5[%c0_8, %c0_9] : memref<1x32xf32, #tpu.memory_space<vmem>>, vector<1x32xf32>
    %22 = vector.broadcast %21 : vector<1x32xf32> to vector<4x32xf32>
    %23 = arith.addf %20, %22 : vector<4x32xf32>
    %c0_10 = arith.constant 0 : index
    %c0_11 = arith.constant 0 : index
    %24 = vector.load %arg2[%c0_10, %c0_11] : memref<1x32xf32, #tpu.memory_space<vmem>>, vector<1x32xf32>
    %c0_12 = arith.constant 0 : index
    %c0_13 = arith.constant 0 : index
    %c0_14 = arith.constant 0 : index
    %25 = vector.load %arg6[%c0_12, %c0_13, %c0_14] : memref<1x32x8xf32, #tpu.memory_space<vmem>>, vector<1x32x8xf32>
    %26 = vector.shape_cast %25 : vector<1x32x8xf32> to vector<32x8xf32>
    %cst_15 = arith.constant dense<0.000000e+00> : vector<1x8xf32>
    %27 = tpu.matmul %24, %26, %cst_15 {dimension_numbers = #tpu.dot_dimension_numbers<[1], [0], [0], [1], [0, 0, 1, 1], [], []>} : vector<1x32xf32>, vector<32x8xf32>, vector<1x8xf32> -> vector<1x8xf32>
    %c0_16 = arith.constant 0 : index
    %c0_17 = arith.constant 0 : index
    %c0_18 = arith.constant 0 : index
    %28 = vector.load %arg7[%c0_16, %c0_17, %c0_18] : memref<1x1x8xf32, #tpu.memory_space<vmem>>, vector<1x1x8xf32>
    %29 = vector.shape_cast %28 : vector<1x1x8xf32> to vector<1x8xf32>
    %30 = arith.addf %27, %29 : vector<1x8xf32>
    %c0_19 = arith.constant 0 : index
    %c0_20 = arith.constant 0 : index
    %c0_21 = arith.constant 0 : index
    %31 = vector.load %arg8[%c0_19, %c0_20, %c0_21] : memref<1x32x8xf32, #tpu.memory_space<vmem>>, vector<1x32x8xf32>
    %32 = vector.shape_cast %31 : vector<1x32x8xf32> to vector<32x8xf32>
    %cst_22 = arith.constant dense<0.000000e+00> : vector<4x8xf32>
    %33 = tpu.matmul %23, %32, %cst_22 {dimension_numbers = #tpu.dot_dimension_numbers<[1], [0], [0], [1], [0, 0, 1, 1], [], []>} : vector<4x32xf32>, vector<32x8xf32>, vector<4x8xf32> -> vector<4x8xf32>
    %c0_23 = arith.constant 0 : index
    %c0_24 = arith.constant 0 : index
    %c0_25 = arith.constant 0 : index
    %34 = vector.load %arg9[%c0_23, %c0_24, %c0_25] : memref<1x1x8xf32, #tpu.memory_space<vmem>>, vector<1x1x8xf32>
    %35 = vector.shape_cast %34 : vector<1x1x8xf32> to vector<1x8xf32>
    %36 = vector.broadcast %35 : vector<1x8xf32> to vector<4x8xf32>
    %37 = arith.addf %33, %36 : vector<4x8xf32>
    %c0_26 = arith.constant 0 : index
    %c0_27 = arith.constant 0 : index
    %c0_28 = arith.constant 0 : index
    %38 = vector.load %arg10[%c0_26, %c0_27, %c0_28] : memref<1x32x8xf32, #tpu.memory_space<vmem>>, vector<1x32x8xf32>
    %39 = vector.shape_cast %38 : vector<1x32x8xf32> to vector<32x8xf32>
    %cst_29 = arith.constant dense<0.000000e+00> : vector<4x8xf32>
    %40 = tpu.matmul %23, %39, %cst_29 {dimension_numbers = #tpu.dot_dimension_numbers<[1], [0], [0], [1], [0, 0, 1, 1], [], []>} : vector<4x32xf32>, vector<32x8xf32>, vector<4x8xf32> -> vector<4x8xf32>
    %c0_30 = arith.constant 0 : index
    %c0_31 = arith.constant 0 : index
    %c0_32 = arith.constant 0 : index
    %41 = vector.load %arg11[%c0_30, %c0_31, %c0_32] : memref<1x1x8xf32, #tpu.memory_space<vmem>>, vector<1x1x8xf32>
    %42 = vector.shape_cast %41 : vector<1x1x8xf32> to vector<1x8xf32>
    %43 = vector.broadcast %42 : vector<1x8xf32> to vector<4x8xf32>
    %44 = arith.addf %40, %43 : vector<4x8xf32>
    %cst_33 = arith.constant 0.353553385 : f32
    %45 = vector.broadcast %cst_33 : f32 to vector<1x8xf32>
    %46 = arith.mulf %30, %45 : vector<1x8xf32>
    %cst_34 = arith.constant dense<0.000000e+00> : vector<1x4xf32>
    %47 = tpu.matmul %46, %37, %cst_34 {dimension_numbers = #tpu.dot_dimension_numbers<[1], [1], [0], [0], [0, 0, 1, 0], [], []>} : vector<1x8xf32>, vector<4x8xf32>, vector<1x4xf32> -> vector<1x4xf32>
    %cst_35 = arith.constant dense<0xFF800000> : vector<1xf32>
    %48 = vector.multi_reduction <maximumf>, %47, %cst_35 [1] : vector<1x4xf32> to vector<1xf32>
    %49 = vector.shape_cast %48 : vector<1xf32> to vector<1x1xf32>
    %50 = vector.broadcast %49 : vector<1x1xf32> to vector<1x4xf32>
    %51 = arith.subf %47, %50 : vector<1x4xf32>
    %52 = math.exp %51 : vector<1x4xf32>
    %cst_36 = arith.constant dense<0.000000e+00> : vector<1xf32>
    %53 = vector.multi_reduction <add>, %52, %cst_36 [1] : vector<1x4xf32> to vector<1xf32>
    %54 = vector.shape_cast %53 : vector<1xf32> to vector<1x1xf32>
    %55 = tpu.reciprocal %54 {approx = true} : vector<1x1xf32> -> vector<1x1xf32>
    %56 = vector.broadcast %55 : vector<1x1xf32> to vector<1x4xf32>
    %57 = arith.mulf %52, %56 : vector<1x4xf32>
    %cst_37 = arith.constant dense<0.000000e+00> : vector<1x8xf32>
    %58 = tpu.matmul %57, %44, %cst_37 {dimension_numbers = #tpu.dot_dimension_numbers<[1], [0], [0], [1], [0, 0, 1, 1], [], []>} : vector<1x4xf32>, vector<4x8xf32>, vector<1x8xf32> -> vector<1x8xf32>
    %c0_38 = arith.constant 0 : index
    %c0_39 = arith.constant 0 : index
    %c0_40 = arith.constant 0 : index
    %59 = vector.load %arg12[%c0_38, %c0_39, %c0_40] : memref<1x8x32xf32, #tpu.memory_space<vmem>>, vector<1x8x32xf32>
    %60 = vector.shape_cast %59 : vector<1x8x32xf32> to vector<8x32xf32>
    %cst_41 = arith.constant dense<0.000000e+00> : vector<1x32xf32>
    %61 = tpu.matmul %58, %60, %cst_41 {dimension_numbers = #tpu.dot_dimension_numbers<[1], [0], [0], [1], [0, 0, 1, 1], [], []>} : vector<1x8xf32>, vector<8x32xf32>, vector<1x32xf32> -> vector<1x32xf32>
    %c0_i32 = arith.constant 0 : i32
    %62 = arith.cmpi eq, %arg1, %c0_i32 : i32
    %63 = arith.extui %62 : i1 to i32
    %c0_i32_42 = arith.constant 0 : i32
    %64 = arith.cmpi ne, %63, %c0_i32_42 : i32
    scf.if %64 {
      %c0_49 = arith.constant 0 : index
      %c0_50 = arith.constant 0 : index
      %71 = vector.load %arg13[%c0_49, %c0_50] : memref<1x32xf32, #tpu.memory_space<vmem>>, vector<1x32xf32>
      %c0_51 = arith.constant 0 : index
      %c0_52 = arith.constant 0 : index
      %c0_53 = arith.constant 0 : index
      %72 = vector.load %arg14[%c0_51, %c0_52, %c0_53] : memref<1x1x32xf32, #tpu.memory_space<vmem>>, vector<1x1x32xf32>
      %73 = vector.shape_cast %72 : vector<1x1x32xf32> to vector<1x32xf32>
      %74 = vector.shape_cast %71 : vector<1x32xf32> to vector<1x1x32xf32>
      tpu.vector_store %arg14[%c0_51, %c0_52, %c0_53], %74 {strides = array<i32>} : memref<1x1x32xf32, #tpu.memory_space<vmem>>, vector<1x1x32xf32>,
    } else {
    }
    %c0_43 = arith.constant 0 : index
    %c0_44 = arith.constant 0 : index
    %c0_45 = arith.constant 0 : index
    %65 = vector.load %arg14[%c0_43, %c0_44, %c0_45] : memref<1x1x32xf32, #tpu.memory_space<vmem>>, vector<1x1x32xf32>
    %66 = vector.shape_cast %65 : vector<1x1x32xf32> to vector<1x32xf32>
    %67 = arith.addf %66, %61 : vector<1x32xf32>
    %c0_46 = arith.constant 0 : index
    %c0_47 = arith.constant 0 : index
    %c0_48 = arith.constant 0 : index
    %68 = vector.load %arg14[%c0_46, %c0_47, %c0_48] : memref<1x1x32xf32, #tpu.memory_space<vmem>>, vector<1x1x32xf32>
    %69 = vector.shape_cast %68 : vector<1x1x32xf32> to vector<1x32xf32>
    %70 = vector.shape_cast %67 : vector<1x32xf32> to vector<1x1x32xf32>
    tpu.vector_store %arg14[%c0_46, %c0_47, %c0_48], %70 {strides = array<i32>} : memref<1x1x32xf32, #tpu.memory_space<vmem>>, vector<1x1x32xf32>,
    return
  }
  func.func @transform_0(%arg0: i32, %arg1: i32) -> (i32, i32) {
    %c0_i32 = arith.constant 0 : i32
    %c0_i32_0 = arith.constant 0 : i32
    %c0_i32_1 = arith.constant 0 : i32
    return %c0_i32, %c0_i32_0 : i32, i32
  }
  func.func @transform_1(%arg0: i32, %arg1: i32) -> (i32, i32, i32) {
    %c0_i32 = arith.constant 0 : i32
    %c0_i32_0 = arith.constant 0 : i32
    %c0_i32_1 = arith.constant 0 : i32
    return %arg0, %c0_i32, %c0_i32_0 : i32, i32, i32
  }
  func.func @transform_2(%arg0: i32, %arg1: i32) -> (i32, i32) {
    %c0_i32 = arith.constant 0 : i32
    %c0_i32_0 = arith.constant 0 : i32
    %c0_i32_1 = arith.constant 0 : i32
    return %c0_i32, %c0_i32_0 : i32, i32
  }
  func.func @transform_3(%arg0: i32, %arg1: i32) -> (i32, i32) {
    %c0_i32 = arith.constant 0 : i32
    %c0_i32_0 = arith.constant 0 : i32
    %c0_i32_1 = arith.constant 0 : i32
    return %c0_i32, %c0_i32_0 : i32, i32
  }
  func.func @transform_4(%arg0: i32, %arg1: i32) -> (i32, i32, i32) {
    %c0_i32 = arith.constant 0 : i32
    %c0_i32_0 = arith.constant 0 : i32
    %c0_i32_1 = arith.constant 0 : i32
    return %arg1, %c0_i32, %c0_i32_0 : i32, i32, i32
  }
  func.func @transform_5(%arg0: i32, %arg1: i32) -> (i32, i32, i32) {
    %c0_i32 = arith.constant 0 : i32
    %c0_i32_0 = arith.constant 0 : i32
    %c0_i32_1 = arith.constant 0 : i32
    return %arg1, %c0_i32, %c0_i32_0 : i32, i32, i32
  }
  func.func @transform_6(%arg0: i32, %arg1: i32) -> (i32, i32, i32) {
    %c0_i32 = arith.constant 0 : i32
    %c0_i32_0 = arith.constant 0 : i32
    %c0_i32_1 = arith.constant 0 : i32
    return %arg1, %c0_i32, %c0_i32_0 : i32, i32, i32
  }
  func.func @transform_7(%arg0: i32, %arg1: i32) -> (i32, i32, i32) {
    %c0_i32 = arith.constant 0 : i32
    %c0_i32_0 = arith.constant 0 : i32
    %c0_i32_1 = arith.constant 0 : i32
    return %arg1, %c0_i32, %c0_i32_0 : i32, i32, i32
  }
  func.func @transform_8(%arg0: i32, %arg1: i32) -> (i32, i32, i32) {
    %c0_i32 = arith.constant 0 : i32
    %c0_i32_0 = arith.constant 0 : i32
    %c0_i32_1 = arith.constant 0 : i32
    return %arg1, %c0_i32, %c0_i32_0 : i32, i32, i32
  }
  func.func @transform_9(%arg0: i32, %arg1: i32) -> (i32, i32, i32) {
    %c0_i32 = arith.constant 0 : i32
    %c0_i32_0 = arith.constant 0 : i32
    %c0_i32_1 = arith.constant 0 : i32
    return %arg1, %c0_i32, %c0_i32_0 : i32, i32, i32
  }
  func.func @transform_10(%arg0: i32, %arg1: i32) -> (i32, i32, i32) {
    %c0_i32 = arith.constant 0 : i32
    %c0_i32_0 = arith.constant 0 : i32
    %c0_i32_1 = arith.constant 0 : i32
    return %arg1, %c0_i32, %c0_i32_0 : i32, i32, i32
  }
  func.func @transform_11(%arg0: i32, %arg1: i32) -> (i32, i32) {
    %c0_i32 = arith.constant 0 : i32
    %c0_i32_0 = arith.constant 0 : i32
    %c0_i32_1 = arith.constant 0 : i32
    return %c0_i32, %c0_i32_0 : i32, i32
  }
  func.func @transform_12(%arg0: i32, %arg1: i32) -> (i32, i32, i32) {
    %c0_i32 = arith.constant 0 : i32
    %c0_i32_0 = arith.constant 0 : i32
    %c0_i32_1 = arith.constant 0 : i32
    return %arg0, %c0_i32, %c0_i32_0 : i32, i32, i32
  }
}

module attributes {stable_mosaic.version = 11 : i64} {
  func.func @_mlp_block_kernel(%arg0: i32, %arg1: i32, %arg2: memref<2x32xf32, #tpu.memory_space<vmem>>, %arg3: memref<1x32xf32, #tpu.memory_space<vmem>>, %arg4: memref<1x32xf32, #tpu.memory_space<vmem>>, %arg5: memref<32x64xf32, #tpu.memory_space<vmem>>, %arg6: memref<1x64xf32, #tpu.memory_space<vmem>>, %arg7: memref<64x32xf32, #tpu.memory_space<vmem>>, %arg8: memref<1x32xf32, #tpu.memory_space<vmem>>, %arg9: memref<2x32xf32, #tpu.memory_space<vmem>>, %arg10: memref<2x32xf32, #tpu.memory_space<vmem>>) attributes {dimension_semantics = [#tpu.dimension_semantics<parallel>, #tpu.dimension_semantics<arbitrary>], iteration_bounds = array<i64: 1, 1>, scalar_prefetch = 0 : i64, scratch_operands = 1 : i64, tpu.core_type = #tpu.core_type<tc>, window_params = [{transform_indices = @transform_0, window_bounds = array<i64: 2, 32>}, {pipeline_mode = #tpu.pipeline_mode<synchronous>, transform_indices = @transform_1, window_bounds = array<i64: 1, 32>}, {pipeline_mode = #tpu.pipeline_mode<synchronous>, transform_indices = @transform_2, window_bounds = array<i64: 1, 32>}, {transform_indices = @transform_3, window_bounds = array<i64: 32, 64>}, {transform_indices = @transform_4, window_bounds = array<i64: 1, 64>}, {transform_indices = @transform_5, window_bounds = array<i64: 64, 32>}, {pipeline_mode = #tpu.pipeline_mode<synchronous>, transform_indices = @transform_6, window_bounds = array<i64: 1, 32>}, {transform_indices = @transform_7, window_bounds = array<i64: 2, 32>}]} {
    %c0_i32 = arith.constant 0 : i32
    %0 = arith.cmpi eq, %arg1, %c0_i32 : i32
    %1 = arith.extui %0 : i1 to i32
    %c0_i32_0 = arith.constant 0 : i32
    %2 = arith.cmpi ne, %1, %c0_i32_0 : i32
    scf.if %2 {
      %c0_17 = arith.constant 0 : index
      %c0_18 = arith.constant 0 : index
      %27 = vector.load %arg2[%c0_17, %c0_18] : memref<2x32xf32, #tpu.memory_space<vmem>>, vector<2x32xf32>
      %cst_19 = arith.constant dense<0.000000e+00> : vector<2xf32>
      %28 = vector.multi_reduction <add>, %27, %cst_19 [1] : vector<2x32xf32> to vector<2xf32>
      %29 = vector.shape_cast %28 : vector<2xf32> to vector<2x1xf32>
      %cst_20 = arith.constant 3.200000e+01 : f32
      %30 = vector.broadcast %cst_20 : f32 to vector<2x1xf32>
      %31 = arith.divf %29, %30 : vector<2x1xf32>
      %32 = vector.broadcast %31 : vector<2x1xf32> to vector<2x32xf32>
      %33 = arith.subf %27, %32 : vector<2x32xf32>
      %34 = arith.mulf %33, %33 : vector<2x32xf32>
      %cst_21 = arith.constant dense<0.000000e+00> : vector<2xf32>
      %35 = vector.multi_reduction <add>, %34, %cst_21 [1] : vector<2x32xf32> to vector<2xf32>
      %36 = vector.shape_cast %35 : vector<2xf32> to vector<2x1xf32>
      %cst_22 = arith.constant 3.200000e+01 : f32
      %37 = vector.broadcast %cst_22 : f32 to vector<2x1xf32>
      %38 = arith.divf %36, %37 : vector<2x1xf32>
      %cst_23 = arith.constant 9.99999997E-7 : f32
      %39 = vector.broadcast %cst_23 : f32 to vector<2x1xf32>
      %40 = arith.addf %38, %39 : vector<2x1xf32>
      %41 = math.rsqrt %40 : vector<2x1xf32>
      %42 = vector.broadcast %41 : vector<2x1xf32> to vector<2x32xf32>
      %43 = arith.mulf %33, %42 : vector<2x32xf32>
      %c0_24 = arith.constant 0 : index
      %c0_25 = arith.constant 0 : index
      %44 = vector.load %arg3[%c0_24, %c0_25] : memref<1x32xf32, #tpu.memory_space<vmem>>, vector<1x32xf32>
      %45 = vector.broadcast %44 : vector<1x32xf32> to vector<2x32xf32>
      %46 = arith.mulf %43, %45 : vector<2x32xf32>
      %c0_26 = arith.constant 0 : index
      %c0_27 = arith.constant 0 : index
      %47 = vector.load %arg4[%c0_26, %c0_27] : memref<1x32xf32, #tpu.memory_space<vmem>>, vector<1x32xf32>
      %48 = vector.broadcast %47 : vector<1x32xf32> to vector<2x32xf32>
      %49 = arith.addf %46, %48 : vector<2x32xf32>
      %c0_28 = arith.constant 0 : index
      %c0_29 = arith.constant 0 : index
      %50 = vector.load %arg10[%c0_28, %c0_29] : memref<2x32xf32, #tpu.memory_space<vmem>>, vector<2x32xf32>
      tpu.vector_store %arg10[%c0_28, %c0_29], %49 {strides = array<i32>} : memref<2x32xf32, #tpu.memory_space<vmem>>, vector<2x32xf32>,
      %c0_30 = arith.constant 0 : index
      %c0_31 = arith.constant 0 : index
      %51 = vector.load %arg8[%c0_30, %c0_31] : memref<1x32xf32, #tpu.memory_space<vmem>>, vector<1x32xf32>
      %52 = vector.broadcast %51 : vector<1x32xf32> to vector<2x32xf32>
      %53 = arith.addf %27, %52 : vector<2x32xf32>
      %c0_32 = arith.constant 0 : index
      %c0_33 = arith.constant 0 : index
      %54 = vector.load %arg9[%c0_32, %c0_33] : memref<2x32xf32, #tpu.memory_space<vmem>>, vector<2x32xf32>
      tpu.vector_store %arg9[%c0_32, %c0_33], %53 {strides = array<i32>} : memref<2x32xf32, #tpu.memory_space<vmem>>, vector<2x32xf32>,
    } else {
    }
    %c0 = arith.constant 0 : index
    %c0_1 = arith.constant 0 : index
    %3 = vector.load %arg10[%c0, %c0_1] : memref<2x32xf32, #tpu.memory_space<vmem>>, vector<2x32xf32>
    %c0_2 = arith.constant 0 : index
    %c0_3 = arith.constant 0 : index
    %4 = vector.load %arg5[%c0_2, %c0_3] : memref<32x64xf32, #tpu.memory_space<vmem>>, vector<32x64xf32>
    %cst = arith.constant dense<0.000000e+00> : vector<2x64xf32>
    %5 = tpu.matmul %3, %4, %cst {dimension_numbers = #tpu.dot_dimension_numbers<[1], [0], [0], [1], [0, 0, 1, 1], [], []>} : vector<2x32xf32>, vector<32x64xf32>, vector<2x64xf32> -> vector<2x64xf32>
    %c0_4 = arith.constant 0 : index
    %c0_5 = arith.constant 0 : index
    %6 = vector.load %arg6[%c0_4, %c0_5] : memref<1x64xf32, #tpu.memory_space<vmem>>, vector<1x64xf32>
    %7 = vector.broadcast %6 : vector<1x64xf32> to vector<2x64xf32>
    %8 = arith.addf %5, %7 : vector<2x64xf32>
    %9 = arith.mulf %8, %8 : vector<2x64xf32>
    %10 = arith.mulf %8, %9 : vector<2x64xf32>
    %cst_6 = arith.constant 4.471500e-02 : f32
    %11 = vector.broadcast %cst_6 : f32 to vector<2x64xf32>
    %12 = arith.mulf %11, %10 : vector<2x64xf32>
    %13 = arith.addf %8, %12 : vector<2x64xf32>
    %cst_7 = arith.constant 0.797884583 : f32
    %14 = vector.broadcast %cst_7 : f32 to vector<2x64xf32>
    %15 = arith.mulf %14, %13 : vector<2x64xf32>
    %16 = math.tanh %15 : vector<2x64xf32>
    %cst_8 = arith.constant 1.000000e+00 : f32
    %17 = vector.broadcast %cst_8 : f32 to vector<2x64xf32>
    %18 = arith.addf %17, %16 : vector<2x64xf32>
    %cst_9 = arith.constant 5.000000e-01 : f32
    %19 = vector.broadcast %cst_9 : f32 to vector<2x64xf32>
    %20 = arith.mulf %19, %18 : vector<2x64xf32>
    %21 = arith.mulf %8, %20 : vector<2x64xf32>
    %c0_10 = arith.constant 0 : index
    %c0_11 = arith.constant 0 : index
    %22 = vector.load %arg9[%c0_10, %c0_11] : memref<2x32xf32, #tpu.memory_space<vmem>>, vector<2x32xf32>
    %c0_12 = arith.constant 0 : index
    %c0_13 = arith.constant 0 : index
    %23 = vector.load %arg7[%c0_12, %c0_13] : memref<64x32xf32, #tpu.memory_space<vmem>>, vector<64x32xf32>
    %cst_14 = arith.constant dense<0.000000e+00> : vector<2x32xf32>
    %24 = tpu.matmul %21, %23, %cst_14 {dimension_numbers = #tpu.dot_dimension_numbers<[1], [0], [0], [1], [0, 0, 1, 1], [], []>} : vector<2x64xf32>, vector<64x32xf32>, vector<2x32xf32> -> vector<2x32xf32>
    %25 = arith.addf %22, %24 : vector<2x32xf32>
    %c0_15 = arith.constant 0 : index
    %c0_16 = arith.constant 0 : index
    %26 = vector.load %arg9[%c0_15, %c0_16] : memref<2x32xf32, #tpu.memory_space<vmem>>, vector<2x32xf32>
    tpu.vector_store %arg9[%c0_15, %c0_16], %25 {strides = array<i32>} : memref<2x32xf32, #tpu.memory_space<vmem>>, vector<2x32xf32>,
    return
  }
  func.func @transform_0(%arg0: i32, %arg1: i32) -> (i32, i32) {
    %c0_i32 = arith.constant 0 : i32
    %c0_i32_0 = arith.constant 0 : i32
    return %arg0, %c0_i32 : i32, i32
  }
  func.func @transform_1(%arg0: i32, %arg1: i32) -> (i32, i32) {
    %c0_i32 = arith.constant 0 : i32
    %c0_i32_0 = arith.constant 0 : i32
    %c0_i32_1 = arith.constant 0 : i32
    return %c0_i32, %c0_i32_0 : i32, i32
  }
  func.func @transform_2(%arg0: i32, %arg1: i32) -> (i32, i32) {
    %c0_i32 = arith.constant 0 : i32
    %c0_i32_0 = arith.constant 0 : i32
    %c0_i32_1 = arith.constant 0 : i32
    return %c0_i32, %c0_i32_0 : i32, i32
  }
  func.func @transform_3(%arg0: i32, %arg1: i32) -> (i32, i32) {
    %c0_i32 = arith.constant 0 : i32
    %c0_i32_0 = arith.constant 0 : i32
    return %c0_i32, %arg1 : i32, i32
  }
  func.func @transform_4(%arg0: i32, %arg1: i32) -> (i32, i32) {
    %c0_i32 = arith.constant 0 : i32
    %c0_i32_0 = arith.constant 0 : i32
    return %c0_i32, %arg1 : i32, i32
  }
  func.func @transform_5(%arg0: i32, %arg1: i32) -> (i32, i32) {
    %c0_i32 = arith.constant 0 : i32
    %c0_i32_0 = arith.constant 0 : i32
    return %arg1, %c0_i32 : i32, i32
  }
  func.func @transform_6(%arg0: i32, %arg1: i32) -> (i32, i32) {
    %c0_i32 = arith.constant 0 : i32
    %c0_i32_0 = arith.constant 0 : i32
    %c0_i32_1 = arith.constant 0 : i32
    return %c0_i32, %c0_i32_0 : i32, i32
  }
  func.func @transform_7(%arg0: i32, %arg1: i32) -> (i32, i32) {
    %c0_i32 = arith.constant 0 : i32
    %c0_i32_0 = arith.constant 0 : i32
    return %arg0, %c0_i32 : i32, i32
  }
}

module attributes {stable_mosaic.version = 11 : i64} {
  func.func @_linear_kernel(%arg0: i32, %arg1: memref<2x32xf32, #tpu.memory_space<vmem>>, %arg2: memref<32x16xf32, #tpu.memory_space<vmem>>, %arg3: memref<1x16xf32, #tpu.memory_space<vmem>>, %arg4: memref<2x16xf32, #tpu.memory_space<vmem>>) attributes {dimension_semantics = [#tpu.dimension_semantics<parallel>], iteration_bounds = array<i64: 1>, scalar_prefetch = 0 : i64, scratch_operands = 0 : i64, tpu.core_type = #tpu.core_type<tc>, window_params = [{transform_indices = @transform_0, window_bounds = array<i64: 2, 32>}, {pipeline_mode = #tpu.pipeline_mode<synchronous>, transform_indices = @transform_1, window_bounds = array<i64: 32, 16>}, {pipeline_mode = #tpu.pipeline_mode<synchronous>, transform_indices = @transform_2, window_bounds = array<i64: 1, 16>}, {transform_indices = @transform_3, window_bounds = array<i64: 2, 16>}]} {
    %c0 = arith.constant 0 : index
    %c0_0 = arith.constant 0 : index
    %0 = vector.load %arg1[%c0, %c0_0] : memref<2x32xf32, #tpu.memory_space<vmem>>, vector<2x32xf32>
    %c0_1 = arith.constant 0 : index
    %c0_2 = arith.constant 0 : index
    %1 = vector.load %arg2[%c0_1, %c0_2] : memref<32x16xf32, #tpu.memory_space<vmem>>, vector<32x16xf32>
    %cst = arith.constant dense<0.000000e+00> : vector<2x16xf32>
    %2 = tpu.matmul %0, %1, %cst {dimension_numbers = #tpu.dot_dimension_numbers<[1], [0], [0], [1], [0, 0, 1, 1], [], []>} : vector<2x32xf32>, vector<32x16xf32>, vector<2x16xf32> -> vector<2x16xf32>
    %c0_3 = arith.constant 0 : index
    %c0_4 = arith.constant 0 : index
    %3 = vector.load %arg3[%c0_3, %c0_4] : memref<1x16xf32, #tpu.memory_space<vmem>>, vector<1x16xf32>
    %4 = vector.broadcast %3 : vector<1x16xf32> to vector<2x16xf32>
    %5 = arith.addf %2, %4 : vector<2x16xf32>
    %c0_5 = arith.constant 0 : index
    %c0_6 = arith.constant 0 : index
    %6 = vector.load %arg4[%c0_5, %c0_6] : memref<2x16xf32, #tpu.memory_space<vmem>>, vector<2x16xf32>
    tpu.vector_store %arg4[%c0_5, %c0_6], %5 {strides = array<i32>} : memref<2x16xf32, #tpu.memory_space<vmem>>, vector<2x16xf32>,
    return
  }
  func.func @transform_0(%arg0: i32) -> (i32, i32) {
    %c0_i32 = arith.constant 0 : i32
    %c0_i32_0 = arith.constant 0 : i32
    return %arg0, %c0_i32 : i32, i32
  }
  func.func @transform_1(%arg0: i32) -> (i32, i32) {
    %c0_i32 = arith.constant 0 : i32
    %c0_i32_0 = arith.constant 0 : i32
    %c0_i32_1 = arith.constant 0 : i32
    return %c0_i32, %c0_i32_0 : i32, i32
  }
  func.func @transform_2(%arg0: i32) -> (i32, i32) {
    %c0_i32 = arith.constant 0 : i32
    %c0_i32_0 = arith.constant 0 : i32
    %c0_i32_1 = arith.constant 0 : i32
    return %c0_i32, %c0_i32_0 : i32, i32
  }
  func.func @transform_3(%arg0: i32) -> (i32, i32) {
    %c0_i32 = arith.constant 0 : i32
    %c0_i32_0 = arith.constant 0 : i32
    return %arg0, %c0_i32 : i32, i32
  }
}

</mosaic_0001>

<llo_original>
// kernel: siglip_with_pooling_head.8
$region0: #{siglip_with_pooling_head.8}
  #allocation0 [shape = 'u32[]', space=smem, size = 0x4, offset = 0x4, fixed_abs, tag = 'smem constant byte address 0x4 - core index']
  #allocation1 [shape = 'u32[72,128]{1,0:T(1,128)}', space=vmem, size = 0x9000, scoped, tag = 'internal scratch']
  %s0 = inlined_call_operand.vmem [shape: f32[2,4,192], index: 0, kind: input, shape index: {}]
  %s1 = inlined_call_operand.vmem [shape: f32[192,32], index: 1, kind: input, shape index: {}]
  %s2 = inlined_call_operand.vmem [shape: f32[1,32], index: 2, kind: input, shape index: {}]
  %s3 = inlined_call_operand.vmem [shape: f32[4,32], index: 3, kind: input, shape index: {}]
  %s4 = inlined_call_operand.vmem [shape: f32[2,4,32], index: 4, kind: output, shape index: {}]
  %s5 = sld [smem:[#allocation0]]
  $region49: #{siglip_with_pooling_head.8} parent=0
    _
  %s7 = ssub.s32 1, %s5
  %s8 = scalar_select 0, %s7, %s5
  loop: start=0, step=1, limit=4
  $region2: #{siglip_with_pooling_head.8} parent=0 // loop_pre_header
    _
  $region3: #{siglip_with_pooling_head.8} parent=0 // loop_header
    %s10 = sphi 0, %s14
    %p11 = scmp.ge.s32.totalorder %s10, 4
    %s20 = sphi 0, %s22
    %s23 = sphi 0, %s20
    %s24 = sphi 0, %s23
    %s40 = sphi 0, %s24
    %s44 = sphi 0, %s44
    %s46 = sphi 0, %s44
    %s47 = sphi 0, %s46
    %s61 = sphi 0, %s47
    %s65 = sphi 0, %s65
    %s67 = sphi 0, %s65
    %s68 = sphi 0, %s67
    %s82 = sphi 0, %s68
    %s86 = sphi 0, %s86
    %s88 = sphi 0, %s86
    %s89 = sphi 0, %s88
    %s103 = sphi 0, %s89
    %s109 = sphi 0, %s111
    %s112 = sphi 0, %s109
    %s113 = sphi 0, %s112
    %s129 = sphi 0, %s113
  $region4: #{siglip_with_pooling_head.8} parent=0 // loop_header_branch
    %13 = sbr.rel (%p11) target = $region8
  $region5: #{siglip_with_pooling_head.8} parent=0 // loop_body
    %s15 = ssub.s32 %s10, 1
    %s16 = ssub.s32 %s10, 2
    %s17 = sadd.s32 %s10, 1
    %s18 = ssub.s32 %s10, %s17
    %p19 = scmp.eq.s32.totalorder %s18, 0
    %s21 = sadd.s32 %s20, 1
    %s22 = scalar_select %p19, %s20, %s21
    %p25 = pneg %p19
    %p26 = scmp.eq.s32.totalorder %s10, 1
    %p27 = por %p25, %p26
    %p28 = scmp.ne.s32.totalorder %s20, %s23
    %p29 = scmp.eq.s32.totalorder %s10, 0
    %p30 = por %p28, %p29
    %p31 = scmp.ne.s32.totalorder %s20, %s23
    %p32 = scmp.eq.s32.totalorder %s15, 1
    %p33 = por %p31, %p32
    %p34 = scmp.ne.s32.totalorder %s23, %s24
    %p35 = scmp.eq.s32.totalorder %s15, 0
    %p36 = por %p34, %p35
    %p37 = scmp.ne.s32.totalorder %s23, %s24
    %p38 = scmp.eq.s32.totalorder %s16, 1
    %p39 = por %p37, %p38
    %p41 = scmp.ne.s32.totalorder %s24, %s40
    %p42 = scmp.eq.s32.totalorder %s16, 0
    %p43 = por %p41, %p42
    %s45 = sadd.s32 %s44, 1
    %p48 = scmp.eq.s32.totalorder %s10, 1
    %p49 = scmp.ne.s32.totalorder %s44, %s46
    %p50 = scmp.eq.s32.totalorder %s10, 0
    %p51 = por %p49, %p50
    %p52 = scmp.ne.s32.totalorder %s44, %s46
    %p53 = scmp.eq.s32.totalorder %s15, 1
    %p54 = por %p52, %p53
    %p55 = scmp.ne.s32.totalorder %s46, %s47
    %p56 = scmp.eq.s32.totalorder %s15, 0
    %p57 = por %p55, %p56
    %p58 = scmp.ne.s32.totalorder %s46, %s47
    %p59 = scmp.eq.s32.totalorder %s16, 1
    %p60 = por %p58, %p59
    %p62 = scmp.ne.s32.totalorder %s47, %s61
    %p63 = scmp.eq.s32.totalorder %s16, 0
    %p64 = por %p62, %p63
    %s66 = sadd.s32 %s65, 1
    %p69 = scmp.eq.s32.totalorder %s10, 1
    %p70 = scmp.ne.s32.totalorder %s65, %s67
    %p71 = scmp.eq.s32.totalorder %s10, 0
    %p72 = por %p70, %p71
    %p73 = scmp.ne.s32.totalorder %s65, %s67
    %p74 = scmp.eq.s32.totalorder %s15, 1
    %p75 = por %p73, %p74
    %p76 = scmp.ne.s32.totalorder %s67, %s68
    %p77 = scmp.eq.s32.totalorder %s15, 0
    %p78 = por %p76, %p77
    %p79 = scmp.ne.s32.totalorder %s67, %s68
    %p80 = scmp.eq.s32.totalorder %s16, 1
    %p81 = por %p79, %p80
    %p83 = scmp.ne.s32.totalorder %s68, %s82
    %p84 = scmp.eq.s32.totalorder %s16, 0
    %p85 = por %p83, %p84
    %s87 = sadd.s32 %s86, 1
    %p90 = scmp.eq.s32.totalorder %s10, 1
    %p91 = scmp.ne.s32.totalorder %s86, %s88
    %p92 = scmp.eq.s32.totalorder %s10, 0
    %p93 = por %p91, %p92
    %p94 = scmp.ne.s32.totalorder %s86, %s88
    %p95 = scmp.eq.s32.totalorder %s15, 1
    %p96 = por %p94, %p95
    %p97 = scmp.ne.s32.totalorder %s88, %s89
    %p98 = scmp.eq.s32.totalorder %s15, 0
    %p99 = por %p97, %p98
    %p100 = scmp.ne.s32.totalorder %s88, %s89
    %p101 = scmp.eq.s32.totalorder %s16, 1
    %p102 = por %p100, %p101
    %p104 = scmp.ne.s32.totalorder %s89, %s103
    %p105 = scmp.eq.s32.totalorder %s16, 0
    %p106 = por %p104, %p105
    %s107 = ssub.s32 %s10, %s17
    %p108 = scmp.eq.s32.totalorder %s107, 0
    %s110 = sadd.s32 %s109, 1
    %s111 = scalar_select %p108, %s109, %s110
    %p114 = pneg %p108
    %p115 = scmp.eq.s32.totalorder %s10, 1
    %p116 = por %p114, %p115
    %p117 = scmp.ne.s32.totalorder %s109, %s112
    %p118 = scmp.eq.s32.totalorder %s10, 0
    %p119 = por %p117, %p118
    %p120 = scmp.ne.s32.totalorder %s109, %s112
    %p121 = scmp.eq.s32.totalorder %s15, 1
    %p122 = por %p120, %p121
    %p123 = scmp.ne.s32.totalorder %s112, %s113
    %p124 = scmp.eq.s32.totalorder %s15, 0
    %p125 = por %p123, %p124
    %p126 = scmp.ne.s32.totalorder %s112, %s113
    %p127 = scmp.eq.s32.totalorder %s16, 1
    %p128 = por %p126, %p127
    %p130 = scmp.ne.s32.totalorder %s113, %s129
    %p131 = scmp.eq.s32.totalorder %s16, 0
    %p132 = por %p130, %p131
    %p133 = scmp.le.s32.totalorder 1, %s10
    %p134 = scmp.lt.s32.totalorder %s10, 3
    %p135 = pnand %p133, %p134
    %p136 = pneg %p135
    // Predicated region
    $region9: #{siglip_with_pooling_head.8} parent=5 // pred_check
      _
    $region10: #{siglip_with_pooling_head.8} parent=5 // pred_check_branch
      %138 = sbr.rel (%p135) target = $region12
    $region11: #{siglip_with_pooling_head.8} parent=5 // pred_region
      %s139 = ssub.s32 %s10, 1
      // Predicated region
      $region13: #{siglip_with_pooling_head.8} parent=11 // pred_check
        %p140 = pneg %p57
      $region14: #{siglip_with_pooling_head.8} parent=11 // pred_check_branch
        %142 = sbr.rel (%p140) target = $region16
      $region15: #{siglip_with_pooling_head.8} parent=11 // pred_region
        _
      $region16: #{siglip_with_pooling_head.8} parent=11 // pred_fallthru
        _
      // Predicated region
      $region17: #{siglip_with_pooling_head.8} parent=11 // pred_check
        %p143 = pneg %p78
      $region18: #{siglip_with_pooling_head.8} parent=11 // pred_check_branch
        %145 = sbr.rel (%p143) target = $region20
      $region19: #{siglip_with_pooling_head.8} parent=11 // pred_region
        _
      $region20: #{siglip_with_pooling_head.8} parent=11 // pred_fallthru
        _
      // Predicated region
      $region21: #{siglip_with_pooling_head.8} parent=11 // pred_check
        %p146 = pneg %p99
      $region22: #{siglip_with_pooling_head.8} parent=11 // pred_check_branch
        %148 = sbr.rel (%p146) target = $region24
      $region23: #{siglip_with_pooling_head.8} parent=11 // pred_region
        _
      $region24: #{siglip_with_pooling_head.8} parent=11 // pred_fallthru
        _
    $region12: #{siglip_with_pooling_head.8} parent=5 // pred_fallthru
      _
    %p149 = scmp.lt.s32.totalorder %s10, 2
    // Predicated region
    $region25: #{siglip_with_pooling_head.8} parent=5 // pred_check
      %p150 = pneg %p149
    $region26: #{siglip_with_pooling_head.8} parent=5 // pred_check_branch
      %152 = sbr.rel (%p150) target = $region28
    $region27: #{siglip_with_pooling_head.8} parent=5 // pred_region
      // Predicated region
      $region29: #{siglip_with_pooling_head.8} parent=27 // pred_check
        %p153 = pneg %p30
      $region30: #{siglip_with_pooling_head.8} parent=27 // pred_check_branch
        %155 = sbr.rel (%p153) target = $region32
      $region31: #{siglip_with_pooling_head.8} parent=27 // pred_region
        %p156 = scmp.lt.s32.totalorder %s10, 1
        %s157 = scalar_select %p156, %s10, 1
        %s158 = smul.addr %s157, 2
        %s159 = smul.addr %s158, 4
        %s160 = scalar_lea.vmem %s0, %s159
      $region32: #{siglip_with_pooling_head.8} parent=27 // pred_fallthru
        _
    $region28: #{siglip_with_pooling_head.8} parent=5 // pred_fallthru
      _
    %p161 = scmp.le.s32.totalorder 1, %s10
    %p162 = scmp.lt.s32.totalorder %s10, 3
    %p163 = pnand %p161, %p162
    %p164 = pneg %p163
    // Predicated region
    $region33: #{siglip_with_pooling_head.8} parent=5 // pred_check
      _
    $region34: #{siglip_with_pooling_head.8} parent=5 // pred_check_branch
      %166 = sbr.rel (%p163) target = $region36
    $region35: #{siglip_with_pooling_head.8} parent=5 // pred_region
      %s167 = ssub.s32 %s10, 1
      %p168 = scmp.lt.s32.totalorder %s15, 1
      %s169 = scalar_select %p168, %s15, 1
      %s170 = smul.addr %s169, 2
      %s171 = smul.addr %s170, 4
      %s172 = scalar_lea.vmem %s0, %s171
      %p173 = pneg %p36
      %p174 = pneg %p33
      %p175 = pneg %p57
      %p176 = pneg %p54
      %p177 = pneg %p78
      %p178 = pneg %p75
      %p179 = pneg %p99
      %p180 = pneg %p96
      %p181 = pneg %p125
      %p182 = pneg %p122
      %p183 = scmp.lt.s32.totalorder %s15, 1
      %s184 = scalar_select %p183, %s15, 1
      %s185 = smul.addr %s184, 4
      %s186 = scalar_lea.vmem %s4, %s185
      %p187 = scmp.lt.s32.totalorder %s15, 1
      %s188 = scalar_select %p187, %s15, 1
      %s189 = smul.addr %s188, 2
      %s190 = smul.addr %s189, 4
      %s191 = scalar_lea.vmem %s0, %s190
      %p192 = scmp.lt.s32.totalorder %s15, 1
      %s193 = scalar_select %p192, %s15, 1
      %s194 = smul.addr %s193, 4
      %s195 = scalar_lea.vmem %s4, %s194
      %v196 = vld [vmem:[%s191] sm:$0xff]
      %v197 = vld [vmem:[%s1] sm:$0xff]
      %v198 = vld [vmem:[%s1 + $0x8] sm:$0xff]
      %v199 = vld [vmem:[%s1 + $0x10] sm:$0xff]
      %v200 = vld [vmem:[%s1 + $0x18] sm:$0xff]
      %v201 = vld [vmem:[%s1 + $0x20] sm:$0xff]
      %v202 = vld [vmem:[%s1 + $0x28] sm:$0xff]
      %v203 = vld [vmem:[%s1 + $0x30] sm:$0xff]
      %v204 = vld [vmem:[%s1 + $0x38] sm:$0xff]
      %v205 = vld [vmem:[%s1 + $0x40] sm:$0xff]
      %v206 = vld [vmem:[%s1 + $0x48] sm:$0xff]
      %v207 = vld [vmem:[%s1 + $0x50] sm:$0xff]
      %v208 = vld [vmem:[%s1 + $0x58] sm:$0xff]
      %v209 = vld [vmem:[%s1 + $0x60] sm:$0xff]
      %v210 = vld [vmem:[%s1 + $0x68] sm:$0xff]
      %v211 = vld [vmem:[%s1 + $0x70] sm:$0xff]
      %v212 = vld [vmem:[%s1 + $0x78] sm:$0xff]
      %v213 = vld [vmem:[%s1 + $0x80] sm:$0xff]
      %v214 = vld [vmem:[%s1 + $0x88] sm:$0xff]
      %v215 = vld [vmem:[%s1 + $0x90] sm:$0xff]
      %v216 = vld [vmem:[%s1 + $0x98] sm:$0xff]
      %v217 = vld [vmem:[%s1 + $0xa0] sm:$0xff]
      %v218 = vld [vmem:[%s1 + $0xa8] sm:$0xff]
      %v219 = vld [vmem:[%s1 + $0xb0] sm:$0xff]
      %v220 = vld [vmem:[%s1 + $0xb8] sm:$0xff]
      %v221 = vld [vmem:[%s2] sm:$0x1]
      %v223 = vperm.slane %v221, 0
      %226 = vst [vmem:[#allocation1] ss:$2 sm:$0xff] %v196
      %v227 = vld.sshfl [vmem:[#allocation1] sm:$0xff pattern:$0x75316420]
      %v228 = vld.sshfl [vmem:[#allocation1 + $0x8] sm:$0xff pattern:$0x75316420]
      %vm230 = vcmask 523264
      %v231 = vsel %vm230, %v228, 0
      %233 = vmatpush.msra.mxu0 %v212
      %234 = vmatpush.msra.mxu0 %v211
      %235 = vmatpush.msra.mxu0 %v210
      %236 = vmatpush.msra.mxu0 %v209
      %237 = vmatpush.msra.mxu0 %v208
      %238 = vmatpush.msra.mxu0 %v207
      %239 = vmatpush.msra.mxu0 %v206
      %240 = vmatpush.msra.mxu0 %v205
      %241 = vmatpush.msra.mxu0 %v204
      %242 = vmatpush.msra.mxu0 %v203
      %243 = vmatpush.msra.mxu0 %v202
      %244 = vmatpush.msra.mxu0 %v201
      %245 = vmatpush.msra.mxu0 %v200
      %246 = vmatpush.msra.mxu0 %v199
      %247 = vmatpush.msra.mxu0 %v198
      %248 = vmatpush.msra.mxu0 %v197
      %249 = vmatmul.f32.gmra.mxu0 %v227
      %v250 = vpop.f32.mrf.mxu0
      %v251 = vadd.f32 %v223, %v250
      %252 = vdwg.mxu0
      %253 = vmatpush.msra.mxu0 0.0
      %254 = vmatpush.msra.mxu0 0.0
      %255 = vmatpush.msra.mxu0 0.0
      %256 = vmatpush.msra.mxu0 0.0
      %257 = vmatpush.msra.mxu0 0.0
      %258 = vmatpush.msra.mxu0 0.0
      %259 = vmatpush.msra.mxu0 0.0
      %260 = vmatpush.msra.mxu0 0.0
      %261 = vmatpush.msra.mxu0 %v220
      %262 = vmatpush.msra.mxu0 %v219
      %263 = vmatpush.msra.mxu0 %v218
      %264 = vmatpush.msra.mxu0 %v217
      %265 = vmatpush.msra.mxu0 %v216
      %266 = vmatpush.msra.mxu0 %v215
      %267 = vmatpush.msra.mxu0 %v214
      %268 = vmatpush.msra.mxu0 %v213
      %269 = vmatmul.f32.gmra.mxu0 %v231
      %v270 = vpop.f32.mrf.mxu0
      %v271 = vadd.f32 %v251, %v270
      %272 = vdwg.mxu0
      %v273 = vld [vmem:[%s3] sm:$0xf]
      %v274 = vadd.f32 %v271, %v273
      %vm275 = vcmask 257024
      %276 = vst.msk [vmem:[%s195] sm:$0xf] %vm275, %v274
      %p277 = scmp.lt.s32.totalorder %s15, 1
      %s278 = scalar_select %p277, %s15, 1
      %s279 = smul.addr %s278, 4
      %s280 = scalar_lea.vmem %s4, %s279
      // Predicated region
      $region37: #{siglip_with_pooling_head.8} parent=35 // pred_check
        %p281 = pneg %p122
      $region38: #{siglip_with_pooling_head.8} parent=35 // pred_check_branch
        %283 = sbr.rel (%p281) target = $region40
      $region39: #{siglip_with_pooling_head.8} parent=35 // pred_region
        _
      $region40: #{siglip_with_pooling_head.8} parent=35 // pred_fallthru
        _
    $region36: #{siglip_with_pooling_head.8} parent=5 // pred_fallthru
      _
    %p284 = scmp.le.s32.totalorder 2, %s10
    // Predicated region
    $region41: #{siglip_with_pooling_head.8} parent=5 // pred_check
      %p285 = pneg %p284
    $region42: #{siglip_with_pooling_head.8} parent=5 // pred_check_branch
      %287 = sbr.rel (%p285) target = $region44
    $region43: #{siglip_with_pooling_head.8} parent=5 // pred_region
      %s288 = ssub.s32 %s10, 2
      // Predicated region
      $region45: #{siglip_with_pooling_head.8} parent=43 // pred_check
        %p289 = pneg %p128
      $region46: #{siglip_with_pooling_head.8} parent=43 // pred_check_branch
        %291 = sbr.rel (%p289) target = $region48
      $region47: #{siglip_with_pooling_head.8} parent=43 // pred_region
        %p292 = scmp.lt.s32.totalorder %s16, 1
        %s293 = scalar_select %p292, %s16, 1
        %s294 = smul.addr %s293, 4
        %s295 = scalar_lea.vmem %s4, %s294
      $region48: #{siglip_with_pooling_head.8} parent=43 // pred_fallthru
        _
    $region44: #{siglip_with_pooling_head.8} parent=5 // pred_fallthru
      _
  $region6: #{siglip_with_pooling_head.8} parent=0 // loop_footer
    %s14 = sadd.s32 1, %s10
  $region7: #{siglip_with_pooling_head.8} parent=0 // loop_footer_branch
    %9 = sbr.rel target = $region3
  $region8: #{siglip_with_pooling_head.8} parent=0 // loop_exit
    _

// kernel: siglip_with_pooling_head.10
$region0: #{siglip_with_pooling_head.10}
  #allocation0 [shape = 'u32[]', space=smem, size = 0x4, offset = 0x4, fixed_abs, tag = 'smem constant byte address 0x4 - core index']
  #allocation1 [shape = 'u32[72,128]{1,0:T(1,128)}', space=vmem, size = 0x9000, scoped, tag = 'internal scratch']
  #allocation2 [shape = 'f32[8,32]{1,0:T(8,128)}', space=vmem, size = 0x1000, scoped, tag = 'scratch operand']
  %s0 = inlined_call_operand.vmem [shape: f32[8,32], index: 0, kind: input, shape index: {}]
  %s1 = inlined_call_operand.vmem [shape: f32[1,32], index: 1, kind: input, shape index: {}]
  %s2 = inlined_call_operand.vmem [shape: f32[1,32], index: 2, kind: input, shape index: {}]
  %s3 = inlined_call_operand.vmem [shape: f32[32,64], index: 3, kind: input, shape index: {}]
  %s4 = inlined_call_operand.vmem [shape: f32[1,64], index: 4, kind: input, shape index: {}]
  %s5 = inlined_call_operand.vmem [shape: f32[64,32], index: 5, kind: input, shape index: {}]
  %s6 = inlined_call_operand.vmem [shape: f32[1,32], index: 6, kind: input, shape index: {}]
  %s7 = inlined_call_operand.vmem [shape: f32[8,32], index: 7, kind: output, shape index: {}]
  %s8 = sld [smem:[#allocation0]]
  $region42: #{siglip_with_pooling_head.10} parent=0
    _
  %s10 = ssub.s32 1, %s8
  %s11 = scalar_select 0, %s10, %s8
  // Predicated region
  $region2: #{siglip_with_pooling_head.10} parent=0 // pred_check
    _
  $region3: #{siglip_with_pooling_head.10} parent=0 // pred_check_branch
    %13 = sbr.rel (0) target = $region5
  $region4: #{siglip_with_pooling_head.10} parent=0 // pred_region
    _
  $region5: #{siglip_with_pooling_head.10} parent=0 // pred_fallthru
    _
  // Predicated region
  $region6: #{siglip_with_pooling_head.10} parent=0 // pred_check
    _
  $region7: #{siglip_with_pooling_head.10} parent=0 // pred_check_branch
    %15 = sbr.rel (0) target = $region9
  $region8: #{siglip_with_pooling_head.10} parent=0 // pred_region
    _
  $region9: #{siglip_with_pooling_head.10} parent=0 // pred_fallthru
    _
  // Predicated region
  $region10: #{siglip_with_pooling_head.10} parent=0 // pred_check
    _
  $region11: #{siglip_with_pooling_head.10} parent=0 // pred_check_branch
    %17 = sbr.rel (0) target = $region13
  $region12: #{siglip_with_pooling_head.10} parent=0 // pred_region
    _
  $region13: #{siglip_with_pooling_head.10} parent=0 // pred_fallthru
    _
  // Predicated region
  $region14: #{siglip_with_pooling_head.10} parent=0 // pred_check
    _
  $region15: #{siglip_with_pooling_head.10} parent=0 // pred_check_branch
    %19 = sbr.rel (0) target = $region17
  $region16: #{siglip_with_pooling_head.10} parent=0 // pred_region
    _
  $region17: #{siglip_with_pooling_head.10} parent=0 // pred_fallthru
    _
  // Predicated region
  $region18: #{siglip_with_pooling_head.10} parent=0 // pred_check
    _
  $region19: #{siglip_with_pooling_head.10} parent=0 // pred_check_branch
    %21 = sbr.rel (0) target = $region21
  $region20: #{siglip_with_pooling_head.10} parent=0 // pred_region
    _
  $region21: #{siglip_with_pooling_head.10} parent=0 // pred_fallthru
    _
  // Predicated region
  $region22: #{siglip_with_pooling_head.10} parent=0 // pred_check
    _
  $region23: #{siglip_with_pooling_head.10} parent=0 // pred_check_branch
    %23 = sbr.rel (0) target = $region25
  $region24: #{siglip_with_pooling_head.10} parent=0 // pred_region
    _
  $region25: #{siglip_with_pooling_head.10} parent=0 // pred_fallthru
    _
  // Predicated region
  $region26: #{siglip_with_pooling_head.10} parent=0 // pred_check
    _
  $region27: #{siglip_with_pooling_head.10} parent=0 // pred_check_branch
    %25 = sbr.rel (0) target = $region29
  $region28: #{siglip_with_pooling_head.10} parent=0 // pred_region
    _
  $region29: #{siglip_with_pooling_head.10} parent=0 // pred_fallthru
    _
  %p26 = scmp.eq.s32.totalorder 0, 0
  // Predicated region
  $region30: #{siglip_with_pooling_head.10} parent=0 // pred_check
    %p27 = pneg %p26
  $region31: #{siglip_with_pooling_head.10} parent=0 // pred_check_branch
    %29 = sbr.rel (%p27) target = $region33
  $region32: #{siglip_with_pooling_head.10} parent=0 // pred_region
    %v30 = vld [vmem:[%s0] sm:$0xff]
    %vm31 = vcmask 261120
    %v32 = vsel %vm31, %v30, 0.0
    %33 = vadd.xlane.f32.xlu0 %v32
    %v34 = vpop.xlane.xlu0 %33
    %v35 = vrcp.pop 32.0
    %v36 = vmul.f32 32.0, %v35
    %v37 = vsub.f32 1.0, %v36
    %v38 = vmul.f32 %v35, %v37
    %v39 = vadd.f32 %v35, %v38
    %vm40 = vweird.f32 %v35
    %v41 = vsel %vm40, %v35, %v39
    %v42 = vmul.f32 %v34, %v41
    %v43 = vsub.f32 %v30, %v42
    %v44 = vmul.f32 %v43, %v43
    %v45 = vsel %vm31, %v44, 0.0
    %46 = vadd.xlane.f32.xlu0 %v45
    %v47 = vpop.xlane.xlu0 %46
    %v48 = vmul.f32 %v47, %v41
    %v49 = vadd.f32 %v48, 1e-06
    %v50 = vrsqrt.pop %v49
    %v51 = vmul.f32 %v50, %v49
    %v52 = vmul.f32 %v51, %v50
    %v53 = vmul.f32 0.5, %v52
    %v54 = vsub.f32 1.5, %v53
    %v55 = vmul.f32 %v50, %v54
    %vm56 = vweird.f32 %v49
    %vm57 = vweird.f32 %v50
    %vm58 = vmor %vm56, %vm57
    %v59 = vsel %vm58, %v50, %v55
    %v60 = vmul.f32 %v43, %v59
    %v61 = vld [vmem:[%s1] sm:$0x1]
    %v63 = vperm.slane %v61, 0
    %v65 = vmul.f32 %v60, %v63
    %v66 = vld [vmem:[%s2] sm:$0x1]
    %v68 = vperm.slane %v66, 0
    %v70 = vadd.f32 %v65, %v68
    %71 = vst.msk [vmem:[#allocation2] sm:$0xff] %vm31, %v70
    %v72 = vld [vmem:[%s6] sm:$0x1]
    %v74 = vperm.slane %v72, 0
    %v76 = vadd.f32 %v30, %v74
    %77 = vst.msk [vmem:[%s7] sm:$0xff] %vm31, %v76
  $region33: #{siglip_with_pooling_head.10} parent=0 // pred_fallthru
    _
  %v78 = vld [vmem:[#allocation2] sm:$0xff]
  %v79 = vld [vmem:[%s3] sm:$0xff]
  %v80 = vld [vmem:[%s3 + $0x8] sm:$0xff]
  %v81 = vld [vmem:[%s3 + $0x10] sm:$0xff]
  %v82 = vld [vmem:[%s3 + $0x18] sm:$0xff]
  %v83 = vld [vmem:[%s4] sm:$0x1]
  %v85 = vperm.slane %v83, 0
  %vm87 = vcmask 261120
  %v89 = vsel %vm87, %v78, 0
  %91 = vmatpush.msra.mxu0 0.0
  %92 = vmatpush.msra.mxu0 0.0
  %93 = vmatpush.msra.mxu0 0.0
  %94 = vmatpush.msra.mxu0 0.0
  %95 = vmatpush.msra.mxu0 0.0
  %96 = vmatpush.msra.mxu0 0.0
  %97 = vmatpush.msra.mxu0 0.0
  %98 = vmatpush.msra.mxu0 0.0
  %99 = vmatpush.msra.mxu0 0.0
  %100 = vmatpush.msra.mxu0 0.0
  %101 = vmatpush.msra.mxu0 0.0
  %102 = vmatpush.msra.mxu0 0.0
  %103 = vmatpush.msra.mxu0 %v82
  %104 = vmatpush.msra.mxu0 %v81
  %105 = vmatpush.msra.mxu0 %v80
  %106 = vmatpush.msra.mxu0 %v79
  %107 = vmatmul.f32.gmra.mxu0 %v89
  %v108 = vpop.f32.mrf.mxu0
  %v109 = vadd.f32 %v85, %v108
  %110 = vdwg.mxu0
  %v111 = vmul.f32 %v109, %v109
  %v112 = vmul.f32 %v109, %v111
  %v113 = vmul.f32 %v112, 0.044715
  %v114 = vadd.f32 %v109, %v113
  %v115 = vmul.f32 %v114, 0.7978846
  %v116 = vtanh.pop %v115
  %v117 = vadd.f32 %v116, 1.0
  %v118 = vmul.f32 %v117, 0.5
  %v119 = vmul.f32 %v109, %v118
  %v120 = vld [vmem:[%s7] sm:$0xff]
  %v121 = vld [vmem:[%s5] sm:$0xff]
  %v122 = vld [vmem:[%s5 + $0x8] sm:$0xff]
  %v123 = vld [vmem:[%s5 + $0x10] sm:$0xff]
  %v124 = vld [vmem:[%s5 + $0x18] sm:$0xff]
  %v125 = vld [vmem:[%s5 + $0x20] sm:$0xff]
  %v126 = vld [vmem:[%s5 + $0x28] sm:$0xff]
  %v127 = vld [vmem:[%s5 + $0x30] sm:$0xff]
  %v128 = vld [vmem:[%s5 + $0x38] sm:$0xff]
  %vm129 = vcmask 523264
  %v131 = vsel %vm129, %v119, 0
  %133 = vmatpush.msra.mxu0 0.0
  %134 = vmatpush.msra.mxu0 0.0
  %135 = vmatpush.msra.mxu0 0.0
  %136 = vmatpush.msra.mxu0 0.0
  %137 = vmatpush.msra.mxu0 0.0
  %138 = vmatpush.msra.mxu0 0.0
  %139 = vmatpush.msra.mxu0 0.0
  %140 = vmatpush.msra.mxu0 0.0
  %141 = vmatpush.msra.mxu0 %v128
  %142 = vmatpush.msra.mxu0 %v127
  %143 = vmatpush.msra.mxu0 %v126
  %144 = vmatpush.msra.mxu0 %v125
  %145 = vmatpush.msra.mxu0 %v124
  %146 = vmatpush.msra.mxu0 %v123
  %147 = vmatpush.msra.mxu0 %v122
  %148 = vmatpush.msra.mxu0 %v121
  %149 = vmatmul.f32.gmra.mxu0 %v131
  %v150 = vpop.f32.mrf.mxu0
  %v151 = vadd.f32 0.0, %v150
  %152 = vdwg.mxu0
  %v153 = vadd.f32 %v120, %v151
  %154 = vst.msk [vmem:[%s7] sm:$0xff] %vm87, %v153
  // Predicated region
  $region34: #{siglip_with_pooling_head.10} parent=0 // pred_check
    _
  $region35: #{siglip_with_pooling_head.10} parent=0 // pred_check_branch
    %156 = sbr.rel (0) target = $region37
  $region36: #{siglip_with_pooling_head.10} parent=0 // pred_region
    _
  $region37: #{siglip_with_pooling_head.10} parent=0 // pred_fallthru
    _
  // Predicated region
  $region38: #{siglip_with_pooling_head.10} parent=0 // pred_check
    _
  $region39: #{siglip_with_pooling_head.10} parent=0 // pred_check_branch
    %158 = sbr.rel (0) target = $region41
  $region40: #{siglip_with_pooling_head.10} parent=0 // pred_region
    _
  $region41: #{siglip_with_pooling_head.10} parent=0 // pred_fallthru
    _

// kernel: siglip_with_pooling_head.9
$region0: #{siglip_with_pooling_head.9}
  #allocation0 [shape = 'u32[]', space=smem, size = 0x4, offset = 0x4, fixed_abs, tag = 'smem constant byte address 0x4 - core index']
  #allocation1 [shape = 'u32[72,128]{1,0:T(1,128)}', space=vmem, size = 0x9000, scoped, tag = 'internal scratch']
  %s0 = inlined_call_operand.vmem [shape: f32[2,4,32], index: 0, kind: input, shape index: {}]
  %s1 = inlined_call_operand.vmem [shape: f32[1,32], index: 1, kind: input, shape index: {}]
  %s2 = inlined_call_operand.vmem [shape: f32[1,32], index: 2, kind: input, shape index: {}]
  %s3 = inlined_call_operand.vmem [shape: f32[4,32,8], index: 3, kind: input, shape index: {}]
  %s4 = inlined_call_operand.vmem [shape: f32[4,1,8], index: 4, kind: input, shape index: {}]
  %s5 = inlined_call_operand.vmem [shape: f32[4,32,8], index: 5, kind: input, shape index: {}]
  %s6 = inlined_call_operand.vmem [shape: f32[4,1,8], index: 6, kind: input, shape index: {}]
  %s7 = inlined_call_operand.vmem [shape: f32[4,32,8], index: 7, kind: input, shape index: {}]
  %s8 = inlined_call_operand.vmem [shape: f32[4,1,8], index: 8, kind: input, shape index: {}]
  %s9 = inlined_call_operand.vmem [shape: f32[4,8,32], index: 9, kind: input, shape index: {}]
  %s10 = inlined_call_operand.vmem [shape: f32[1,32], index: 10, kind: input, shape index: {}]
  %s11 = inlined_call_operand.vmem [shape: f32[2,4,32], index: 11, kind: output, shape index: {}]
  %s12 = sld [smem:[#allocation0]]
  $region81: #{siglip_with_pooling_head.9} parent=0
    _
  %s14 = ssub.s32 1, %s12
  %s15 = scalar_select 0, %s14, %s12
  loop: start=0, step=1, limit=10
  $region2: #{siglip_with_pooling_head.9} parent=0 // loop_pre_header
    _
  $region3: #{siglip_with_pooling_head.9} parent=0 // loop_header
    %s17 = sphi 0, %s21
    %p18 = scmp.ge.s32.totalorder %s17, 10
    %s24 = sphi 0, %s36
    %s25 = sphi 0, %s32
    %s26 = sphi 0, %s24
    %s27 = sphi 0, %s25
    %s28 = sphi 0, %s26
    %s29 = sphi 0, %s27
    %s39 = sphi 0, %s41
    %s42 = sphi 0, %s39
    %s43 = sphi 0, %s42
    %s59 = sphi 0, %s43
    %s63 = sphi 0, %s63
    %s65 = sphi 0, %s63
    %s66 = sphi 0, %s65
    %s80 = sphi 0, %s66
    %s84 = sphi 0, %s84
    %s86 = sphi 0, %s84
    %s87 = sphi 0, %s86
    %s101 = sphi 0, %s87
    %s107 = sphi 0, %s109
    %s110 = sphi 0, %s107
    %s111 = sphi 0, %s110
    %s127 = sphi 0, %s111
    %s133 = sphi 0, %s135
    %s136 = sphi 0, %s133
    %s137 = sphi 0, %s136
    %s153 = sphi 0, %s137
    %s159 = sphi 0, %s161
    %s162 = sphi 0, %s159
    %s163 = sphi 0, %s162
    %s179 = sphi 0, %s163
    %s185 = sphi 0, %s187
    %s188 = sphi 0, %s185
    %s189 = sphi 0, %s188
    %s205 = sphi 0, %s189
    %s211 = sphi 0, %s213
    %s214 = sphi 0, %s211
    %s215 = sphi 0, %s214
    %s231 = sphi 0, %s215
    %s237 = sphi 0, %s239
    %s240 = sphi 0, %s237
    %s241 = sphi 0, %s240
    %s257 = sphi 0, %s241
    %s263 = sphi 0, %s265
    %s266 = sphi 0, %s263
    %s267 = sphi 0, %s266
    %s283 = sphi 0, %s267
    %s287 = sphi 0, %s287
    %s289 = sphi 0, %s287
    %s290 = sphi 0, %s289
    %s304 = sphi 0, %s290
    %s310 = sphi 0, %s312
    %s313 = sphi 0, %s310
    %s314 = sphi 0, %s313
    %s330 = sphi 0, %s314
  $region4: #{siglip_with_pooling_head.9} parent=0 // loop_header_branch
    %20 = sbr.rel (%p18) target = $region8
  $region5: #{siglip_with_pooling_head.9} parent=0 // loop_body
    %s22 = ssub.s32 %s17, 1
    %s23 = ssub.s32 %s17, 2
    %s30 = sadd.s32 1, %s25
    %p31 = scmp.ge.s32.totalorder %s30, 4
    %s32 = scalar_select %p31, 0, %s30
    %s33 = sadd.s32 1, %s24
    %s34 = scalar_select %p31, %s33, %s24
    %p35 = scmp.ge.s32.totalorder %s34, 2
    %s36 = scalar_select %p35, 0, %s34
    %s37 = ssub.s32 %s24, %s36
    %p38 = scmp.eq.s32.totalorder %s37, 0
    %s40 = sadd.s32 %s39, 1
    %s41 = scalar_select %p38, %s39, %s40
    %p44 = pneg %p38
    %p45 = scmp.eq.s32.totalorder %s17, 7
    %p46 = por %p44, %p45
    %p47 = scmp.ne.s32.totalorder %s39, %s42
    %p48 = scmp.eq.s32.totalorder %s17, 0
    %p49 = por %p47, %p48
    %p50 = scmp.ne.s32.totalorder %s39, %s42
    %p51 = scmp.eq.s32.totalorder %s22, 7
    %p52 = por %p50, %p51
    %p53 = scmp.ne.s32.totalorder %s42, %s43
    %p54 = scmp.eq.s32.totalorder %s22, 0
    %p55 = por %p53, %p54
    %p56 = scmp.ne.s32.totalorder %s42, %s43
    %p57 = scmp.eq.s32.totalorder %s23, 7
    %p58 = por %p56, %p57
    %p60 = scmp.ne.s32.totalorder %s43, %s59
    %p61 = scmp.eq.s32.totalorder %s23, 0
    %p62 = por %p60, %p61
    %s64 = sadd.s32 %s63, 1
    %p67 = scmp.eq.s32.totalorder %s17, 7
    %p68 = scmp.ne.s32.totalorder %s63, %s65
    %p69 = scmp.eq.s32.totalorder %s17, 0
    %p70 = por %p68, %p69
    %p71 = scmp.ne.s32.totalorder %s63, %s65
    %p72 = scmp.eq.s32.totalorder %s22, 7
    %p73 = por %p71, %p72
    %p74 = scmp.ne.s32.totalorder %s65, %s66
    %p75 = scmp.eq.s32.totalorder %s22, 0
    %p76 = por %p74, %p75
    %p77 = scmp.ne.s32.totalorder %s65, %s66
    %p78 = scmp.eq.s32.totalorder %s23, 7
    %p79 = por %p77, %p78
    %p81 = scmp.ne.s32.totalorder %s66, %s80
    %p82 = scmp.eq.s32.totalorder %s23, 0
    %p83 = por %p81, %p82
    %s85 = sadd.s32 %s84, 1
    %p88 = scmp.eq.s32.totalorder %s17, 7
    %p89 = scmp.ne.s32.totalorder %s84, %s86
    %p90 = scmp.eq.s32.totalorder %s17, 0
    %p91 = por %p89, %p90
    %p92 = scmp.ne.s32.totalorder %s84, %s86
    %p93 = scmp.eq.s32.totalorder %s22, 7
    %p94 = por %p92, %p93
    %p95 = scmp.ne.s32.totalorder %s86, %s87
    %p96 = scmp.eq.s32.totalorder %s22, 0
    %p97 = por %p95, %p96
    %p98 = scmp.ne.s32.totalorder %s86, %s87
    %p99 = scmp.eq.s32.totalorder %s23, 7
    %p100 = por %p98, %p99
    %p102 = scmp.ne.s32.totalorder %s87, %s101
    %p103 = scmp.eq.s32.totalorder %s23, 0
    %p104 = por %p102, %p103
    %s105 = ssub.s32 %s25, %s32
    %p106 = scmp.eq.s32.totalorder %s105, 0
    %s108 = sadd.s32 %s107, 1
    %s109 = scalar_select %p106, %s107, %s108
    %p112 = pneg %p106
    %p113 = scmp.eq.s32.totalorder %s17, 7
    %p114 = por %p112, %p113
    %p115 = scmp.ne.s32.totalorder %s107, %s110
    %p116 = scmp.eq.s32.totalorder %s17, 0
    %p117 = por %p115, %p116
    %p118 = scmp.ne.s32.totalorder %s107, %s110
    %p119 = scmp.eq.s32.totalorder %s22, 7
    %p120 = por %p118, %p119
    %p121 = scmp.ne.s32.totalorder %s110, %s111
    %p122 = scmp.eq.s32.totalorder %s22, 0
    %p123 = por %p121, %p122
    %p124 = scmp.ne.s32.totalorder %s110, %s111
    %p125 = scmp.eq.s32.totalorder %s23, 7
    %p126 = por %p124, %p125
    %p128 = scmp.ne.s32.totalorder %s111, %s127
    %p129 = scmp.eq.s32.totalorder %s23, 0
    %p130 = por %p128, %p129
    %s131 = ssub.s32 %s25, %s32
    %p132 = scmp.eq.s32.totalorder %s131, 0
    %s134 = sadd.s32 %s133, 1
    %s135 = scalar_select %p132, %s133, %s134
    %p138 = pneg %p132
    %p139 = scmp.eq.s32.totalorder %s17, 7
    %p140 = por %p138, %p139
    %p141 = scmp.ne.s32.totalorder %s133, %s136
    %p142 = scmp.eq.s32.totalorder %s17, 0
    %p143 = por %p141, %p142
    %p144 = scmp.ne.s32.totalorder %s133, %s136
    %p145 = scmp.eq.s32.totalorder %s22, 7
    %p146 = por %p144, %p145
    %p147 = scmp.ne.s32.totalorder %s136, %s137
    %p148 = scmp.eq.s32.totalorder %s22, 0
    %p149 = por %p147, %p148
    %p150 = scmp.ne.s32.totalorder %s136, %s137
    %p151 = scmp.eq.s32.totalorder %s23, 7
    %p152 = por %p150, %p151
    %p154 = scmp.ne.s32.totalorder %s137, %s153
    %p155 = scmp.eq.s32.totalorder %s23, 0
    %p156 = por %p154, %p155
    %s157 = ssub.s32 %s25, %s32
    %p158 = scmp.eq.s32.totalorder %s157, 0
    %s160 = sadd.s32 %s159, 1
    %s161 = scalar_select %p158, %s159, %s160
    %p164 = pneg %p158
    %p165 = scmp.eq.s32.totalorder %s17, 7
    %p166 = por %p164, %p165
    %p167 = scmp.ne.s32.totalorder %s159, %s162
    %p168 = scmp.eq.s32.totalorder %s17, 0
    %p169 = por %p167, %p168
    %p170 = scmp.ne.s32.totalorder %s159, %s162
    %p171 = scmp.eq.s32.totalorder %s22, 7
    %p172 = por %p170, %p171
    %p173 = scmp.ne.s32.totalorder %s162, %s163
    %p174 = scmp.eq.s32.totalorder %s22, 0
    %p175 = por %p173, %p174
    %p176 = scmp.ne.s32.totalorder %s162, %s163
    %p177 = scmp.eq.s32.totalorder %s23, 7
    %p178 = por %p176, %p177
    %p180 = scmp.ne.s32.totalorder %s163, %s179
    %p181 = scmp.eq.s32.totalorder %s23, 0
    %p182 = por %p180, %p181
    %s183 = ssub.s32 %s25, %s32
    %p184 = scmp.eq.s32.totalorder %s183, 0
    %s186 = sadd.s32 %s185, 1
    %s187 = scalar_select %p184, %s185, %s186
    %p190 = pneg %p184
    %p191 = scmp.eq.s32.totalorder %s17, 7
    %p192 = por %p190, %p191
    %p193 = scmp.ne.s32.totalorder %s185, %s188
    %p194 = scmp.eq.s32.totalorder %s17, 0
    %p195 = por %p193, %p194
    %p196 = scmp.ne.s32.totalorder %s185, %s188
    %p197 = scmp.eq.s32.totalorder %s22, 7
    %p198 = por %p196, %p197
    %p199 = scmp.ne.s32.totalorder %s188, %s189
    %p200 = scmp.eq.s32.totalorder %s22, 0
    %p201 = por %p199, %p200
    %p202 = scmp.ne.s32.totalorder %s188, %s189
    %p203 = scmp.eq.s32.totalorder %s23, 7
    %p204 = por %p202, %p203
    %p206 = scmp.ne.s32.totalorder %s189, %s205
    %p207 = scmp.eq.s32.totalorder %s23, 0
    %p208 = por %p206, %p207
    %s209 = ssub.s32 %s25, %s32
    %p210 = scmp.eq.s32.totalorder %s209, 0
    %s212 = sadd.s32 %s211, 1
    %s213 = scalar_select %p210, %s211, %s212
    %p216 = pneg %p210
    %p217 = scmp.eq.s32.totalorder %s17, 7
    %p218 = por %p216, %p217
    %p219 = scmp.ne.s32.totalorder %s211, %s214
    %p220 = scmp.eq.s32.totalorder %s17, 0
    %p221 = por %p219, %p220
    %p222 = scmp.ne.s32.totalorder %s211, %s214
    %p223 = scmp.eq.s32.totalorder %s22, 7
    %p224 = por %p222, %p223
    %p225 = scmp.ne.s32.totalorder %s214, %s215
    %p226 = scmp.eq.s32.totalorder %s22, 0
    %p227 = por %p225, %p226
    %p228 = scmp.ne.s32.totalorder %s214, %s215
    %p229 = scmp.eq.s32.totalorder %s23, 7
    %p230 = por %p228, %p229
    %p232 = scmp.ne.s32.totalorder %s215, %s231
    %p233 = scmp.eq.s32.totalorder %s23, 0
    %p234 = por %p232, %p233
    %s235 = ssub.s32 %s25, %s32
    %p236 = scmp.eq.s32.totalorder %s235, 0
    %s238 = sadd.s32 %s237, 1
    %s239 = scalar_select %p236, %s237, %s238
    %p242 = pneg %p236
    %p243 = scmp.eq.s32.totalorder %s17, 7
    %p244 = por %p242, %p243
    %p245 = scmp.ne.s32.totalorder %s237, %s240
    %p246 = scmp.eq.s32.totalorder %s17, 0
    %p247 = por %p245, %p246
    %p248 = scmp.ne.s32.totalorder %s237, %s240
    %p249 = scmp.eq.s32.totalorder %s22, 7
    %p250 = por %p248, %p249
    %p251 = scmp.ne.s32.totalorder %s240, %s241
    %p252 = scmp.eq.s32.totalorder %s22, 0
    %p253 = por %p251, %p252
    %p254 = scmp.ne.s32.totalorder %s240, %s241
    %p255 = scmp.eq.s32.totalorder %s23, 7
    %p256 = por %p254, %p255
    %p258 = scmp.ne.s32.totalorder %s241, %s257
    %p259 = scmp.eq.s32.totalorder %s23, 0
    %p260 = por %p258, %p259
    %s261 = ssub.s32 %s25, %s32
    %p262 = scmp.eq.s32.totalorder %s261, 0
    %s264 = sadd.s32 %s263, 1
    %s265 = scalar_select %p262, %s263, %s264
    %p268 = pneg %p262
    %p269 = scmp.eq.s32.totalorder %s17, 7
    %p270 = por %p268, %p269
    %p271 = scmp.ne.s32.totalorder %s263, %s266
    %p272 = scmp.eq.s32.totalorder %s17, 0
    %p273 = por %p271, %p272
    %p274 = scmp.ne.s32.totalorder %s263, %s266
    %p275 = scmp.eq.s32.totalorder %s22, 7
    %p276 = por %p274, %p275
    %p277 = scmp.ne.s32.totalorder %s266, %s267
    %p278 = scmp.eq.s32.totalorder %s22, 0
    %p279 = por %p277, %p278
    %p280 = scmp.ne.s32.totalorder %s266, %s267
    %p281 = scmp.eq.s32.totalorder %s23, 7
    %p282 = por %p280, %p281
    %p284 = scmp.ne.s32.totalorder %s267, %s283
    %p285 = scmp.eq.s32.totalorder %s23, 0
    %p286 = por %p284, %p285
    %s288 = sadd.s32 %s287, 1
    %p291 = scmp.eq.s32.totalorder %s17, 7
    %p292 = scmp.ne.s32.totalorder %s287, %s289
    %p293 = scmp.eq.s32.totalorder %s17, 0
    %p294 = por %p292, %p293
    %p295 = scmp.ne.s32.totalorder %s287, %s289
    %p296 = scmp.eq.s32.totalorder %s22, 7
    %p297 = por %p295, %p296
    %p298 = scmp.ne.s32.totalorder %s289, %s290
    %p299 = scmp.eq.s32.totalorder %s22, 0
    %p300 = por %p298, %p299
    %p301 = scmp.ne.s32.totalorder %s289, %s290
    %p302 = scmp.eq.s32.totalorder %s23, 7
    %p303 = por %p301, %p302
    %p305 = scmp.ne.s32.totalorder %s290, %s304
    %p306 = scmp.eq.s32.totalorder %s23, 0
    %p307 = por %p305, %p306
    %s308 = ssub.s32 %s24, %s36
    %p309 = scmp.eq.s32.totalorder %s308, 0
    %s311 = sadd.s32 %s310, 1
    %s312 = scalar_select %p309, %s310, %s311
    %p315 = pneg %p309
    %p316 = scmp.eq.s32.totalorder %s17, 7
    %p317 = por %p315, %p316
    %p318 = scmp.ne.s32.totalorder %s310, %s313
    %p319 = scmp.eq.s32.totalorder %s17, 0
    %p320 = por %p318, %p319
    %p321 = scmp.ne.s32.totalorder %s310, %s313
    %p322 = scmp.eq.s32.totalorder %s22, 7
    %p323 = por %p321, %p322
    %p324 = scmp.ne.s32.totalorder %s313, %s314
    %p325 = scmp.eq.s32.totalorder %s22, 0
    %p326 = por %p324, %p325
    %p327 = scmp.ne.s32.totalorder %s313, %s314
    %p328 = scmp.eq.s32.totalorder %s23, 7
    %p329 = por %p327, %p328
    %p331 = scmp.ne.s32.totalorder %s314, %s330
    %p332 = scmp.eq.s32.totalorder %s23, 0
    %p333 = por %p331, %p332
    %p334 = scmp.le.s32.totalorder 1, %s17
    %p335 = scmp.lt.s32.totalorder %s17, 9
    %p336 = pnand %p334, %p335
    %p337 = pneg %p336
    // Predicated region
    $region9: #{siglip_with_pooling_head.9} parent=5 // pred_check
      _
    $region10: #{siglip_with_pooling_head.9} parent=5 // pred_check_branch
      %339 = sbr.rel (%p336) target = $region12
    $region11: #{siglip_with_pooling_head.9} parent=5 // pred_region
      %s340 = ssub.s32 %s17, 1
      // Predicated region
      $region13: #{siglip_with_pooling_head.9} parent=11 // pred_check
        %p341 = pneg %p76
      $region14: #{siglip_with_pooling_head.9} parent=11 // pred_check_branch
        %343 = sbr.rel (%p341) target = $region16
      $region15: #{siglip_with_pooling_head.9} parent=11 // pred_region
        _
      $region16: #{siglip_with_pooling_head.9} parent=11 // pred_fallthru
        _
      // Predicated region
      $region17: #{siglip_with_pooling_head.9} parent=11 // pred_check
        %p344 = pneg %p97
      $region18: #{siglip_with_pooling_head.9} parent=11 // pred_check_branch
        %346 = sbr.rel (%p344) target = $region20
      $region19: #{siglip_with_pooling_head.9} parent=11 // pred_region
        _
      $region20: #{siglip_with_pooling_head.9} parent=11 // pred_fallthru
        _
      // Predicated region
      $region21: #{siglip_with_pooling_head.9} parent=11 // pred_check
        %p347 = pneg %p300
      $region22: #{siglip_with_pooling_head.9} parent=11 // pred_check_branch
        %349 = sbr.rel (%p347) target = $region24
      $region23: #{siglip_with_pooling_head.9} parent=11 // pred_region
        _
      $region24: #{siglip_with_pooling_head.9} parent=11 // pred_fallthru
        _
    $region12: #{siglip_with_pooling_head.9} parent=5 // pred_fallthru
      _
    %p350 = scmp.lt.s32.totalorder %s17, 8
    // Predicated region
    $region25: #{siglip_with_pooling_head.9} parent=5 // pred_check
      %p351 = pneg %p350
    $region26: #{siglip_with_pooling_head.9} parent=5 // pred_check_branch
      %353 = sbr.rel (%p351) target = $region28
    $region27: #{siglip_with_pooling_head.9} parent=5 // pred_region
      // Predicated region
      $region29: #{siglip_with_pooling_head.9} parent=27 // pred_check
        %p354 = pneg %p49
      $region30: #{siglip_with_pooling_head.9} parent=27 // pred_check_branch
        %356 = sbr.rel (%p354) target = $region32
      $region31: #{siglip_with_pooling_head.9} parent=27 // pred_region
        %p357 = scmp.lt.s32.totalorder %s24, 1
        %s358 = scalar_select %p357, %s24, 1
        %s359 = smul.addr %s358, 4
        %s360 = scalar_lea.vmem %s0, %s359
      $region32: #{siglip_with_pooling_head.9} parent=27 // pred_fallthru
        _
      // Predicated region
      $region33: #{siglip_with_pooling_head.9} parent=27 // pred_check
        %p361 = pneg %p117
      $region34: #{siglip_with_pooling_head.9} parent=27 // pred_check_branch
        %363 = sbr.rel (%p361) target = $region36
      $region35: #{siglip_with_pooling_head.9} parent=27 // pred_region
        %p364 = scmp.lt.s32.totalorder %s25, 3
        %s365 = scalar_select %p364, %s25, 3
        %s366 = smul.addr %s365, 4
        %s367 = smul.addr %s366, 8
        %s368 = scalar_lea.vmem %s3, %s367
      $region36: #{siglip_with_pooling_head.9} parent=27 // pred_fallthru
        _
      // Predicated region
      $region37: #{siglip_with_pooling_head.9} parent=27 // pred_check
        %p369 = pneg %p143
      $region38: #{siglip_with_pooling_head.9} parent=27 // pred_check_branch
        %371 = sbr.rel (%p369) target = $region40
      $region39: #{siglip_with_pooling_head.9} parent=27 // pred_region
        %p372 = scmp.lt.s32.totalorder %s25, 3
        %s373 = scalar_select %p372, %s25, 3
        %s374 = scalar_lea.vmem %s4, %s373
      $region40: #{siglip_with_pooling_head.9} parent=27 // pred_fallthru
        _
      // Predicated region
      $region41: #{siglip_with_pooling_head.9} parent=27 // pred_check
        %p375 = pneg %p169
      $region42: #{siglip_with_pooling_head.9} parent=27 // pred_check_branch
        %377 = sbr.rel (%p375) target = $region44
      $region43: #{siglip_with_pooling_head.9} parent=27 // pred_region
        %p378 = scmp.lt.s32.totalorder %s25, 3
        %s379 = scalar_select %p378, %s25, 3
        %s380 = smul.addr %s379, 4
        %s381 = smul.addr %s380, 8
        %s382 = scalar_lea.vmem %s5, %s381
      $region44: #{siglip_with_pooling_head.9} parent=27 // pred_fallthru
        _
      // Predicated region
      $region45: #{siglip_with_pooling_head.9} parent=27 // pred_check
        %p383 = pneg %p195
      $region46: #{siglip_with_pooling_head.9} parent=27 // pred_check_branch
        %385 = sbr.rel (%p383) target = $region48
      $region47: #{siglip_with_pooling_head.9} parent=27 // pred_region
        %p386 = scmp.lt.s32.totalorder %s25, 3
        %s387 = scalar_select %p386, %s25, 3
        %s388 = scalar_lea.vmem %s6, %s387
      $region48: #{siglip_with_pooling_head.9} parent=27 // pred_fallthru
        _
      // Predicated region
      $region49: #{siglip_with_pooling_head.9} parent=27 // pred_check
        %p389 = pneg %p221
      $region50: #{siglip_with_pooling_head.9} parent=27 // pred_check_branch
        %391 = sbr.rel (%p389) target = $region52
      $region51: #{siglip_with_pooling_head.9} parent=27 // pred_region
        %p392 = scmp.lt.s32.totalorder %s25, 3
        %s393 = scalar_select %p392, %s25, 3
        %s394 = smul.addr %s393, 4
        %s395 = smul.addr %s394, 8
        %s396 = scalar_lea.vmem %s7, %s395
      $region52: #{siglip_with_pooling_head.9} parent=27 // pred_fallthru
        _
      // Predicated region
      $region53: #{siglip_with_pooling_head.9} parent=27 // pred_check
        %p397 = pneg %p247
      $region54: #{siglip_with_pooling_head.9} parent=27 // pred_check_branch
        %399 = sbr.rel (%p397) target = $region56
      $region55: #{siglip_with_pooling_head.9} parent=27 // pred_region
        %p400 = scmp.lt.s32.totalorder %s25, 3
        %s401 = scalar_select %p400, %s25, 3
        %s402 = scalar_lea.vmem %s8, %s401
      $region56: #{siglip_with_pooling_head.9} parent=27 // pred_fallthru
        _
      // Predicated region
      $region57: #{siglip_with_pooling_head.9} parent=27 // pred_check
        %p403 = pneg %p273
      $region58: #{siglip_with_pooling_head.9} parent=27 // pred_check_branch
        %405 = sbr.rel (%p403) target = $region60
      $region59: #{siglip_with_pooling_head.9} parent=27 // pred_region
        %p406 = scmp.lt.s32.totalorder %s25, 3
        %s407 = scalar_select %p406, %s25, 3
        %s408 = smul.addr %s407, 8
        %s409 = scalar_lea.vmem %s9, %s408
      $region60: #{siglip_with_pooling_head.9} parent=27 // pred_fallthru
        _
    $region28: #{siglip_with_pooling_head.9} parent=5 // pred_fallthru
      _
    %p410 = scmp.le.s32.totalorder 1, %s17
    %p411 = scmp.lt.s32.totalorder %s17, 9
    %p412 = pnand %p410, %p411
    %p413 = pneg %p412
    // Predicated region
    $region61: #{siglip_with_pooling_head.9} parent=5 // pred_check
      _
    $region62: #{siglip_with_pooling_head.9} parent=5 // pred_check_branch
      %415 = sbr.rel (%p412) target = $region64
    $region63: #{siglip_with_pooling_head.9} parent=5 // pred_region
      %s416 = ssub.s32 %s17, 1
      %p417 = scmp.lt.s32.totalorder %s26, 1
      %s418 = scalar_select %p417, %s26, 1
      %s419 = smul.addr %s418, 4
      %s420 = scalar_lea.vmem %s0, %s419
      %p421 = pneg %p55
      %p422 = pneg %p52
      %p423 = pneg %p76
      %p424 = pneg %p73
      %p425 = pneg %p97
      %p426 = pneg %p94
      %p427 = scmp.lt.s32.totalorder %s27, 3
      %s428 = scalar_select %p427, %s27, 3
      %s429 = smul.addr %s428, 4
      %s430 = smul.addr %s429, 8
      %s431 = scalar_lea.vmem %s3, %s430
      %p432 = pneg %p123
      %p433 = pneg %p120
      %p434 = scmp.lt.s32.totalorder %s27, 3
      %s435 = scalar_select %p434, %s27, 3
      %s436 = scalar_lea.vmem %s4, %s435
      %p437 = pneg %p149
      %p438 = pneg %p146
      %p439 = scmp.lt.s32.totalorder %s27, 3
      %s440 = scalar_select %p439, %s27, 3
      %s441 = smul.addr %s440, 4
      %s442 = smul.addr %s441, 8
      %s443 = scalar_lea.vmem %s5, %s442
      %p444 = pneg %p175
      %p445 = pneg %p172
      %p446 = scmp.lt.s32.totalorder %s27, 3
      %s447 = scalar_select %p446, %s27, 3
      %s448 = scalar_lea.vmem %s6, %s447
      %p449 = pneg %p201
      %p450 = pneg %p198
      %p451 = scmp.lt.s32.totalorder %s27, 3
      %s452 = scalar_select %p451, %s27, 3
      %s453 = smul.addr %s452, 4
      %s454 = smul.addr %s453, 8
      %s455 = scalar_lea.vmem %s7, %s454
      %p456 = pneg %p227
      %p457 = pneg %p224
      %p458 = scmp.lt.s32.totalorder %s27, 3
      %s459 = scalar_select %p458, %s27, 3
      %s460 = scalar_lea.vmem %s8, %s459
      %p461 = pneg %p253
      %p462 = pneg %p250
      %p463 = scmp.lt.s32.totalorder %s27, 3
      %s464 = scalar_select %p463, %s27, 3
      %s465 = smul.addr %s464, 8
      %s466 = scalar_lea.vmem %s9, %s465
      %p467 = pneg %p279
      %p468 = pneg %p276
      %p469 = pneg %p300
      %p470 = pneg %p297
      %p471 = pneg %p326
      %p472 = pneg %p323
      %p473 = scmp.lt.s32.totalorder %s26, 1
      %s474 = scalar_select %p473, %s26, 1
      %s475 = smul.addr %s474, 4
      %s476 = scalar_lea.vmem %s11, %s475
      %p477 = scmp.lt.s32.totalorder %s26, 1
      %s478 = scalar_select %p477, %s26, 1
      %s479 = smul.addr %s478, 4
      %s480 = scalar_lea.vmem %s0, %s479
      %p481 = scmp.lt.s32.totalorder %s27, 3
      %s482 = scalar_select %p481, %s27, 3
      %s483 = smul.addr %s482, 4
      %s484 = smul.addr %s483, 8
      %s485 = scalar_lea.vmem %s3, %s484
      %p486 = scmp.lt.s32.totalorder %s27, 3
      %s487 = scalar_select %p486, %s27, 3
      %s488 = scalar_lea.vmem %s4, %s487
      %p489 = scmp.lt.s32.totalorder %s27, 3
      %s490 = scalar_select %p489, %s27, 3
      %s491 = smul.addr %s490, 4
      %s492 = smul.addr %s491, 8
      %s493 = scalar_lea.vmem %s5, %s492
      %p494 = scmp.lt.s32.totalorder %s27, 3
      %s495 = scalar_select %p494, %s27, 3
      %s496 = scalar_lea.vmem %s6, %s495
      %p497 = scmp.lt.s32.totalorder %s27, 3
      %s498 = scalar_select %p497, %s27, 3
      %s499 = smul.addr %s498, 4
      %s500 = smul.addr %s499, 8
      %s501 = scalar_lea.vmem %s7, %s500
      %p502 = scmp.lt.s32.totalorder %s27, 3
      %s503 = scalar_select %p502, %s27, 3
      %s504 = scalar_lea.vmem %s8, %s503
      %p505 = scmp.lt.s32.totalorder %s27, 3
      %s506 = scalar_select %p505, %s27, 3
      %s507 = smul.addr %s506, 8
      %s508 = scalar_lea.vmem %s9, %s507
      %p509 = scmp.lt.s32.totalorder %s26, 1
      %s510 = scalar_select %p509, %s26, 1
      %s511 = smul.addr %s510, 4
      %s512 = scalar_lea.vmem %s11, %s511
      %v513 = vld [vmem:[%s480] sm:$0xf]
      %vm514 = vcmask 257024
      %v515 = vsel %vm514, %v513, 0.0
      %516 = vadd.xlane.f32.xlu0 %v515
      %v517 = vpop.xlane.xlu0 %516
      %v518 = vrcp.pop 32.0
      %v519 = vmul.f32 32.0, %v518
      %v520 = vsub.f32 1.0, %v519
      %v521 = vmul.f32 %v518, %v520
      %v522 = vadd.f32 %v518, %v521
      %vm523 = vweird.f32 %v518
      %v524 = vsel %vm523, %v518, %v522
      %v525 = vmul.f32 %v517, %v524
      %v526 = vsub.f32 %v513, %v525
      %v527 = vmul.f32 %v526, %v526
      %v528 = vsel %vm514, %v527, 0.0
      %529 = vadd.xlane.f32.xlu0 %v528
      %v530 = vpop.xlane.xlu0 %529
      %v531 = vmul.f32 %v530, %v524
      %v532 = vadd.f32 %v531, 1e-06
      %v533 = vrsqrt.pop %v532
      %v534 = vmul.f32 %v533, %v532
      %v535 = vmul.f32 %v534, %v533
      %v536 = vmul.f32 0.5, %v535
      %v537 = vsub.f32 1.5, %v536
      %v538 = vmul.f32 %v533, %v537
      %vm539 = vweird.f32 %v532
      %vm540 = vweird.f32 %v533
      %vm541 = vmor %vm539, %vm540
      %v542 = vsel %vm541, %v533, %v538
      %v543 = vmul.f32 %v526, %v542
      %v544 = vld [vmem:[%s1] sm:$0x1]
      %v546 = vperm.slane %v544, 0
      %v548 = vmul.f32 %v543, %v546
      %v549 = vld [vmem:[%s2] sm:$0x1]
      %v551 = vperm.slane %v549, 0
      %v553 = vadd.f32 %v548, %v551
      %v554 = vld [vmem:[%s485] sm:$0xff]
      %v555 = vld [vmem:[%s485 + $0x8] sm:$0xff]
      %v556 = vld [vmem:[%s485 + $0x10] sm:$0xff]
      %v557 = vld [vmem:[%s485 + $0x18] sm:$0xff]
      %v558 = vld [vmem:[%s488] sm:$0x1]
      %v560 = vperm.slane %v558, 0
      %vm562 = vcmask 261120
      %v564 = vsel %vm562, %v553, 0
      %566 = vmatpush.msra.mxu0 0.0
      %567 = vmatpush.msra.mxu0 0.0
      %568 = vmatpush.msra.mxu0 0.0
      %569 = vmatpush.msra.mxu0 0.0
      %570 = vmatpush.msra.mxu0 0.0
      %571 = vmatpush.msra.mxu0 0.0
      %572 = vmatpush.msra.mxu0 0.0
      %573 = vmatpush.msra.mxu0 0.0
      %574 = vmatpush.msra.mxu0 0.0
      %575 = vmatpush.msra.mxu0 0.0
      %576 = vmatpush.msra.mxu0 0.0
      %577 = vmatpush.msra.mxu0 0.0
      %578 = vmatpush.msra.mxu0 %v557
      %579 = vmatpush.msra.mxu0 %v556
      %580 = vmatpush.msra.mxu0 %v555
      %581 = vmatpush.msra.mxu0 %v554
      %582 = vmatmul.f32.gmra.mxu0 %v564
      %v583 = vpop.f32.mrf.mxu0
      %v584 = vadd.f32 %v560, %v583
      %585 = vdwg.mxu0
      %v586 = vld [vmem:[%s493] sm:$0xff]
      %v587 = vld [vmem:[%s493 + $0x8] sm:$0xff]
      %v588 = vld [vmem:[%s493 + $0x10] sm:$0xff]
      %v589 = vld [vmem:[%s493 + $0x18] sm:$0xff]
      %v590 = vld [vmem:[%s496] sm:$0x1]
      %v592 = vperm.slane %v590, 0
      %594 = vmatpush.msra.mxu0 0.0
      %595 = vmatpush.msra.mxu0 0.0
      %596 = vmatpush.msra.mxu0 0.0
      %597 = vmatpush.msra.mxu0 0.0
      %598 = vmatpush.msra.mxu0 0.0
      %599 = vmatpush.msra.mxu0 0.0
      %600 = vmatpush.msra.mxu0 0.0
      %601 = vmatpush.msra.mxu0 0.0
      %602 = vmatpush.msra.mxu0 0.0
      %603 = vmatpush.msra.mxu0 0.0
      %604 = vmatpush.msra.mxu0 0.0
      %605 = vmatpush.msra.mxu0 0.0
      %606 = vmatpush.msra.mxu0 %v589
      %607 = vmatpush.msra.mxu0 %v588
      %608 = vmatpush.msra.mxu0 %v587
      %609 = vmatpush.msra.mxu0 %v586
      %610 = vmatmul.f32.gmra.mxu0 %v564
      %v611 = vpop.f32.mrf.mxu0
      %v612 = vadd.f32 %v592, %v611
      %613 = vdwg.mxu0
      %v614 = vld [vmem:[%s501] sm:$0xff]
      %v615 = vld [vmem:[%s501 + $0x8] sm:$0xff]
      %v616 = vld [vmem:[%s501 + $0x10] sm:$0xff]
      %v617 = vld [vmem:[%s501 + $0x18] sm:$0xff]
      %v618 = vld [vmem:[%s504] sm:$0x1]
      %v620 = vperm.slane %v618, 0
      %622 = vmatpush.msra.mxu0 0.0
      %623 = vmatpush.msra.mxu0 0.0
      %624 = vmatpush.msra.mxu0 0.0
      %625 = vmatpush.msra.mxu0 0.0
      %626 = vmatpush.msra.mxu0 0.0
      %627 = vmatpush.msra.mxu0 0.0
      %628 = vmatpush.msra.mxu0 0.0
      %629 = vmatpush.msra.mxu0 0.0
      %630 = vmatpush.msra.mxu0 0.0
      %631 = vmatpush.msra.mxu0 0.0
      %632 = vmatpush.msra.mxu0 0.0
      %633 = vmatpush.msra.mxu0 0.0
      %634 = vmatpush.msra.mxu0 %v617
      %635 = vmatpush.msra.mxu0 %v616
      %636 = vmatpush.msra.mxu0 %v615
      %637 = vmatpush.msra.mxu0 %v614
      %638 = vmatmul.f32.gmra.mxu0 %v564
      %v639 = vpop.f32.mrf.mxu0
      %v640 = vadd.f32 %v620, %v639
      %641 = vdwg.mxu0
      %v642 = vmul.f32 %v584, 0.35355338
      %vm643 = vcmask 64512
      %v645 = vsel %vm643, %v642, 0
      %v648 = vsel %vm643, %v612, 0
      %650 = vmatpush.xpose.msra.mxu0 0.0
      %651 = vmatpush.xpose.msra.mxu0 0.0
      %652 = vmatpush.xpose.msra.mxu0 0.0
      %653 = vmatpush.xpose.msra.mxu0 0.0
      %654 = vmatpush.xpose.msra.mxu0 0.0
      %655 = vmatpush.xpose.msra.mxu0 0.0
      %656 = vmatpush.xpose.msra.mxu0 0.0
      %657 = vmatpush.xpose.msra.mxu0 0.0
      %658 = vmatpush.xpose.msra.mxu0 0.0
      %659 = vmatpush.xpose.msra.mxu0 0.0
      %660 = vmatpush.xpose.msra.mxu0 0.0
      %661 = vmatpush.xpose.msra.mxu0 0.0
      %662 = vmatpush.xpose.msra.mxu0 0.0
      %663 = vmatpush.xpose.msra.mxu0 0.0
      %664 = vmatpush.xpose.msra.mxu0 0.0
      %665 = vmatpush.xpose.msra.mxu0 %v648
      %666 = vmatmul.f32.gmra.mxu0 %v645
      %v667 = vpop.f32.mrf.mxu0
      %v668 = vadd.f32 0.0, %v667
      %669 = vdwg.mxu0
      %vm670 = vcmask 27648
      %v671 = vsel %vm670, %v668, -inf
      %672 = vmax.xlane.f32.xlu0 %v671
      %v673 = vpop.xlane.xlu0 %672
      %v674 = vsub.f32 %v668, %v673
      %v675 = vmul.f32 %v674, 1.442695
      %v676 = vpow.pop %v675
      %v677 = vsel %vm670, %v676, 0.0
      %678 = vadd.xlane.f32.xlu0 %v677
      %v679 = vpop.xlane.xlu0 %678
      %v680 = vrcp.pop %v679
      %v681 = vmul.f32 %v676, %v680
      %vm682 = vcmask 31744
      %v684 = vsel %vm682, %v681, 0
      %vm686 = vcmask 1043456
      %v688 = vsel %vm686, %v640, 0
      %690 = vmatpush.msra.mxu0 0.0
      %691 = vmatpush.msra.mxu0 0.0
      %692 = vmatpush.msra.mxu0 0.0
      %693 = vmatpush.msra.mxu0 0.0
      %694 = vmatpush.msra.mxu0 0.0
      %695 = vmatpush.msra.mxu0 0.0
      %696 = vmatpush.msra.mxu0 0.0
      %697 = vmatpush.msra.mxu0 0.0
      %698 = vmatpush.msra.mxu0 0.0
      %699 = vmatpush.msra.mxu0 0.0
      %700 = vmatpush.msra.mxu0 0.0
      %701 = vmatpush.msra.mxu0 0.0
      %702 = vmatpush.msra.mxu0 0.0
      %703 = vmatpush.msra.mxu0 0.0
      %704 = vmatpush.msra.mxu0 0.0
      %705 = vmatpush.msra.mxu0 %v688
      %706 = vmatmul.f32.gmra.mxu0 %v684
      %v707 = vpop.f32.mrf.mxu0
      %v708 = vadd.f32 0.0, %v707
      %709 = vdwg.mxu0
      %v710 = vld [vmem:[%s508] sm:$0xff]
      %v712 = vsel %vm643, %v708, 0
      %714 = vmatpush.msra.mxu0 0.0
      %715 = vmatpush.msra.mxu0 0.0
      %716 = vmatpush.msra.mxu0 0.0
      %717 = vmatpush.msra.mxu0 0.0
      %718 = vmatpush.msra.mxu0 0.0
      %719 = vmatpush.msra.mxu0 0.0
      %720 = vmatpush.msra.mxu0 0.0
      %721 = vmatpush.msra.mxu0 0.0
      %722 = vmatpush.msra.mxu0 0.0
      %723 = vmatpush.msra.mxu0 0.0
      %724 = vmatpush.msra.mxu0 0.0
      %725 = vmatpush.msra.mxu0 0.0
      %726 = vmatpush.msra.mxu0 0.0
      %727 = vmatpush.msra.mxu0 0.0
      %728 = vmatpush.msra.mxu0 0.0
      %729 = vmatpush.msra.mxu0 %v710
      %730 = vmatmul.f32.gmra.mxu0 %v712
      %v731 = vpop.f32.mrf.mxu0
      %v732 = vadd.f32 0.0, %v731
      %733 = vdwg.mxu0
      %p734 = scmp.eq.s32.totalorder %s27, 0
      // Predicated region
      $region65: #{siglip_with_pooling_head.9} parent=63 // pred_check
        %p735 = pneg %p734
      $region66: #{siglip_with_pooling_head.9} parent=63 // pred_check_branch
        %737 = sbr.rel (%p735) target = $region68
      $region67: #{siglip_with_pooling_head.9} parent=63 // pred_region
        %v738 = vld [vmem:[%s10] sm:$0x1]
        %v740 = vperm.slane %v738, 0
        %v742 = vadd.f32 %v513, %v740
        %743 = vst.msk [vmem:[%s512] sm:$0xf] %vm514, %v742
      $region68: #{siglip_with_pooling_head.9} parent=63 // pred_fallthru
        _
      %v744 = vld [vmem:[%s512] sm:$0xf]
      %v745 = vadd.f32 %v744, %v732
      %746 = vst.msk [vmem:[%s512] sm:$0xf] %vm514, %v745
      %p747 = scmp.lt.s32.totalorder %s26, 1
      %s748 = scalar_select %p747, %s26, 1
      %s749 = smul.addr %s748, 4
      %s750 = scalar_lea.vmem %s11, %s749
      // Predicated region
      $region69: #{siglip_with_pooling_head.9} parent=63 // pred_check
        %p751 = pneg %p323
      $region70: #{siglip_with_pooling_head.9} parent=63 // pred_check_branch
        %753 = sbr.rel (%p751) target = $region72
      $region71: #{siglip_with_pooling_head.9} parent=63 // pred_region
        _
      $region72: #{siglip_with_pooling_head.9} parent=63 // pred_fallthru
        _
    $region64: #{siglip_with_pooling_head.9} parent=5 // pred_fallthru
      _
    %p754 = scmp.le.s32.totalorder 2, %s17
    // Predicated region
    $region73: #{siglip_with_pooling_head.9} parent=5 // pred_check
      %p755 = pneg %p754
    $region74: #{siglip_with_pooling_head.9} parent=5 // pred_check_branch
      %757 = sbr.rel (%p755) target = $region76
    $region75: #{siglip_with_pooling_head.9} parent=5 // pred_region
      %s758 = ssub.s32 %s17, 2
      // Predicated region
      $region77: #{siglip_with_pooling_head.9} parent=75 // pred_check
        %p759 = pneg %p329
      $region78: #{siglip_with_pooling_head.9} parent=75 // pred_check_branch
        %761 = sbr.rel (%p759) target = $region80
      $region79: #{siglip_with_pooling_head.9} parent=75 // pred_region
        %p762 = scmp.lt.s32.totalorder %s28, 1
        %s763 = scalar_select %p762, %s28, 1
        %s764 = smul.addr %s763, 4
        %s765 = scalar_lea.vmem %s11, %s764
      $region80: #{siglip_with_pooling_head.9} parent=75 // pred_fallthru
        _
    $region76: #{siglip_with_pooling_head.9} parent=5 // pred_fallthru
      _
  $region6: #{siglip_with_pooling_head.9} parent=0 // loop_footer
    %s21 = sadd.s32 1, %s17
  $region7: #{siglip_with_pooling_head.9} parent=0 // loop_footer_branch
    %16 = sbr.rel target = $region3
  $region8: #{siglip_with_pooling_head.9} parent=0 // loop_exit
    _

// kernel: siglip_with_pooling_head.13
$region0: #{siglip_with_pooling_head.13}
  #allocation0 [shape = 'u32[]', space=smem, size = 0x4, offset = 0x4, fixed_abs, tag = 'smem constant byte address 0x4 - core index']
  #allocation1 [shape = 'u32[72,128]{1,0:T(1,128)}', space=vmem, size = 0x9000, scoped, tag = 'internal scratch']
  %s0 = inlined_call_operand.vmem [shape: f32[1,32], index: 0, kind: input, shape index: {}]
  %s1 = inlined_call_operand.vmem [shape: f32[2,4,32], index: 1, kind: input, shape index: {}]
  %s2 = inlined_call_operand.vmem [shape: f32[1,32], index: 2, kind: input, shape index: {}]
  %s3 = inlined_call_operand.vmem [shape: f32[1,32], index: 3, kind: input, shape index: {}]
  %s4 = inlined_call_operand.vmem [shape: f32[4,32,8], index: 4, kind: input, shape index: {}]
  %s5 = inlined_call_operand.vmem [shape: f32[4,1,8], index: 5, kind: input, shape index: {}]
  %s6 = inlined_call_operand.vmem [shape: f32[4,32,8], index: 6, kind: input, shape index: {}]
  %s7 = inlined_call_operand.vmem [shape: f32[4,1,8], index: 7, kind: input, shape index: {}]
  %s8 = inlined_call_operand.vmem [shape: f32[4,32,8], index: 8, kind: input, shape index: {}]
  %s9 = inlined_call_operand.vmem [shape: f32[4,1,8], index: 9, kind: input, shape index: {}]
  %s10 = inlined_call_operand.vmem [shape: f32[4,8,32], index: 10, kind: input, shape index: {}]
  %s11 = inlined_call_operand.vmem [shape: f32[1,32], index: 11, kind: input, shape index: {}]
  %s12 = inlined_call_operand.vmem [shape: f32[2,1,32], index: 12, kind: output, shape index: {}]
  %s13 = sld [smem:[#allocation0]]
  $region85: #{siglip_with_pooling_head.13} parent=0
    _
  %s15 = ssub.s32 1, %s13
  %s16 = scalar_select 0, %s15, %s13
  loop: start=0, step=1, limit=10
  $region2: #{siglip_with_pooling_head.13} parent=0 // loop_pre_header
    _
  $region3: #{siglip_with_pooling_head.13} parent=0 // loop_header
    %s18 = sphi 0, %s22
    %p19 = scmp.ge.s32.totalorder %s18, 10
    %s25 = sphi 0, %s37
    %s26 = sphi 0, %s33
    %s27 = sphi 0, %s25
    %s28 = sphi 0, %s26
    %s29 = sphi 0, %s27
    %s30 = sphi 0, %s28
    %s38 = sphi 0, %s38
    %s40 = sphi 0, %s38
    %s41 = sphi 0, %s40
    %s55 = sphi 0, %s41
    %s61 = sphi 0, %s63
    %s64 = sphi 0, %s61
    %s65 = sphi 0, %s64
    %s81 = sphi 0, %s65
    %s85 = sphi 0, %s85
    %s87 = sphi 0, %s85
    %s88 = sphi 0, %s87
    %s102 = sphi 0, %s88
    %s106 = sphi 0, %s106
    %s108 = sphi 0, %s106
    %s109 = sphi 0, %s108
    %s123 = sphi 0, %s109
    %s129 = sphi 0, %s131
    %s132 = sphi 0, %s129
    %s133 = sphi 0, %s132
    %s149 = sphi 0, %s133
    %s155 = sphi 0, %s157
    %s158 = sphi 0, %s155
    %s159 = sphi 0, %s158
    %s175 = sphi 0, %s159
    %s181 = sphi 0, %s183
    %s184 = sphi 0, %s181
    %s185 = sphi 0, %s184
    %s201 = sphi 0, %s185
    %s207 = sphi 0, %s209
    %s210 = sphi 0, %s207
    %s211 = sphi 0, %s210
    %s227 = sphi 0, %s211
    %s233 = sphi 0, %s235
    %s236 = sphi 0, %s233
    %s237 = sphi 0, %s236
    %s253 = sphi 0, %s237
    %s259 = sphi 0, %s261
    %s262 = sphi 0, %s259
    %s263 = sphi 0, %s262
    %s279 = sphi 0, %s263
    %s285 = sphi 0, %s287
    %s288 = sphi 0, %s285
    %s289 = sphi 0, %s288
    %s305 = sphi 0, %s289
    %s309 = sphi 0, %s309
    %s311 = sphi 0, %s309
    %s312 = sphi 0, %s311
    %s326 = sphi 0, %s312
    %s332 = sphi 0, %s334
    %s335 = sphi 0, %s332
    %s336 = sphi 0, %s335
    %s352 = sphi 0, %s336
  $region4: #{siglip_with_pooling_head.13} parent=0 // loop_header_branch
    %21 = sbr.rel (%p19) target = $region8
  $region5: #{siglip_with_pooling_head.13} parent=0 // loop_body
    %s23 = ssub.s32 %s18, 1
    %s24 = ssub.s32 %s18, 2
    %s31 = sadd.s32 1, %s26
    %p32 = scmp.ge.s32.totalorder %s31, 4
    %s33 = scalar_select %p32, 0, %s31
    %s34 = sadd.s32 1, %s25
    %s35 = scalar_select %p32, %s34, %s25
    %p36 = scmp.ge.s32.totalorder %s35, 2
    %s37 = scalar_select %p36, 0, %s35
    %s39 = sadd.s32 %s38, 1
    %p42 = scmp.eq.s32.totalorder %s18, 7
    %p43 = scmp.ne.s32.totalorder %s38, %s40
    %p44 = scmp.eq.s32.totalorder %s18, 0
    %p45 = por %p43, %p44
    %p46 = scmp.ne.s32.totalorder %s38, %s40
    %p47 = scmp.eq.s32.totalorder %s23, 7
    %p48 = por %p46, %p47
    %p49 = scmp.ne.s32.totalorder %s40, %s41
    %p50 = scmp.eq.s32.totalorder %s23, 0
    %p51 = por %p49, %p50
    %p52 = scmp.ne.s32.totalorder %s40, %s41
    %p53 = scmp.eq.s32.totalorder %s24, 7
    %p54 = por %p52, %p53
    %p56 = scmp.ne.s32.totalorder %s41, %s55
    %p57 = scmp.eq.s32.totalorder %s24, 0
    %p58 = por %p56, %p57
    %s59 = ssub.s32 %s25, %s37
    %p60 = scmp.eq.s32.totalorder %s59, 0
    %s62 = sadd.s32 %s61, 1
    %s63 = scalar_select %p60, %s61, %s62
    %p66 = pneg %p60
    %p67 = scmp.eq.s32.totalorder %s18, 7
    %p68 = por %p66, %p67
    %p69 = scmp.ne.s32.totalorder %s61, %s64
    %p70 = scmp.eq.s32.totalorder %s18, 0
    %p71 = por %p69, %p70
    %p72 = scmp.ne.s32.totalorder %s61, %s64
    %p73 = scmp.eq.s32.totalorder %s23, 7
    %p74 = por %p72, %p73
    %p75 = scmp.ne.s32.totalorder %s64, %s65
    %p76 = scmp.eq.s32.totalorder %s23, 0
    %p77 = por %p75, %p76
    %p78 = scmp.ne.s32.totalorder %s64, %s65
    %p79 = scmp.eq.s32.totalorder %s24, 7
    %p80 = por %p78, %p79
    %p82 = scmp.ne.s32.totalorder %s65, %s81
    %p83 = scmp.eq.s32.totalorder %s24, 0
    %p84 = por %p82, %p83
    %s86 = sadd.s32 %s85, 1
    %p89 = scmp.eq.s32.totalorder %s18, 7
    %p90 = scmp.ne.s32.totalorder %s85, %s87
    %p91 = scmp.eq.s32.totalorder %s18, 0
    %p92 = por %p90, %p91
    %p93 = scmp.ne.s32.totalorder %s85, %s87
    %p94 = scmp.eq.s32.totalorder %s23, 7
    %p95 = por %p93, %p94
    %p96 = scmp.ne.s32.totalorder %s87, %s88
    %p97 = scmp.eq.s32.totalorder %s23, 0
    %p98 = por %p96, %p97
    %p99 = scmp.ne.s32.totalorder %s87, %s88
    %p100 = scmp.eq.s32.totalorder %s24, 7
    %p101 = por %p99, %p100
    %p103 = scmp.ne.s32.totalorder %s88, %s102
    %p104 = scmp.eq.s32.totalorder %s24, 0
    %p105 = por %p103, %p104
    %s107 = sadd.s32 %s106, 1
    %p110 = scmp.eq.s32.totalorder %s18, 7
    %p111 = scmp.ne.s32.totalorder %s106, %s108
    %p112 = scmp.eq.s32.totalorder %s18, 0
    %p113 = por %p111, %p112
    %p114 = scmp.ne.s32.totalorder %s106, %s108
    %p115 = scmp.eq.s32.totalorder %s23, 7
    %p116 = por %p114, %p115
    %p117 = scmp.ne.s32.totalorder %s108, %s109
    %p118 = scmp.eq.s32.totalorder %s23, 0
    %p119 = por %p117, %p118
    %p120 = scmp.ne.s32.totalorder %s108, %s109
    %p121 = scmp.eq.s32.totalorder %s24, 7
    %p122 = por %p120, %p121
    %p124 = scmp.ne.s32.totalorder %s109, %s123
    %p125 = scmp.eq.s32.totalorder %s24, 0
    %p126 = por %p124, %p125
    %s127 = ssub.s32 %s26, %s33
    %p128 = scmp.eq.s32.totalorder %s127, 0
    %s130 = sadd.s32 %s129, 1
    %s131 = scalar_select %p128, %s129, %s130
    %p134 = pneg %p128
    %p135 = scmp.eq.s32.totalorder %s18, 7
    %p136 = por %p134, %p135
    %p137 = scmp.ne.s32.totalorder %s129, %s132
    %p138 = scmp.eq.s32.totalorder %s18, 0
    %p139 = por %p137, %p138
    %p140 = scmp.ne.s32.totalorder %s129, %s132
    %p141 = scmp.eq.s32.totalorder %s23, 7
    %p142 = por %p140, %p141
    %p143 = scmp.ne.s32.totalorder %s132, %s133
    %p144 = scmp.eq.s32.totalorder %s23, 0
    %p145 = por %p143, %p144
    %p146 = scmp.ne.s32.totalorder %s132, %s133
    %p147 = scmp.eq.s32.totalorder %s24, 7
    %p148 = por %p146, %p147
    %p150 = scmp.ne.s32.totalorder %s133, %s149
    %p151 = scmp.eq.s32.totalorder %s24, 0
    %p152 = por %p150, %p151
    %s153 = ssub.s32 %s26, %s33
    %p154 = scmp.eq.s32.totalorder %s153, 0
    %s156 = sadd.s32 %s155, 1
    %s157 = scalar_select %p154, %s155, %s156
    %p160 = pneg %p154
    %p161 = scmp.eq.s32.totalorder %s18, 7
    %p162 = por %p160, %p161
    %p163 = scmp.ne.s32.totalorder %s155, %s158
    %p164 = scmp.eq.s32.totalorder %s18, 0
    %p165 = por %p163, %p164
    %p166 = scmp.ne.s32.totalorder %s155, %s158
    %p167 = scmp.eq.s32.totalorder %s23, 7
    %p168 = por %p166, %p167
    %p169 = scmp.ne.s32.totalorder %s158, %s159
    %p170 = scmp.eq.s32.totalorder %s23, 0
    %p171 = por %p169, %p170
    %p172 = scmp.ne.s32.totalorder %s158, %s159
    %p173 = scmp.eq.s32.totalorder %s24, 7
    %p174 = por %p172, %p173
    %p176 = scmp.ne.s32.totalorder %s159, %s175
    %p177 = scmp.eq.s32.totalorder %s24, 0
    %p178 = por %p176, %p177
    %s179 = ssub.s32 %s26, %s33
    %p180 = scmp.eq.s32.totalorder %s179, 0
    %s182 = sadd.s32 %s181, 1
    %s183 = scalar_select %p180, %s181, %s182
    %p186 = pneg %p180
    %p187 = scmp.eq.s32.totalorder %s18, 7
    %p188 = por %p186, %p187
    %p189 = scmp.ne.s32.totalorder %s181, %s184
    %p190 = scmp.eq.s32.totalorder %s18, 0
    %p191 = por %p189, %p190
    %p192 = scmp.ne.s32.totalorder %s181, %s184
    %p193 = scmp.eq.s32.totalorder %s23, 7
    %p194 = por %p192, %p193
    %p195 = scmp.ne.s32.totalorder %s184, %s185
    %p196 = scmp.eq.s32.totalorder %s23, 0
    %p197 = por %p195, %p196
    %p198 = scmp.ne.s32.totalorder %s184, %s185
    %p199 = scmp.eq.s32.totalorder %s24, 7
    %p200 = por %p198, %p199
    %p202 = scmp.ne.s32.totalorder %s185, %s201
    %p203 = scmp.eq.s32.totalorder %s24, 0
    %p204 = por %p202, %p203
    %s205 = ssub.s32 %s26, %s33
    %p206 = scmp.eq.s32.totalorder %s205, 0
    %s208 = sadd.s32 %s207, 1
    %s209 = scalar_select %p206, %s207, %s208
    %p212 = pneg %p206
    %p213 = scmp.eq.s32.totalorder %s18, 7
    %p214 = por %p212, %p213
    %p215 = scmp.ne.s32.totalorder %s207, %s210
    %p216 = scmp.eq.s32.totalorder %s18, 0
    %p217 = por %p215, %p216
    %p218 = scmp.ne.s32.totalorder %s207, %s210
    %p219 = scmp.eq.s32.totalorder %s23, 7
    %p220 = por %p218, %p219
    %p221 = scmp.ne.s32.totalorder %s210, %s211
    %p222 = scmp.eq.s32.totalorder %s23, 0
    %p223 = por %p221, %p222
    %p224 = scmp.ne.s32.totalorder %s210, %s211
    %p225 = scmp.eq.s32.totalorder %s24, 7
    %p226 = por %p224, %p225
    %p228 = scmp.ne.s32.totalorder %s211, %s227
    %p229 = scmp.eq.s32.totalorder %s24, 0
    %p230 = por %p228, %p229
    %s231 = ssub.s32 %s26, %s33
    %p232 = scmp.eq.s32.totalorder %s231, 0
    %s234 = sadd.s32 %s233, 1
    %s235 = scalar_select %p232, %s233, %s234
    %p238 = pneg %p232
    %p239 = scmp.eq.s32.totalorder %s18, 7
    %p240 = por %p238, %p239
    %p241 = scmp.ne.s32.totalorder %s233, %s236
    %p242 = scmp.eq.s32.totalorder %s18, 0
    %p243 = por %p241, %p242
    %p244 = scmp.ne.s32.totalorder %s233, %s236
    %p245 = scmp.eq.s32.totalorder %s23, 7
    %p246 = por %p244, %p245
    %p247 = scmp.ne.s32.totalorder %s236, %s237
    %p248 = scmp.eq.s32.totalorder %s23, 0
    %p249 = por %p247, %p248
    %p250 = scmp.ne.s32.totalorder %s236, %s237
    %p251 = scmp.eq.s32.totalorder %s24, 7
    %p252 = por %p250, %p251
    %p254 = scmp.ne.s32.totalorder %s237, %s253
    %p255 = scmp.eq.s32.totalorder %s24, 0
    %p256 = por %p254, %p255
    %s257 = ssub.s32 %s26, %s33
    %p258 = scmp.eq.s32.totalorder %s257, 0
    %s260 = sadd.s32 %s259, 1
    %s261 = scalar_select %p258, %s259, %s260
    %p264 = pneg %p258
    %p265 = scmp.eq.s32.totalorder %s18, 7
    %p266 = por %p264, %p265
    %p267 = scmp.ne.s32.totalorder %s259, %s262
    %p268 = scmp.eq.s32.totalorder %s18, 0
    %p269 = por %p267, %p268
    %p270 = scmp.ne.s32.totalorder %s259, %s262
    %p271 = scmp.eq.s32.totalorder %s23, 7
    %p272 = por %p270, %p271
    %p273 = scmp.ne.s32.totalorder %s262, %s263
    %p274 = scmp.eq.s32.totalorder %s23, 0
    %p275 = por %p273, %p274
    %p276 = scmp.ne.s32.totalorder %s262, %s263
    %p277 = scmp.eq.s32.totalorder %s24, 7
    %p278 = por %p276, %p277
    %p280 = scmp.ne.s32.totalorder %s263, %s279
    %p281 = scmp.eq.s32.totalorder %s24, 0
    %p282 = por %p280, %p281
    %s283 = ssub.s32 %s26, %s33
    %p284 = scmp.eq.s32.totalorder %s283, 0
    %s286 = sadd.s32 %s285, 1
    %s287 = scalar_select %p284, %s285, %s286
    %p290 = pneg %p284
    %p291 = scmp.eq.s32.totalorder %s18, 7
    %p292 = por %p290, %p291
    %p293 = scmp.ne.s32.totalorder %s285, %s288
    %p294 = scmp.eq.s32.totalorder %s18, 0
    %p295 = por %p293, %p294
    %p296 = scmp.ne.s32.totalorder %s285, %s288
    %p297 = scmp.eq.s32.totalorder %s23, 7
    %p298 = por %p296, %p297
    %p299 = scmp.ne.s32.totalorder %s288, %s289
    %p300 = scmp.eq.s32.totalorder %s23, 0
    %p301 = por %p299, %p300
    %p302 = scmp.ne.s32.totalorder %s288, %s289
    %p303 = scmp.eq.s32.totalorder %s24, 7
    %p304 = por %p302, %p303
    %p306 = scmp.ne.s32.totalorder %s289, %s305
    %p307 = scmp.eq.s32.totalorder %s24, 0
    %p308 = por %p306, %p307
    %s310 = sadd.s32 %s309, 1
    %p313 = scmp.eq.s32.totalorder %s18, 7
    %p314 = scmp.ne.s32.totalorder %s309, %s311
    %p315 = scmp.eq.s32.totalorder %s18, 0
    %p316 = por %p314, %p315
    %p317 = scmp.ne.s32.totalorder %s309, %s311
    %p318 = scmp.eq.s32.totalorder %s23, 7
    %p319 = por %p317, %p318
    %p320 = scmp.ne.s32.totalorder %s311, %s312
    %p321 = scmp.eq.s32.totalorder %s23, 0
    %p322 = por %p320, %p321
    %p323 = scmp.ne.s32.totalorder %s311, %s312
    %p324 = scmp.eq.s32.totalorder %s24, 7
    %p325 = por %p323, %p324
    %p327 = scmp.ne.s32.totalorder %s312, %s326
    %p328 = scmp.eq.s32.totalorder %s24, 0
    %p329 = por %p327, %p328
    %s330 = ssub.s32 %s25, %s37
    %p331 = scmp.eq.s32.totalorder %s330, 0
    %s333 = sadd.s32 %s332, 1
    %s334 = scalar_select %p331, %s332, %s333
    %p337 = pneg %p331
    %p338 = scmp.eq.s32.totalorder %s18, 7
    %p339 = por %p337, %p338
    %p340 = scmp.ne.s32.totalorder %s332, %s335
    %p341 = scmp.eq.s32.totalorder %s18, 0
    %p342 = por %p340, %p341
    %p343 = scmp.ne.s32.totalorder %s332, %s335
    %p344 = scmp.eq.s32.totalorder %s23, 7
    %p345 = por %p343, %p344
    %p346 = scmp.ne.s32.totalorder %s335, %s336
    %p347 = scmp.eq.s32.totalorder %s23, 0
    %p348 = por %p346, %p347
    %p349 = scmp.ne.s32.totalorder %s335, %s336
    %p350 = scmp.eq.s32.totalorder %s24, 7
    %p351 = por %p349, %p350
    %p353 = scmp.ne.s32.totalorder %s336, %s352
    %p354 = scmp.eq.s32.totalorder %s24, 0
    %p355 = por %p353, %p354
    %p356 = scmp.le.s32.totalorder 1, %s18
    %p357 = scmp.lt.s32.totalorder %s18, 9
    %p358 = pnand %p356, %p357
    %p359 = pneg %p358
    // Predicated region
    $region9: #{siglip_with_pooling_head.13} parent=5 // pred_check
      _
    $region10: #{siglip_with_pooling_head.13} parent=5 // pred_check_branch
      %361 = sbr.rel (%p358) target = $region12
    $region11: #{siglip_with_pooling_head.13} parent=5 // pred_region
      %s362 = ssub.s32 %s18, 1
      // Predicated region
      $region13: #{siglip_with_pooling_head.13} parent=11 // pred_check
        %p363 = pneg %p51
      $region14: #{siglip_with_pooling_head.13} parent=11 // pred_check_branch
        %365 = sbr.rel (%p363) target = $region16
      $region15: #{siglip_with_pooling_head.13} parent=11 // pred_region
        _
      $region16: #{siglip_with_pooling_head.13} parent=11 // pred_fallthru
        _
      // Predicated region
      $region17: #{siglip_with_pooling_head.13} parent=11 // pred_check
        %p366 = pneg %p98
      $region18: #{siglip_with_pooling_head.13} parent=11 // pred_check_branch
        %368 = sbr.rel (%p366) target = $region20
      $region19: #{siglip_with_pooling_head.13} parent=11 // pred_region
        _
      $region20: #{siglip_with_pooling_head.13} parent=11 // pred_fallthru
        _
      // Predicated region
      $region21: #{siglip_with_pooling_head.13} parent=11 // pred_check
        %p369 = pneg %p119
      $region22: #{siglip_with_pooling_head.13} parent=11 // pred_check_branch
        %371 = sbr.rel (%p369) target = $region24
      $region23: #{siglip_with_pooling_head.13} parent=11 // pred_region
        _
      $region24: #{siglip_with_pooling_head.13} parent=11 // pred_fallthru
        _
      // Predicated region
      $region25: #{siglip_with_pooling_head.13} parent=11 // pred_check
        %p372 = pneg %p322
      $region26: #{siglip_with_pooling_head.13} parent=11 // pred_check_branch
        %374 = sbr.rel (%p372) target = $region28
      $region27: #{siglip_with_pooling_head.13} parent=11 // pred_region
        _
      $region28: #{siglip_with_pooling_head.13} parent=11 // pred_fallthru
        _
    $region12: #{siglip_with_pooling_head.13} parent=5 // pred_fallthru
      _
    %p375 = scmp.lt.s32.totalorder %s18, 8
    // Predicated region
    $region29: #{siglip_with_pooling_head.13} parent=5 // pred_check
      %p376 = pneg %p375
    $region30: #{siglip_with_pooling_head.13} parent=5 // pred_check_branch
      %378 = sbr.rel (%p376) target = $region32
    $region31: #{siglip_with_pooling_head.13} parent=5 // pred_region
      // Predicated region
      $region33: #{siglip_with_pooling_head.13} parent=31 // pred_check
        %p379 = pneg %p71
      $region34: #{siglip_with_pooling_head.13} parent=31 // pred_check_branch
        %381 = sbr.rel (%p379) target = $region36
      $region35: #{siglip_with_pooling_head.13} parent=31 // pred_region
        %p382 = scmp.lt.s32.totalorder %s25, 1
        %s383 = scalar_select %p382, %s25, 1
        %s384 = smul.addr %s383, 4
        %s385 = scalar_lea.vmem %s1, %s384
      $region36: #{siglip_with_pooling_head.13} parent=31 // pred_fallthru
        _
      // Predicated region
      $region37: #{siglip_with_pooling_head.13} parent=31 // pred_check
        %p386 = pneg %p139
      $region38: #{siglip_with_pooling_head.13} parent=31 // pred_check_branch
        %388 = sbr.rel (%p386) target = $region40
      $region39: #{siglip_with_pooling_head.13} parent=31 // pred_region
        %p389 = scmp.lt.s32.totalorder %s26, 3
        %s390 = scalar_select %p389, %s26, 3
        %s391 = smul.addr %s390, 4
        %s392 = smul.addr %s391, 8
        %s393 = scalar_lea.vmem %s4, %s392
      $region40: #{siglip_with_pooling_head.13} parent=31 // pred_fallthru
        _
      // Predicated region
      $region41: #{siglip_with_pooling_head.13} parent=31 // pred_check
        %p394 = pneg %p165
      $region42: #{siglip_with_pooling_head.13} parent=31 // pred_check_branch
        %396 = sbr.rel (%p394) target = $region44
      $region43: #{siglip_with_pooling_head.13} parent=31 // pred_region
        %p397 = scmp.lt.s32.totalorder %s26, 3
        %s398 = scalar_select %p397, %s26, 3
        %s399 = scalar_lea.vmem %s5, %s398
      $region44: #{siglip_with_pooling_head.13} parent=31 // pred_fallthru
        _
      // Predicated region
      $region45: #{siglip_with_pooling_head.13} parent=31 // pred_check
        %p400 = pneg %p191
      $region46: #{siglip_with_pooling_head.13} parent=31 // pred_check_branch
        %402 = sbr.rel (%p400) target = $region48
      $region47: #{siglip_with_pooling_head.13} parent=31 // pred_region
        %p403 = scmp.lt.s32.totalorder %s26, 3
        %s404 = scalar_select %p403, %s26, 3
        %s405 = smul.addr %s404, 4
        %s406 = smul.addr %s405, 8
        %s407 = scalar_lea.vmem %s6, %s406
      $region48: #{siglip_with_pooling_head.13} parent=31 // pred_fallthru
        _
      // Predicated region
      $region49: #{siglip_with_pooling_head.13} parent=31 // pred_check
        %p408 = pneg %p217
      $region50: #{siglip_with_pooling_head.13} parent=31 // pred_check_branch
        %410 = sbr.rel (%p408) target = $region52
      $region51: #{siglip_with_pooling_head.13} parent=31 // pred_region
        %p411 = scmp.lt.s32.totalorder %s26, 3
        %s412 = scalar_select %p411, %s26, 3
        %s413 = scalar_lea.vmem %s7, %s412
      $region52: #{siglip_with_pooling_head.13} parent=31 // pred_fallthru
        _
      // Predicated region
      $region53: #{siglip_with_pooling_head.13} parent=31 // pred_check
        %p414 = pneg %p243
      $region54: #{siglip_with_pooling_head.13} parent=31 // pred_check_branch
        %416 = sbr.rel (%p414) target = $region56
      $region55: #{siglip_with_pooling_head.13} parent=31 // pred_region
        %p417 = scmp.lt.s32.totalorder %s26, 3
        %s418 = scalar_select %p417, %s26, 3
        %s419 = smul.addr %s418, 4
        %s420 = smul.addr %s419, 8
        %s421 = scalar_lea.vmem %s8, %s420
      $region56: #{siglip_with_pooling_head.13} parent=31 // pred_fallthru
        _
      // Predicated region
      $region57: #{siglip_with_pooling_head.13} parent=31 // pred_check
        %p422 = pneg %p269
      $region58: #{siglip_with_pooling_head.13} parent=31 // pred_check_branch
        %424 = sbr.rel (%p422) target = $region60
      $region59: #{siglip_with_pooling_head.13} parent=31 // pred_region
        %p425 = scmp.lt.s32.totalorder %s26, 3
        %s426 = scalar_select %p425, %s26, 3
        %s427 = scalar_lea.vmem %s9, %s426
      $region60: #{siglip_with_pooling_head.13} parent=31 // pred_fallthru
        _
      // Predicated region
      $region61: #{siglip_with_pooling_head.13} parent=31 // pred_check
        %p428 = pneg %p295
      $region62: #{siglip_with_pooling_head.13} parent=31 // pred_check_branch
        %430 = sbr.rel (%p428) target = $region64
      $region63: #{siglip_with_pooling_head.13} parent=31 // pred_region
        %p431 = scmp.lt.s32.totalorder %s26, 3
        %s432 = scalar_select %p431, %s26, 3
        %s433 = smul.addr %s432, 8
        %s434 = scalar_lea.vmem %s10, %s433
      $region64: #{siglip_with_pooling_head.13} parent=31 // pred_fallthru
        _
    $region32: #{siglip_with_pooling_head.13} parent=5 // pred_fallthru
      _
    %p435 = scmp.le.s32.totalorder 1, %s18
    %p436 = scmp.lt.s32.totalorder %s18, 9
    %p437 = pnand %p435, %p436
    %p438 = pneg %p437
    // Predicated region
    $region65: #{siglip_with_pooling_head.13} parent=5 // pred_check
      _
    $region66: #{siglip_with_pooling_head.13} parent=5 // pred_check_branch
      %440 = sbr.rel (%p437) target = $region68
    $region67: #{siglip_with_pooling_head.13} parent=5 // pred_region
      %s441 = ssub.s32 %s18, 1
      %p442 = pneg %p51
      %p443 = pneg %p48
      %p444 = scmp.lt.s32.totalorder %s27, 1
      %s445 = scalar_select %p444, %s27, 1
      %s446 = smul.addr %s445, 4
      %s447 = scalar_lea.vmem %s1, %s446
      %p448 = pneg %p77
      %p449 = pneg %p74
      %p450 = pneg %p98
      %p451 = pneg %p95
      %p452 = pneg %p119
      %p453 = pneg %p116
      %p454 = scmp.lt.s32.totalorder %s28, 3
      %s455 = scalar_select %p454, %s28, 3
      %s456 = smul.addr %s455, 4
      %s457 = smul.addr %s456, 8
      %s458 = scalar_lea.vmem %s4, %s457
      %p459 = pneg %p145
      %p460 = pneg %p142
      %p461 = scmp.lt.s32.totalorder %s28, 3
      %s462 = scalar_select %p461, %s28, 3
      %s463 = scalar_lea.vmem %s5, %s462
      %p464 = pneg %p171
      %p465 = pneg %p168
      %p466 = scmp.lt.s32.totalorder %s28, 3
      %s467 = scalar_select %p466, %s28, 3
      %s468 = smul.addr %s467, 4
      %s469 = smul.addr %s468, 8
      %s470 = scalar_lea.vmem %s6, %s469
      %p471 = pneg %p197
      %p472 = pneg %p194
      %p473 = scmp.lt.s32.totalorder %s28, 3
      %s474 = scalar_select %p473, %s28, 3
      %s475 = scalar_lea.vmem %s7, %s474
      %p476 = pneg %p223
      %p477 = pneg %p220
      %p478 = scmp.lt.s32.totalorder %s28, 3
      %s479 = scalar_select %p478, %s28, 3
      %s480 = smul.addr %s479, 4
      %s481 = smul.addr %s480, 8
      %s482 = scalar_lea.vmem %s8, %s481
      %p483 = pneg %p249
      %p484 = pneg %p246
      %p485 = scmp.lt.s32.totalorder %s28, 3
      %s486 = scalar_select %p485, %s28, 3
      %s487 = scalar_lea.vmem %s9, %s486
      %p488 = pneg %p275
      %p489 = pneg %p272
      %p490 = scmp.lt.s32.totalorder %s28, 3
      %s491 = scalar_select %p490, %s28, 3
      %s492 = smul.addr %s491, 8
      %s493 = scalar_lea.vmem %s10, %s492
      %p494 = pneg %p301
      %p495 = pneg %p298
      %p496 = pneg %p322
      %p497 = pneg %p319
      %p498 = pneg %p348
      %p499 = pneg %p345
      %p500 = scmp.lt.s32.totalorder %s27, 1
      %s501 = scalar_select %p500, %s27, 1
      %s502 = scalar_lea.vmem %s12, %s501
      %p503 = scmp.lt.s32.totalorder %s27, 1
      %s504 = scalar_select %p503, %s27, 1
      %s505 = smul.addr %s504, 4
      %s506 = scalar_lea.vmem %s1, %s505
      %p507 = scmp.lt.s32.totalorder %s28, 3
      %s508 = scalar_select %p507, %s28, 3
      %s509 = smul.addr %s508, 4
      %s510 = smul.addr %s509, 8
      %s511 = scalar_lea.vmem %s4, %s510
      %p512 = scmp.lt.s32.totalorder %s28, 3
      %s513 = scalar_select %p512, %s28, 3
      %s514 = scalar_lea.vmem %s5, %s513
      %p515 = scmp.lt.s32.totalorder %s28, 3
      %s516 = scalar_select %p515, %s28, 3
      %s517 = smul.addr %s516, 4
      %s518 = smul.addr %s517, 8
      %s519 = scalar_lea.vmem %s6, %s518
      %p520 = scmp.lt.s32.totalorder %s28, 3
      %s521 = scalar_select %p520, %s28, 3
      %s522 = scalar_lea.vmem %s7, %s521
      %p523 = scmp.lt.s32.totalorder %s28, 3
      %s524 = scalar_select %p523, %s28, 3
      %s525 = smul.addr %s524, 4
      %s526 = smul.addr %s525, 8
      %s527 = scalar_lea.vmem %s8, %s526
      %p528 = scmp.lt.s32.totalorder %s28, 3
      %s529 = scalar_select %p528, %s28, 3
      %s530 = scalar_lea.vmem %s9, %s529
      %p531 = scmp.lt.s32.totalorder %s28, 3
      %s532 = scalar_select %p531, %s28, 3
      %s533 = smul.addr %s532, 8
      %s534 = scalar_lea.vmem %s10, %s533
      %p535 = scmp.lt.s32.totalorder %s27, 1
      %s536 = scalar_select %p535, %s27, 1
      %s537 = scalar_lea.vmem %s12, %s536
      %v538 = vld [vmem:[%s506] sm:$0xf]
      %vm539 = vcmask 257024
      %v540 = vsel %vm539, %v538, 0.0
      %541 = vadd.xlane.f32.xlu0 %v540
      %v542 = vpop.xlane.xlu0 %541
      %v543 = vrcp.pop 32.0
      %v544 = vmul.f32 32.0, %v543
      %v545 = vsub.f32 1.0, %v544
      %v546 = vmul.f32 %v543, %v545
      %v547 = vadd.f32 %v543, %v546
      %vm548 = vweird.f32 %v543
      %v549 = vsel %vm548, %v543, %v547
      %v550 = vmul.f32 %v542, %v549
      %v551 = vsub.f32 %v538, %v550
      %v552 = vmul.f32 %v551, %v551
      %v553 = vsel %vm539, %v552, 0.0
      %554 = vadd.xlane.f32.xlu0 %v553
      %v555 = vpop.xlane.xlu0 %554
      %v556 = vmul.f32 %v555, %v549
      %v557 = vadd.f32 %v556, 1e-06
      %v558 = vrsqrt.pop %v557
      %v559 = vmul.f32 %v558, %v557
      %v560 = vmul.f32 %v559, %v558
      %v561 = vmul.f32 0.5, %v560
      %v562 = vsub.f32 1.5, %v561
      %v563 = vmul.f32 %v558, %v562
      %vm564 = vweird.f32 %v557
      %vm565 = vweird.f32 %v558
      %vm566 = vmor %vm564, %vm565
      %v567 = vsel %vm566, %v558, %v563
      %v568 = vmul.f32 %v551, %v567
      %v569 = vld [vmem:[%s2] sm:$0x1]
      %v571 = vperm.slane %v569, 0
      %v573 = vmul.f32 %v568, %v571
      %v574 = vld [vmem:[%s3] sm:$0x1]
      %v576 = vperm.slane %v574, 0
      %v578 = vadd.f32 %v573, %v576
      %v579 = vld [vmem:[%s0] sm:$0x1]
      %v580 = vld [vmem:[%s511] sm:$0xff]
      %v581 = vld [vmem:[%s511 + $0x8] sm:$0xff]
      %v582 = vld [vmem:[%s511 + $0x10] sm:$0xff]
      %v583 = vld [vmem:[%s511 + $0x18] sm:$0xff]
      %v584 = vld [vmem:[%s514] sm:$0x1]
      %vm585 = vcmask 261120
      %v587 = vsel %vm585, %v579, 0
      %589 = vmatpush.msra.mxu0 0.0
      %590 = vmatpush.msra.mxu0 0.0
      %591 = vmatpush.msra.mxu0 0.0
      %592 = vmatpush.msra.mxu0 0.0
      %593 = vmatpush.msra.mxu0 0.0
      %594 = vmatpush.msra.mxu0 0.0
      %595 = vmatpush.msra.mxu0 0.0
      %596 = vmatpush.msra.mxu0 0.0
      %597 = vmatpush.msra.mxu0 0.0
      %598 = vmatpush.msra.mxu0 0.0
      %599 = vmatpush.msra.mxu0 0.0
      %600 = vmatpush.msra.mxu0 0.0
      %601 = vmatpush.msra.mxu0 %v583
      %602 = vmatpush.msra.mxu0 %v582
      %603 = vmatpush.msra.mxu0 %v581
      %604 = vmatpush.msra.mxu0 %v580
      %605 = vmatmul.f32.gmra.mxu0 %v587
      %v606 = vpop.f32.mrf.mxu0
      %v607 = vadd.f32 %v584, %v606
      %608 = vdwg.mxu0
      %v609 = vld [vmem:[%s519] sm:$0xff]
      %v610 = vld [vmem:[%s519 + $0x8] sm:$0xff]
      %v611 = vld [vmem:[%s519 + $0x10] sm:$0xff]
      %v612 = vld [vmem:[%s519 + $0x18] sm:$0xff]
      %v613 = vld [vmem:[%s522] sm:$0x1]
      %v615 = vperm.slane %v613, 0
      %v618 = vsel %vm585, %v578, 0
      %620 = vmatpush.msra.mxu0 0.0
      %621 = vmatpush.msra.mxu0 0.0
      %622 = vmatpush.msra.mxu0 0.0
      %623 = vmatpush.msra.mxu0 0.0
      %624 = vmatpush.msra.mxu0 0.0
      %625 = vmatpush.msra.mxu0 0.0
      %626 = vmatpush.msra.mxu0 0.0
      %627 = vmatpush.msra.mxu0 0.0
      %628 = vmatpush.msra.mxu0 0.0
      %629 = vmatpush.msra.mxu0 0.0
      %630 = vmatpush.msra.mxu0 0.0
      %631 = vmatpush.msra.mxu0 0.0
      %632 = vmatpush.msra.mxu0 %v612
      %633 = vmatpush.msra.mxu0 %v611
      %634 = vmatpush.msra.mxu0 %v610
      %635 = vmatpush.msra.mxu0 %v609
      %636 = vmatmul.f32.gmra.mxu0 %v618
      %v637 = vpop.f32.mrf.mxu0
      %v638 = vadd.f32 %v615, %v637
      %639 = vdwg.mxu0
      %v640 = vld [vmem:[%s527] sm:$0xff]
      %v641 = vld [vmem:[%s527 + $0x8] sm:$0xff]
      %v642 = vld [vmem:[%s527 + $0x10] sm:$0xff]
      %v643 = vld [vmem:[%s527 + $0x18] sm:$0xff]
      %v644 = vld [vmem:[%s530] sm:$0x1]
      %v646 = vperm.slane %v644, 0
      %648 = vmatpush.msra.mxu0 0.0
      %649 = vmatpush.msra.mxu0 0.0
      %650 = vmatpush.msra.mxu0 0.0
      %651 = vmatpush.msra.mxu0 0.0
      %652 = vmatpush.msra.mxu0 0.0
      %653 = vmatpush.msra.mxu0 0.0
      %654 = vmatpush.msra.mxu0 0.0
      %655 = vmatpush.msra.mxu0 0.0
      %656 = vmatpush.msra.mxu0 0.0
      %657 = vmatpush.msra.mxu0 0.0
      %658 = vmatpush.msra.mxu0 0.0
      %659 = vmatpush.msra.mxu0 0.0
      %660 = vmatpush.msra.mxu0 %v643
      %661 = vmatpush.msra.mxu0 %v642
      %662 = vmatpush.msra.mxu0 %v641
      %663 = vmatpush.msra.mxu0 %v640
      %664 = vmatmul.f32.gmra.mxu0 %v618
      %v665 = vpop.f32.mrf.mxu0
      %v666 = vadd.f32 %v646, %v665
      %667 = vdwg.mxu0
      %v668 = vmul.f32 %v607, 0.35355338
      %vm669 = vcmask 64512
      %v671 = vsel %vm669, %v668, 0
      %v674 = vsel %vm669, %v638, 0
      %676 = vmatpush.xpose.msra.mxu0 0.0
      %677 = vmatpush.xpose.msra.mxu0 0.0
      %678 = vmatpush.xpose.msra.mxu0 0.0
      %679 = vmatpush.xpose.msra.mxu0 0.0
      %680 = vmatpush.xpose.msra.mxu0 0.0
      %681 = vmatpush.xpose.msra.mxu0 0.0
      %682 = vmatpush.xpose.msra.mxu0 0.0
      %683 = vmatpush.xpose.msra.mxu0 0.0
      %684 = vmatpush.xpose.msra.mxu0 0.0
      %685 = vmatpush.xpose.msra.mxu0 0.0
      %686 = vmatpush.xpose.msra.mxu0 0.0
      %687 = vmatpush.xpose.msra.mxu0 0.0
      %688 = vmatpush.xpose.msra.mxu0 0.0
      %689 = vmatpush.xpose.msra.mxu0 0.0
      %690 = vmatpush.xpose.msra.mxu0 0.0
      %691 = vmatpush.xpose.msra.mxu0 %v674
      %692 = vmatmul.f32.gmra.mxu0 %v671
      %v693 = vpop.f32.mrf.mxu0
      %v694 = vadd.f32 0.0, %v693
      %695 = vdwg.mxu0
      %vm696 = vcmask 24576
      %v697 = vsel %vm696, %v694, -inf
      %698 = vmax.xlane.f32.xlu0 %v697
      %v699 = vpop.xlane.xlu0 %698
      %v700 = vsub.f32 %v694, %v699
      %v701 = vmul.f32 %v700, 1.442695
      %v702 = vpow.pop %v701
      %v703 = vsel %vm696, %v702, 0.0
      %704 = vadd.xlane.f32.xlu0 %v703
      %v705 = vpop.xlane.xlu0 %704
      %v706 = vrcp.pop %v705
      %v707 = vmul.f32 %v702, %v706
      %vm708 = vcmask 31744
      %v710 = vsel %vm708, %v707, 0
      %vm712 = vcmask 1043456
      %v714 = vsel %vm712, %v666, 0
      %716 = vmatpush.msra.mxu0 0.0
      %717 = vmatpush.msra.mxu0 0.0
      %718 = vmatpush.msra.mxu0 0.0
      %719 = vmatpush.msra.mxu0 0.0
      %720 = vmatpush.msra.mxu0 0.0
      %721 = vmatpush.msra.mxu0 0.0
      %722 = vmatpush.msra.mxu0 0.0
      %723 = vmatpush.msra.mxu0 0.0
      %724 = vmatpush.msra.mxu0 0.0
      %725 = vmatpush.msra.mxu0 0.0
      %726 = vmatpush.msra.mxu0 0.0
      %727 = vmatpush.msra.mxu0 0.0
      %728 = vmatpush.msra.mxu0 0.0
      %729 = vmatpush.msra.mxu0 0.0
      %730 = vmatpush.msra.mxu0 0.0
      %731 = vmatpush.msra.mxu0 %v714
      %732 = vmatmul.f32.gmra.mxu0 %v710
      %v733 = vpop.f32.mrf.mxu0
      %v734 = vadd.f32 0.0, %v733
      %735 = vdwg.mxu0
      %v736 = vld [vmem:[%s534] sm:$0xff]
      %v738 = vsel %vm669, %v734, 0
      %740 = vmatpush.msra.mxu0 0.0
      %741 = vmatpush.msra.mxu0 0.0
      %742 = vmatpush.msra.mxu0 0.0
      %743 = vmatpush.msra.mxu0 0.0
      %744 = vmatpush.msra.mxu0 0.0
      %745 = vmatpush.msra.mxu0 0.0
      %746 = vmatpush.msra.mxu0 0.0
      %747 = vmatpush.msra.mxu0 0.0
      %748 = vmatpush.msra.mxu0 0.0
      %749 = vmatpush.msra.mxu0 0.0
      %750 = vmatpush.msra.mxu0 0.0
      %751 = vmatpush.msra.mxu0 0.0
      %752 = vmatpush.msra.mxu0 0.0
      %753 = vmatpush.msra.mxu0 0.0
      %754 = vmatpush.msra.mxu0 0.0
      %755 = vmatpush.msra.mxu0 %v736
      %756 = vmatmul.f32.gmra.mxu0 %v738
      %v757 = vpop.f32.mrf.mxu0
      %v758 = vadd.f32 0.0, %v757
      %759 = vdwg.mxu0
      %p760 = scmp.eq.s32.totalorder %s28, 0
      // Predicated region
      $region69: #{siglip_with_pooling_head.13} parent=67 // pred_check
        %p761 = pneg %p760
      $region70: #{siglip_with_pooling_head.13} parent=67 // pred_check_branch
        %763 = sbr.rel (%p761) target = $region72
      $region71: #{siglip_with_pooling_head.13} parent=67 // pred_region
        %v764 = vld [vmem:[%s11] sm:$0x1]
        %vm765 = vcmask 253952
        %766 = vst.msk [vmem:[%s537] sm:$0x1] %vm765, %v764
      $region72: #{siglip_with_pooling_head.13} parent=67 // pred_fallthru
        _
      %v767 = vld [vmem:[%s537] sm:$0x1]
      %v768 = vadd.f32 %v767, %v758
      %vm769 = vcmask 253952
      %770 = vst.msk [vmem:[%s537] sm:$0x1] %vm769, %v768
      %p771 = scmp.lt.s32.totalorder %s27, 1
      %s772 = scalar_select %p771, %s27, 1
      %s773 = scalar_lea.vmem %s12, %s772
      // Predicated region
      $region73: #{siglip_with_pooling_head.13} parent=67 // pred_check
        %p774 = pneg %p345
      $region74: #{siglip_with_pooling_head.13} parent=67 // pred_check_branch
        %776 = sbr.rel (%p774) target = $region76
      $region75: #{siglip_with_pooling_head.13} parent=67 // pred_region
        _
      $region76: #{siglip_with_pooling_head.13} parent=67 // pred_fallthru
        _
    $region68: #{siglip_with_pooling_head.13} parent=5 // pred_fallthru
      _
    %p777 = scmp.le.s32.totalorder 2, %s18
    // Predicated region
    $region77: #{siglip_with_pooling_head.13} parent=5 // pred_check
      %p778 = pneg %p777
    $region78: #{siglip_with_pooling_head.13} parent=5 // pred_check_branch
      %780 = sbr.rel (%p778) target = $region80
    $region79: #{siglip_with_pooling_head.13} parent=5 // pred_region
      %s781 = ssub.s32 %s18, 2
      // Predicated region
      $region81: #{siglip_with_pooling_head.13} parent=79 // pred_check
        %p782 = pneg %p351
      $region82: #{siglip_with_pooling_head.13} parent=79 // pred_check_branch
        %784 = sbr.rel (%p782) target = $region84
      $region83: #{siglip_with_pooling_head.13} parent=79 // pred_region
        %p785 = scmp.lt.s32.totalorder %s29, 1
        %s786 = scalar_select %p785, %s29, 1
        %s787 = scalar_lea.vmem %s12, %s786
      $region84: #{siglip_with_pooling_head.13} parent=79 // pred_fallthru
        _
    $region80: #{siglip_with_pooling_head.13} parent=5 // pred_fallthru
      _
  $region6: #{siglip_with_pooling_head.13} parent=0 // loop_footer
    %s22 = sadd.s32 1, %s18
  $region7: #{siglip_with_pooling_head.13} parent=0 // loop_footer_branch
    %17 = sbr.rel target = $region3
  $region8: #{siglip_with_pooling_head.13} parent=0 // loop_exit
    _

// kernel: siglip_with_pooling_head.15
$region0: #{siglip_with_pooling_head.15}
  #allocation0 [shape = 'u32[]', space=smem, size = 0x4, offset = 0x4, fixed_abs, tag = 'smem constant byte address 0x4 - core index']
  #allocation1 [shape = 'u32[72,128]{1,0:T(1,128)}', space=vmem, size = 0x9000, scoped, tag = 'internal scratch']
  %s0 = inlined_call_operand.vmem [shape: f32[2,32], index: 0, kind: input, shape index: {}]
  %s1 = inlined_call_operand.vmem [shape: f32[32,16], index: 1, kind: input, shape index: {}]
  %s2 = inlined_call_operand.vmem [shape: f32[1,16], index: 2, kind: input, shape index: {}]
  %s3 = inlined_call_operand.hbm [shape: f32[2,16], index: 3, kind: output, shape index: {}]
  %s4 = sld [smem:[#allocation0]]
  $region22: #{siglip_with_pooling_head.15} parent=0
    _
  %s6 = ssub.s32 1, %s4
  %s7 = scalar_select 0, %s6, %s4
  $region1: #{siglip_with_pooling_head.15} parent=0
    #allocation2 [shape = 'u8[1024]{0}', space=vmem, size = 0x400, scoped, tag = 'output window, operand 0, single buffered']
    #allocation3 [shape = 's32[1]{0}', space=sflag, size = 0x4, scoped, tag = 'scoped memory for siglip_with_pooling_head.15']
    %8 = vsyncpa [#allocation3], 0
    // Predicated region
    $region2: #{siglip_with_pooling_head.15} parent=1 // pred_check
      _
    $region3: #{siglip_with_pooling_head.15} parent=1 // pred_check_branch
      %10 = sbr.rel (0) target = $region5
    $region4: #{siglip_with_pooling_head.15} parent=1 // pred_region
      _
    $region5: #{siglip_with_pooling_head.15} parent=1 // pred_fallthru
      _
    // Predicated region
    $region6: #{siglip_with_pooling_head.15} parent=1 // pred_check
      _
    $region7: #{siglip_with_pooling_head.15} parent=1 // pred_check_branch
      %12 = sbr.rel (0) target = $region9
    $region8: #{siglip_with_pooling_head.15} parent=1 // pred_region
      _
    $region9: #{siglip_with_pooling_head.15} parent=1 // pred_fallthru
      _
    // Predicated region
    $region10: #{siglip_with_pooling_head.15} parent=1 // pred_check
      _
    $region11: #{siglip_with_pooling_head.15} parent=1 // pred_check_branch
      %14 = sbr.rel (0) target = $region13
    $region12: #{siglip_with_pooling_head.15} parent=1 // pred_region
      _
    $region13: #{siglip_with_pooling_head.15} parent=1 // pred_fallthru
      _
    %v15 = vld [vmem:[%s0] sm:$0x3]
    %v16 = vld [vmem:[%s1] sm:$0xff]
    %v17 = vld [vmem:[%s1 + $0x8] sm:$0xff]
    %v18 = vld [vmem:[%s1 + $0x10] sm:$0xff]
    %v19 = vld [vmem:[%s1 + $0x18] sm:$0xff]
    %v20 = vld [vmem:[%s2] sm:$0x1]
    %v22 = vperm.slane %v20, 0
    %vm24 = vcmask 261120
    %v26 = vsel %vm24, %v15, 0
    %28 = vmatpush.msra.mxu0 0.0
    %29 = vmatpush.msra.mxu0 0.0
    %30 = vmatpush.msra.mxu0 0.0
    %31 = vmatpush.msra.mxu0 0.0
    %32 = vmatpush.msra.mxu0 0.0
    %33 = vmatpush.msra.mxu0 0.0
    %34 = vmatpush.msra.mxu0 0.0
    %35 = vmatpush.msra.mxu0 0.0
    %36 = vmatpush.msra.mxu0 0.0
    %37 = vmatpush.msra.mxu0 0.0
    %38 = vmatpush.msra.mxu0 0.0
    %39 = vmatpush.msra.mxu0 0.0
    %40 = vmatpush.msra.mxu0 %v19
    %41 = vmatpush.msra.mxu0 %v18
    %42 = vmatpush.msra.mxu0 %v17
    %43 = vmatpush.msra.mxu0 %v16
    %44 = vmatmul.f32.gmra.mxu0 %v26
    %v45 = vpop.f32.mrf.mxu0
    %v46 = vadd.f32 %v22, %v45
    %47 = vdwg.mxu0
    %vm48 = vcmask 123904
    %49 = vst.msk [vmem:[#allocation2] sm:$0x3] %vm48, %v46
    // Predicated region
    $region14: #{siglip_with_pooling_head.15} parent=1 // pred_check
      _
    $region15: #{siglip_with_pooling_head.15} parent=1 // pred_check_branch
      %51 = sbr.rel (0) target = $region17
    $region16: #{siglip_with_pooling_head.15} parent=1 // pred_region
      %53 = vsyncadd [#allocation3], 0
      %s55 = sshll.u32 [#allocation2], 4
      %s56 = int_to_ptr.vmem [resolvable:$true] %s55
      %s57 = sshll.u32 %s3, 4
      %s58 = int_to_ptr.hbm [resolvable:$true] %s57
      %60 = dma.vmem_to_hbm [thread:$0]  %s56, 32, %s58, [#allocation3]
    $region17: #{siglip_with_pooling_head.15} parent=1 // pred_fallthru
      _
    // Predicated region
    $region18: #{siglip_with_pooling_head.15} parent=1 // pred_check
      _
    $region19: #{siglip_with_pooling_head.15} parent=1 // pred_check_branch
      %62 = sbr.rel (0) target = $region21
    $region20: #{siglip_with_pooling_head.15} parent=1 // pred_region
      %64 = dma.done [#allocation3], 32
    $region21: #{siglip_with_pooling_head.15} parent=1 // pred_fallthru
      _
    %65 = vsyncpa [#allocation3], 1

// kernel: siglip_with_pooling_head.14
$region0: #{siglip_with_pooling_head.14}
  #allocation0 [shape = 'u32[]', space=smem, size = 0x4, offset = 0x4, fixed_abs, tag = 'smem constant byte address 0x4 - core index']
  #allocation1 [shape = 'u32[72,128]{1,0:T(1,128)}', space=vmem, size = 0x9000, scoped, tag = 'internal scratch']
  #allocation2 [shape = 'f32[2,32]{1,0:T(2,128)}', space=vmem, size = 0x400, scoped, tag = 'scratch operand']
  %s0 = inlined_call_operand.vmem [shape: f32[2,32], index: 0, kind: input, shape index: {}]
  %s1 = inlined_call_operand.vmem [shape: f32[1,32], index: 1, kind: input, shape index: {}]
  %s2 = inlined_call_operand.vmem [shape: f32[1,32], index: 2, kind: input, shape index: {}]
  %s3 = inlined_call_operand.vmem [shape: f32[32,64], index: 3, kind: input, shape index: {}]
  %s4 = inlined_call_operand.vmem [shape: f32[1,64], index: 4, kind: input, shape index: {}]
  %s5 = inlined_call_operand.vmem [shape: f32[64,32], index: 5, kind: input, shape index: {}]
  %s6 = inlined_call_operand.vmem [shape: f32[1,32], index: 6, kind: input, shape index: {}]
  %s7 = inlined_call_operand.vmem [shape: f32[2,32], index: 7, kind: output, shape index: {}]
  %s8 = sld [smem:[#allocation0]]
  $region42: #{siglip_with_pooling_head.14} parent=0
    _
  %s10 = ssub.s32 1, %s8
  %s11 = scalar_select 0, %s10, %s8
  // Predicated region
  $region2: #{siglip_with_pooling_head.14} parent=0 // pred_check
    _
  $region3: #{siglip_with_pooling_head.14} parent=0 // pred_check_branch
    %13 = sbr.rel (0) target = $region5
  $region4: #{siglip_with_pooling_head.14} parent=0 // pred_region
    _
  $region5: #{siglip_with_pooling_head.14} parent=0 // pred_fallthru
    _
  // Predicated region
  $region6: #{siglip_with_pooling_head.14} parent=0 // pred_check
    _
  $region7: #{siglip_with_pooling_head.14} parent=0 // pred_check_branch
    %15 = sbr.rel (0) target = $region9
  $region8: #{siglip_with_pooling_head.14} parent=0 // pred_region
    _
  $region9: #{siglip_with_pooling_head.14} parent=0 // pred_fallthru
    _
  // Predicated region
  $region10: #{siglip_with_pooling_head.14} parent=0 // pred_check
    _
  $region11: #{siglip_with_pooling_head.14} parent=0 // pred_check_branch
    %17 = sbr.rel (0) target = $region13
  $region12: #{siglip_with_pooling_head.14} parent=0 // pred_region
    _
  $region13: #{siglip_with_pooling_head.14} parent=0 // pred_fallthru
    _
  // Predicated region
  $region14: #{siglip_with_pooling_head.14} parent=0 // pred_check
    _
  $region15: #{siglip_with_pooling_head.14} parent=0 // pred_check_branch
    %19 = sbr.rel (0) target = $region17
  $region16: #{siglip_with_pooling_head.14} parent=0 // pred_region
    _
  $region17: #{siglip_with_pooling_head.14} parent=0 // pred_fallthru
    _
  // Predicated region
  $region18: #{siglip_with_pooling_head.14} parent=0 // pred_check
    _
  $region19: #{siglip_with_pooling_head.14} parent=0 // pred_check_branch
    %21 = sbr.rel (0) target = $region21
  $region20: #{siglip_with_pooling_head.14} parent=0 // pred_region
    _
  $region21: #{siglip_with_pooling_head.14} parent=0 // pred_fallthru
    _
  // Predicated region
  $region22: #{siglip_with_pooling_head.14} parent=0 // pred_check
    _
  $region23: #{siglip_with_pooling_head.14} parent=0 // pred_check_branch
    %23 = sbr.rel (0) target = $region25
  $region24: #{siglip_with_pooling_head.14} parent=0 // pred_region
    _
  $region25: #{siglip_with_pooling_head.14} parent=0 // pred_fallthru
    _
  // Predicated region
  $region26: #{siglip_with_pooling_head.14} parent=0 // pred_check
    _
  $region27: #{siglip_with_pooling_head.14} parent=0 // pred_check_branch
    %25 = sbr.rel (0) target = $region29
  $region28: #{siglip_with_pooling_head.14} parent=0 // pred_region
    _
  $region29: #{siglip_with_pooling_head.14} parent=0 // pred_fallthru
    _
  %p26 = scmp.eq.s32.totalorder 0, 0
  // Predicated region
  $region30: #{siglip_with_pooling_head.14} parent=0 // pred_check
    %p27 = pneg %p26
  $region31: #{siglip_with_pooling_head.14} parent=0 // pred_check_branch
    %29 = sbr.rel (%p27) target = $region33
  $region32: #{siglip_with_pooling_head.14} parent=0 // pred_region
    %v30 = vld [vmem:[%s0] sm:$0x3]
    %vm31 = vcmask 254976
    %v32 = vsel %vm31, %v30, 0.0
    %33 = vadd.xlane.f32.xlu0 %v32
    %v34 = vpop.xlane.xlu0 %33
    %v35 = vrcp.pop 32.0
    %v36 = vmul.f32 32.0, %v35
    %v37 = vsub.f32 1.0, %v36
    %v38 = vmul.f32 %v35, %v37
    %v39 = vadd.f32 %v35, %v38
    %vm40 = vweird.f32 %v35
    %v41 = vsel %vm40, %v35, %v39
    %v42 = vmul.f32 %v34, %v41
    %v43 = vsub.f32 %v30, %v42
    %v44 = vmul.f32 %v43, %v43
    %v45 = vsel %vm31, %v44, 0.0
    %46 = vadd.xlane.f32.xlu0 %v45
    %v47 = vpop.xlane.xlu0 %46
    %v48 = vmul.f32 %v47, %v41
    %v49 = vadd.f32 %v48, 1e-06
    %v50 = vrsqrt.pop %v49
    %v51 = vmul.f32 %v50, %v49
    %v52 = vmul.f32 %v51, %v50
    %v53 = vmul.f32 0.5, %v52
    %v54 = vsub.f32 1.5, %v53
    %v55 = vmul.f32 %v50, %v54
    %vm56 = vweird.f32 %v49
    %vm57 = vweird.f32 %v50
    %vm58 = vmor %vm56, %vm57
    %v59 = vsel %vm58, %v50, %v55
    %v60 = vmul.f32 %v43, %v59
    %v61 = vld [vmem:[%s1] sm:$0x1]
    %v63 = vperm.slane %v61, 0
    %v65 = vmul.f32 %v60, %v63
    %v66 = vld [vmem:[%s2] sm:$0x1]
    %v68 = vperm.slane %v66, 0
    %v70 = vadd.f32 %v65, %v68
    %71 = vst.msk [vmem:[#allocation2] sm:$0x3] %vm31, %v70
    %v72 = vld [vmem:[%s6] sm:$0x1]
    %v74 = vperm.slane %v72, 0
    %v76 = vadd.f32 %v30, %v74
    %77 = vst.msk [vmem:[%s7] sm:$0x3] %vm31, %v76
  $region33: #{siglip_with_pooling_head.14} parent=0 // pred_fallthru
    _
  %v78 = vld [vmem:[#allocation2] sm:$0x3]
  %v79 = vld [vmem:[%s3] sm:$0xff]
  %v80 = vld [vmem:[%s3 + $0x8] sm:$0xff]
  %v81 = vld [vmem:[%s3 + $0x10] sm:$0xff]
  %v82 = vld [vmem:[%s3 + $0x18] sm:$0xff]
  %v83 = vld [vmem:[%s4] sm:$0x1]
  %v85 = vperm.slane %v83, 0
  %vm87 = vcmask 261120
  %v89 = vsel %vm87, %v78, 0
  %91 = vmatpush.msra.mxu0 0.0
  %92 = vmatpush.msra.mxu0 0.0
  %93 = vmatpush.msra.mxu0 0.0
  %94 = vmatpush.msra.mxu0 0.0
  %95 = vmatpush.msra.mxu0 0.0
  %96 = vmatpush.msra.mxu0 0.0
  %97 = vmatpush.msra.mxu0 0.0
  %98 = vmatpush.msra.mxu0 0.0
  %99 = vmatpush.msra.mxu0 0.0
  %100 = vmatpush.msra.mxu0 0.0
  %101 = vmatpush.msra.mxu0 0.0
  %102 = vmatpush.msra.mxu0 0.0
  %103 = vmatpush.msra.mxu0 %v82
  %104 = vmatpush.msra.mxu0 %v81
  %105 = vmatpush.msra.mxu0 %v80
  %106 = vmatpush.msra.mxu0 %v79
  %107 = vmatmul.f32.gmra.mxu0 %v89
  %v108 = vpop.f32.mrf.mxu0
  %v109 = vadd.f32 %v85, %v108
  %110 = vdwg.mxu0
  %v111 = vmul.f32 %v109, %v109
  %v112 = vmul.f32 %v109, %v111
  %v113 = vmul.f32 %v112, 0.044715
  %v114 = vadd.f32 %v109, %v113
  %v115 = vmul.f32 %v114, 0.7978846
  %v116 = vtanh.pop %v115
  %v117 = vadd.f32 %v116, 1.0
  %v118 = vmul.f32 %v117, 0.5
  %v119 = vmul.f32 %v109, %v118
  %v120 = vld [vmem:[%s7] sm:$0x3]
  %v121 = vld [vmem:[%s5] sm:$0xff]
  %v122 = vld [vmem:[%s5 + $0x8] sm:$0xff]
  %v123 = vld [vmem:[%s5 + $0x10] sm:$0xff]
  %v124 = vld [vmem:[%s5 + $0x18] sm:$0xff]
  %v125 = vld [vmem:[%s5 + $0x20] sm:$0xff]
  %v126 = vld [vmem:[%s5 + $0x28] sm:$0xff]
  %v127 = vld [vmem:[%s5 + $0x30] sm:$0xff]
  %v128 = vld [vmem:[%s5 + $0x38] sm:$0xff]
  %vm129 = vcmask 523264
  %v131 = vsel %vm129, %v119, 0
  %133 = vmatpush.msra.mxu0 0.0
  %134 = vmatpush.msra.mxu0 0.0
  %135 = vmatpush.msra.mxu0 0.0
  %136 = vmatpush.msra.mxu0 0.0
  %137 = vmatpush.msra.mxu0 0.0
  %138 = vmatpush.msra.mxu0 0.0
  %139 = vmatpush.msra.mxu0 0.0
  %140 = vmatpush.msra.mxu0 0.0
  %141 = vmatpush.msra.mxu0 %v128
  %142 = vmatpush.msra.mxu0 %v127
  %143 = vmatpush.msra.mxu0 %v126
  %144 = vmatpush.msra.mxu0 %v125
  %145 = vmatpush.msra.mxu0 %v124
  %146 = vmatpush.msra.mxu0 %v123
  %147 = vmatpush.msra.mxu0 %v122
  %148 = vmatpush.msra.mxu0 %v121
  %149 = vmatmul.f32.gmra.mxu0 %v131
  %v150 = vpop.f32.mrf.mxu0
  %v151 = vadd.f32 0.0, %v150
  %152 = vdwg.mxu0
  %v153 = vadd.f32 %v120, %v151
  %vm154 = vcmask 254976
  %155 = vst.msk [vmem:[%s7] sm:$0x3] %vm154, %v153
  // Predicated region
  $region34: #{siglip_with_pooling_head.14} parent=0 // pred_check
    _
  $region35: #{siglip_with_pooling_head.14} parent=0 // pred_check_branch
    %157 = sbr.rel (0) target = $region37
  $region36: #{siglip_with_pooling_head.14} parent=0 // pred_region
    _
  $region37: #{siglip_with_pooling_head.14} parent=0 // pred_fallthru
    _
  // Predicated region
  $region38: #{siglip_with_pooling_head.14} parent=0 // pred_check
    _
  $region39: #{siglip_with_pooling_head.14} parent=0 // pred_check_branch
    %159 = sbr.rel (0) target = $region41
  $region40: #{siglip_with_pooling_head.14} parent=0 // pred_region
    _
  $region41: #{siglip_with_pooling_head.14} parent=0 // pred_fallthru
    _

</llo_original>
